<compile_context>
chip_gen: v7x
topology: tpu7x:2x2x1
jax: 0.10.0
libtpu: 0.0.40
codegen_flags: <defaults>
</compile_context>

<pallas_src>
import functools

import jax
import jax.numpy as jnp
from jax import lax
from jax.experimental import pallas as pl
from jax.experimental.pallas import tpu as pltpu


# Cast MXU matmul operands to bf16 (accumulation stays f32 via preferred_element_type).
# Flip to False for exact-f32 (PyTorch-matching) numerics.
_MXU_BF16 = True


def _round_up(x, m):
    return (x + m - 1) // m * m


def _vmem_limit_bytes():
    """Generation-aware VMEM budget (~85% of capacity: 128 MiB v5e/v6e, 64 MiB v7x)."""
    try:
        cap = int(pltpu.get_tpu_info().vmem_capacity_bytes)
    except Exception:
        cap = 64 * 1024 * 1024          # conservative fallback, fits every generation
    return min(int(cap * 0.85), 128 * 1024 * 1024)


_VMEM_LIMIT = _vmem_limit_bytes()


# Resident (constant-block-index) operands: single-buffer them so they don't pay the
# default 2x double-buffering VMEM cost.
try:
    pl.BlockSpec((8, 128), lambda i: (0, 0), pipeline_mode=pl.Buffered(1))
    _HAS_BUFFERED = True
except Exception:                        # older jax without pipeline_mode / Buffered
    _HAS_BUFFERED = False


def _resident_spec(shape, index_map):
    if _HAS_BUFFERED:
        return pl.BlockSpec(shape, index_map, pipeline_mode=pl.Buffered(1))
    return pl.BlockSpec(shape, index_map)


def _mdot(a, b):
    """MXU dot with optional bf16 operand cast, always f32 accumulation."""
    if _MXU_BF16:
        a = a.astype(jnp.bfloat16)
        b = b.astype(jnp.bfloat16)
    return jnp.dot(a, b, preferred_element_type=jnp.float32)


# -----------------------------------------------------------------------------
# Row-tiled GEMM + bias: out = x @ w + b   (hoisted input projection of both LSTMs).
# Weights stay VMEM-resident (single-buffered) across row tiles.
# -----------------------------------------------------------------------------
def _gemm_bias_kernel(x_ref, w_ref, b_ref, o_ref):
    o_ref[...] = _mdot(x_ref[...], w_ref[...]) + b_ref[...]


def linear_rows(x, w_t, b, *, tile_n=256):
    """x: (N, K) f32, w_t: (K, M), b: (1, M) -> (N, M) f32."""
    N, K = x.shape
    M = w_t.shape[1]
    tile = min(tile_n, _round_up(N, 8))
    n_pad = _round_up(N, tile)
    if n_pad != N:
        x = jnp.pad(x, ((0, n_pad - N), (0, 0)))
    out = pl.pallas_call(
        _gemm_bias_kernel,
        out_shape=jax.ShapeDtypeStruct((n_pad, M), jnp.float32),
        grid_spec=pltpu.PrefetchScalarGridSpec(
            num_scalar_prefetch=0,
            grid=(n_pad // tile,),
            in_specs=[pl.BlockSpec((tile, K), lambda i: (i, 0)),
                      _resident_spec((K, M), lambda i: (0, 0)),
                      _resident_spec((1, M), lambda i: (0, 0))],
            out_specs=pl.BlockSpec((tile, M), lambda i: (i, 0))),
        compiler_params=pltpu.CompilerParams(
            dimension_semantics=("parallel",),
            vmem_limit_bytes=_VMEM_LIMIT),
    )(x, w_t, b)
    return out if n_pad == N else out[:N]


# -----------------------------------------------------------------------------
# LSTM recurrence.  Input-gate pre-activations zx = x@W_ih^T + (b_ih+b_hh) are
# precomputed (hoisted GEMM above); each step only does h @ W_hh^T on the MXU.
# Time axis is chunked by the grid ("arbitrary"); (h, c) carried in VMEM scratch.
# -----------------------------------------------------------------------------
def _lstm_step(zx_t, h, c, whh_t, H):
    # TODO(synk): pad H to a multiple of 128 in production so the 4 gate slices land on
    # lane boundaries (free vreg selects instead of XLU relayouts on the serial path).
    z = zx_t + _mdot(h, whh_t)                      # (B, 4H), f32 accumulate
    i_g = jax.nn.sigmoid(z[:, 0:H])
    f_g = jax.nn.sigmoid(z[:, H:2 * H])
    g_g = jnp.tanh(z[:, 2 * H:3 * H])
    o_g = jax.nn.sigmoid(z[:, 3 * H:4 * H])
    c_new = f_g * c + i_g * g_g
    h_new = o_g * jnp.tanh(c_new)
    return h_new, c_new


def _lstm_seq_kernel(zx_ref, whh_ref, h0_ref, c0_ref, out_ref, h_scr, c_scr,
                     *, unroll):
    """Decoder: emit the full hidden-state sequence (time-major)."""
    @pl.when(pl.program_id(0) == 0)
    def _():
        h_scr[...] = h0_ref[...]
        c_scr[...] = c0_ref[...]

    Tc = zx_ref.shape[0]
    H = h_scr.shape[-1]
    whh_t = whh_ref[...]

    def step(t, carry):
        h, c = carry
        h_new, c_new = _lstm_step(zx_ref[t], h, c, whh_t, H)
        out_ref[t] = h_new
        return h_new, c_new

    h, c = lax.fori_loop(0, Tc, step, (h_scr[...], c_scr[...]), unroll=unroll)
    h_scr[...] = h
    c_scr[...] = c


def _lstm_last_kernel(bounds_ref, zx_ref, whh_ref, h0_ref, c0_ref, idx_ref,
                      hlast_ref, h_scr, c_scr, *, unroll):
    """Encoder: emit only the hidden state at the per-row last non-pad position.
    bounds_ref (SMEM, scalar-prefetched) = [min_last_idx, max_last_idx] gates the
    per-step select so chunks that cannot match skip it entirely."""
    i = pl.program_id(0)

    @pl.when(i == 0)
    def _():
        h_scr[...] = h0_ref[...]
        c_scr[...] = c0_ref[...]
        hlast_ref[...] = jnp.zeros_like(hlast_ref)

    Tc = zx_ref.shape[0]
    H = h_scr.shape[-1]
    t0 = i * Tc
    whh_t = whh_ref[...]
    last_idx = idx_ref[...]                              # (B, 1) int32

    in_range = jnp.logical_and(bounds_ref[1] >= t0, bounds_ref[0] < t0 + Tc)

    @pl.when(in_range)
    def _():
        def step(t, carry):
            h, c, hl = carry
            h_new, c_new = _lstm_step(zx_ref[t], h, c, whh_t, H)
            hl = jnp.where(last_idx == (t0 + t), h_new, hl)
            return h_new, c_new, hl
        h, c, hl = lax.fori_loop(0, Tc, step,
                                 (h_scr[...], c_scr[...], hlast_ref[...]),
                                 unroll=unroll)
        h_scr[...] = h
        c_scr[...] = c
        hlast_ref[...] = hl

    @pl.when(jnp.logical_not(in_range))
    def _():
        def step(t, carry):
            return _lstm_step(zx_ref[t], carry[0], carry[1], whh_t, H)
        h, c = lax.fori_loop(0, Tc, step, (h_scr[...], c_scr[...]), unroll=unroll)
        h_scr[...] = h
        c_scr[...] = c


def _derive_t_chunk(B, H, stream_cols, vmem_limit):
    """Time-chunk length so the streamed (double-buffered) zx/out blocks plus the
    resident weights/state fit comfortably in the per-generation VMEM budget."""
    per_t = 2 * stream_cols * B * 4                       # double-buffered f32 bytes/step
    resident = (4 * H * H + 6 * B * H) * 4 + (2 << 20)    # whh + h/c state + slack
    budget = max(vmem_limit // 2 - resident, per_t * 8)
    return int(max(8, min(budget // per_t, 512)))


def _lstm_common(zx, t_chunk):
    T, B, G = zx.shape
    tc = min(t_chunk, T)
    t_pad = _round_up(T, tc)
    if t_pad != T:
        zx = jnp.pad(zx, ((0, t_pad - T), (0, 0), (0, 0)))
    unroll = True if tc <= 16 else 8
    return zx, T, B, G, tc, t_pad, unroll


def lstm_seq(zx, whh_t, h0, c0, *, t_chunk=None):
    """zx: (T, B, 4H) pre-projected gates; returns hidden sequence (T, B, H)."""
    _, B, _ = zx.shape
    H = h0.shape[-1]
    if t_chunk is None:
        t_chunk = _derive_t_chunk(B, H, 5 * H, _VMEM_LIMIT)   # zx (4H) + out (H) streams
    zx, T, B, G, tc, t_pad, unroll = _lstm_common(zx, t_chunk)
    out = pl.pallas_call(
        functools.partial(_lstm_seq_kernel, unroll=unroll),
        out_shape=jax.ShapeDtypeStruct((t_pad, B, H), jnp.float32),
        grid_spec=pltpu.PrefetchScalarGridSpec(
            num_scalar_prefetch=0,
            grid=(t_pad // tc,),
            in_specs=[pl.BlockSpec((tc, B, G), lambda i: (i, 0, 0)),
                      _resident_spec((H, G), lambda i: (0, 0)),
                      _resident_spec((B, H), lambda i: (0, 0)),
                      _resident_spec((B, H), lambda i: (0, 0))],
            out_specs=pl.BlockSpec((tc, B, H), lambda i: (i, 0, 0)),
            scratch_shapes=[pltpu.VMEM((B, H), jnp.float32),
                            pltpu.VMEM((B, H), jnp.float32)]),
        compiler_params=pltpu.CompilerParams(
            dimension_semantics=("arbitrary",),
            vmem_limit_bytes=_VMEM_LIMIT),
    )(zx, whh_t, h0, c0)
    return out if t_pad == T else out[:T]


def lstm_last(zx, whh_t, h0, c0, last_idx, *, t_chunk=None):
    """zx: (T, B, 4H); returns h at per-row index last_idx -> (B, H)."""
    _, B, _ = zx.shape
    H = h0.shape[-1]
    if t_chunk is None:
        t_chunk = _derive_t_chunk(B, H, 4 * H, _VMEM_LIMIT)
    zx, T, B, G, tc, t_pad, unroll = _lstm_common(zx, t_chunk)
    idx = last_idx.reshape(B, 1).astype(jnp.int32)
    bounds = jnp.stack([jnp.min(idx), jnp.max(idx)]).astype(jnp.int32)   # SMEM prefetch
    return pl.pallas_call(
        functools.partial(_lstm_last_kernel, unroll=unroll),
        out_shape=jax.ShapeDtypeStruct((B, H), jnp.float32),
        grid_spec=pltpu.PrefetchScalarGridSpec(
            num_scalar_prefetch=1,
            grid=(t_pad // tc,),
            in_specs=[pl.BlockSpec((tc, B, G), lambda i, b: (i, 0, 0)),
                      _resident_spec((H, G), lambda i, b: (0, 0)),
                      _resident_spec((B, H), lambda i, b: (0, 0)),
                      _resident_spec((B, H), lambda i, b: (0, 0)),
                      _resident_spec((B, 1), lambda i, b: (0, 0))],
            out_specs=pl.BlockSpec((B, H), lambda i, b: (0, 0)),
            scratch_shapes=[pltpu.VMEM((B, H), jnp.float32),
                            pltpu.VMEM((B, H), jnp.float32)]),
        compiler_params=pltpu.CompilerParams(
            dimension_semantics=("arbitrary",),
            vmem_limit_bytes=_VMEM_LIMIT),
    )(bounds, zx, whh_t, h0, c0, idx)


# -----------------------------------------------------------------------------
# Fused output head: softmax(out_tok_embed(out_mlp(x)), -1) -> (argmax id, p[target]).
# Grid = (row tiles "parallel", vocab blocks "arbitrary"): the out_mlp result is
# computed once per row tile (j==0, cached in VMEM scratch), the tied (E, V) weight is
# streamed in vocab blocks, and softmax max/sum + argmax + target logit are kept as
# online accumulators.  Never materializes (N, V) logits/probs anywhere.
# -----------------------------------------------------------------------------
def _proj_head_kernel(x_ref, y_ref, wm_ref, bm_ref, we_ref, be_ref,
                      amax_ref, ptgt_ref,
                      m_scr, run_max, run_sum, best_val, best_idx, logit_y):
    j = pl.program_id(1)
    nv = pl.num_programs(1)
    tv = we_ref.shape[-1]

    @pl.when(j == 0)
    def _():
        m_scr[...] = _mdot(x_ref[...], wm_ref[...]) + bm_ref[...]   # out_mlp, once/tile
        run_max[...] = jnp.full_like(run_max, -jnp.inf)
        run_sum[...] = jnp.zeros_like(run_sum)
        best_val[...] = jnp.full_like(best_val, -jnp.inf)
        best_idx[...] = jnp.zeros_like(best_idx)
        logit_y[...] = jnp.zeros_like(logit_y)

    logits = _mdot(m_scr[...], we_ref[...]) + be_ref[...]           # (tile, tv)
    ids = j * tv + lax.broadcasted_iota(jnp.int32, logits.shape, 1)

    # running argmax over vocab blocks (first maximal index; strict '>' keeps earlier block on ties)
    blk_max = jnp.max(logits, axis=-1, keepdims=True)
    blk_arg = jnp.min(jnp.where(logits == blk_max, ids, jnp.int32(2 ** 30)),
                      axis=-1, keepdims=True)
    better = blk_max > best_val[...]
    best_idx[...] = jnp.where(better, blk_arg, best_idx[...])
    best_val[...] = jnp.where(better, blk_max, best_val[...])

    # online softmax denominator
    new_max = jnp.maximum(run_max[...], blk_max)
    run_sum[...] = (run_sum[...] * jnp.exp(run_max[...] - new_max)
                    + jnp.sum(jnp.exp(logits - new_max), axis=-1, keepdims=True))
    run_max[...] = new_max

    # logit at the target id (the target lands in exactly one vocab block)
    sel = ids == y_ref[...]
    logit_y[...] = logit_y[...] + jnp.sum(jnp.where(sel, logits, 0.0),
                                          axis=-1, keepdims=True)

    @pl.when(j == nv - 1)
    def _():
        amax_ref[...] = best_idx[...]
        # exact division (not approx reciprocal): this value feeds log(p) in the loss
        ptgt_ref[...] = jnp.exp(logit_y[...] - run_max[...]) / run_sum[...]


def proj_head(x, y_idx, wm_t, bm, we_t, be, *, tile_n=256, tile_v=2048):
    """x: (N, H), y_idx: (N, 1) int32 -> (argmax (N,1) int32, p_target (N,1) f32)."""
    N, H = x.shape
    E = wm_t.shape[1]
    V = we_t.shape[1]

    tile = min(tile_n, _round_up(N, 8))
    n_pad = _round_up(N, tile)
    if n_pad != N:
        x = jnp.pad(x, ((0, n_pad - N), (0, 0)))
        y_idx = jnp.pad(y_idx, ((0, n_pad - N), (0, 0)))

    # vocab tiling: padded columns get zero weights and a -1e30 bias so they never win
    # the argmax and contribute ~0 to the softmax denominator.
    if V <= tile_v:
        tv, v_pad = V, V
    else:
        tv = tile_v
        v_pad = _round_up(V, tv)
    if v_pad != V:
        we_t = jnp.pad(we_t, ((0, 0), (0, v_pad - V)))
        be = jnp.pad(be, ((0, 0), (0, v_pad - V)), constant_values=-1e30)

    amax, ptgt = pl.pallas_call(
        _proj_head_kernel,
        out_shape=(jax.ShapeDtypeStruct((n_pad, 1), jnp.int32),
                   jax.ShapeDtypeStruct((n_pad, 1), jnp.float32)),
        grid_spec=pltpu.PrefetchScalarGridSpec(
            num_scalar_prefetch=0,
            grid=(n_pad // tile, v_pad // tv),
            in_specs=[pl.BlockSpec((tile, H), lambda i, j: (i, 0)),
                      pl.BlockSpec((tile, 1), lambda i, j: (i, 0)),
                      _resident_spec((H, E), lambda i, j: (0, 0)),
                      _resident_spec((1, E), lambda i, j: (0, 0)),
                      pl.BlockSpec((E, tv), lambda i, j: (0, j)),
                      pl.BlockSpec((1, tv), lambda i, j: (0, j))],
            out_specs=[pl.BlockSpec((tile, 1), lambda i, j: (i, 0)),
                       pl.BlockSpec((tile, 1), lambda i, j: (i, 0))],
            scratch_shapes=[pltpu.VMEM((tile, E), jnp.float32),   # out_mlp cache
                            pltpu.VMEM((tile, 1), jnp.float32),   # running max
                            pltpu.VMEM((tile, 1), jnp.float32),   # running sum
                            pltpu.VMEM((tile, 1), jnp.float32),   # best value
                            pltpu.VMEM((tile, 1), jnp.int32),     # best index
                            pltpu.VMEM((tile, 1), jnp.float32)]), # target logit
        compiler_params=pltpu.CompilerParams(
            dimension_semantics=("parallel", "arbitrary"),
            vmem_limit_bytes=_VMEM_LIMIT),
    )(x, y_idx, wm_t, bm, we_t, be)
    return amax[:N], ptgt[:N]


# -----------------------------------------------------------------------------
# Parameter init (deterministic; PyTorch shapes, stored pre-transposed; matmul
# weights stored bf16 when _MXU_BF16 so HBM traffic is halved as well).
# -----------------------------------------------------------------------------
def init_params(key, vocab, embed, hidden, padding_id):
    ks = jax.random.split(key, 10)
    scale = 0.1
    wdt = jnp.bfloat16 if _MXU_BF16 else jnp.float32

    embed_w = scale * jax.random.normal(ks[0], (vocab, embed), jnp.float32)
    embed_w = embed_w.at[padding_id].set(0.0)       # nn.Embedding padding_idx row = 0

    def lstm_p(k1, k2, k3):
        wih = scale * jax.random.normal(k1, (4 * hidden, embed), jnp.float32)
        whh = scale * jax.random.normal(k2, (4 * hidden, hidden), jnp.float32)
        b_ih = scale * jax.random.normal(k3, (4 * hidden,), jnp.float32)
        b_hh = jnp.zeros((4 * hidden,), jnp.float32)
        return (wih.T.astype(wdt), whh.T.astype(wdt),
                (b_ih + b_hh).reshape(1, 4 * hidden))

    enc = lstm_p(ks[1], ks[2], ks[3])
    dec = lstm_p(ks[4], ks[5], ks[6])

    wm = scale * jax.random.normal(ks[7], (embed, hidden), jnp.float32)   # out_mlp
    bm = scale * jax.random.normal(ks[8], (1, embed), jnp.float32)
    be = scale * jax.random.normal(ks[9], (1, vocab), jnp.float32)

    return dict(embed=embed_w, enc=enc, dec=dec,
                wm_t=wm.T.astype(wdt), bm=bm,
                we_t=embed_w.T.astype(wdt), be=be)      # tied output embedding


# -----------------------------------------------------------------------------
# Full forward pass (training-mode semantics of RNN.forward).
# -----------------------------------------------------------------------------
@functools.partial(jax.jit, static_argnames=("padding_id", "gamma"))
def rnn_forward(params, source_data, target_data, h0, c0, *, padding_id, gamma):
    B, Ts = source_data.shape
    _, Tt = target_data.shape
    H = h0.shape[-1]

    # masks / last non-pad source index
    src_last_idx = jnp.sum(1 - (source_data == padding_id).astype(jnp.int32), -1) - 1
    mask = (target_data != padding_id).astype(jnp.float32)

    # time-major token ids (tiny int transposes), then embedding gather (glue)
    src_ids = source_data.T.reshape(-1)                          # (Ts*B,)
    tgt_ids = target_data.T.reshape(-1)                          # (Tt*B,)
    src_rep = jnp.take(params["embed"], src_ids, axis=0)         # (Ts*B, E)
    tgt_rep = jnp.take(params["embed"], tgt_ids, axis=0)         # (Tt*B, E)

    enc_wih_t, enc_whh_t, enc_b = params["enc"]
    dec_wih_t, dec_whh_t, dec_b = params["dec"]

    # hoisted input projections: one big GEMM per LSTM (Pallas, row-tiled)
    zx_enc = linear_rows(src_rep, enc_wih_t, enc_b).reshape(Ts, B, 4 * H)
    zx_dec = linear_rows(tgt_rep, dec_wih_t, dec_b).reshape(Tt, B, 4 * H)

    # encoder recurrence -> last non-pad hidden state only (Pallas)
    h_t = lstm_last(zx_enc, enc_whh_t, h0, c0, src_last_idx)     # (B, H)

    # decoder recurrence -> full time-major hidden sequence (Pallas)
    dec_out = lstm_seq(zx_dec, dec_whh_t, h_t, c0)               # (Tt, B, H)

    # dropout with p=0.0 -> identity (see TODO at top)

    # fused head: out_mlp -> tied embed -> softmax -> (argmax id, p at next target)
    y_next = jnp.concatenate(
        [target_data[:, 1:], jnp.zeros((B, 1), target_data.dtype)], axis=1)
    y_next_tb = y_next.T.reshape(-1, 1).astype(jnp.int32)        # (Tt*B, 1), (t, b) order

    amax_tb, ptgt_tb = proj_head(dec_out.reshape(Tt * B, H), y_next_tb,
                                 params["wm_t"], params["bm"],
                                 params["we_t"], params["be"])

    decode_result = amax_tb.reshape(Tt, B).T                     # (B, Tt)
    p = ptgt_tb.reshape(Tt, B).T[:, :Tt - 1]                     # probs[:, :-1] @ target[:, 1:]

    # focal NLL (fc_nll_loss)
    g = (1.0 - jnp.clip(p, 0.01, 0.99)) ** gamma
    cost = -g * jnp.log(p + 1e-8)
    m = mask[:, 1:]
    cost = jnp.sum(cost * m, axis=1) / jnp.sum(m, axis=1)
    loss = jnp.mean(cost)

    return decode_result, loss


if __name__ == "__main__":
    # small config consistent with the module
    VOCAB, EMBED, HIDDEN = 32, 16, 32
    BATCH, SRC_LEN, TGT_LEN = 2, 8, 10
    PAD_ID, SOS_ID, EOS_ID = 0, 1, 2
    GAMMA = 2

    key = jax.random.PRNGKey(0)
    k_par, k_src, k_tgt, k_h, k_c = jax.random.split(key, 5)

    params = init_params(k_par, VOCAB, EMBED, HIDDEN, PAD_ID)

    # synthetic "ready" batches: source padded with PAD at the end,
    # target = [SOS, tokens..., EOS, PAD...]
    src_tok = jax.random.randint(k_src, (BATCH, SRC_LEN), 3, VOCAB, dtype=jnp.int32)
    source_data = src_tok.at[:, -2:].set(PAD_ID)
    tgt_tok = jax.random.randint(k_tgt, (BATCH, TGT_LEN), 3, VOCAB, dtype=jnp.int32)
    target_data = tgt_tok.at[:, 0].set(SOS_ID)
    target_data = target_data.at[:, -3].set(EOS_ID)
    target_data = target_data.at[:, -2:].set(PAD_ID)

    # h_0 / c_0 (torch.randn in the reference), deterministic here
    h0 = jax.random.normal(k_h, (BATCH, HIDDEN), jnp.float32)
    c0 = jax.random.normal(k_c, (BATCH, HIDDEN), jnp.float32)

    decode_result, loss = rnn_forward(params, source_data, target_data, h0, c0,
                                      padding_id=PAD_ID, gamma=GAMMA)
    jax.block_until_ready((decode_result, loss))
    assert decode_result.shape == (BATCH, TGT_LEN)
    assert jnp.isfinite(loss)
    print("KERNEL_OK")
</pallas_src>

<mosaic_0001>
module attributes {stable_mosaic.version = 11 : i64} {
  func.func @_gemm_bias_kernel(%arg0: i32, %arg1: memref<16x16xf32, #tpu.memory_space<vmem>>, %arg2: memref<16x128xbf16, #tpu.memory_space<vmem>>, %arg3: memref<1x128xf32, #tpu.memory_space<vmem>>, %arg4: memref<16x128xf32, #tpu.memory_space<vmem>>) attributes {dimension_semantics = [#tpu.dimension_semantics<parallel>], iteration_bounds = array<i64: 1>, scalar_prefetch = 0 : i64, scratch_operands = 0 : i64, tpu.core_type = #tpu.core_type<tc>, window_params = [{transform_indices = @transform_0, window_bounds = array<i64: 16, 16>}, {pipeline_mode = #tpu.pipeline_mode<synchronous>, transform_indices = @transform_1, window_bounds = array<i64: 16, 128>}, {pipeline_mode = #tpu.pipeline_mode<synchronous>, transform_indices = @transform_2, window_bounds = array<i64: 1, 128>}, {transform_indices = @transform_3, window_bounds = array<i64: 16, 128>}]} {
    %c0 = arith.constant 0 : index
    %c0_0 = arith.constant 0 : index
    %0 = vector.load %arg1[%c0, %c0_0] : memref<16x16xf32, #tpu.memory_space<vmem>>, vector<16x16xf32>
    %c0_1 = arith.constant 0 : index
    %c0_2 = arith.constant 0 : index
    %1 = vector.load %arg2[%c0_1, %c0_2] : memref<16x128xbf16, #tpu.memory_space<vmem>>, vector<16x128xbf16>
    %2 = arith.truncf %0 : vector<16x16xf32> to vector<16x16xbf16>
    %cst = arith.constant dense<0.000000e+00> : vector<16x128xf32>
    %3 = tpu.matmul %2, %1, %cst {dimension_numbers = #tpu.dot_dimension_numbers<[1], [0], [0], [1], [0, 0, 1, 1], [], []>} : vector<16x16xbf16>, vector<16x128xbf16>, vector<16x128xf32> -> vector<16x128xf32>
    %c0_3 = arith.constant 0 : index
    %c0_4 = arith.constant 0 : index
    %4 = vector.load %arg3[%c0_3, %c0_4] : memref<1x128xf32, #tpu.memory_space<vmem>>, vector<1x128xf32>
    %5 = vector.broadcast %4 : vector<1x128xf32> to vector<16x128xf32>
    %6 = arith.addf %3, %5 : vector<16x128xf32>
    %c0_5 = arith.constant 0 : index
    %c0_6 = arith.constant 0 : index
    %7 = vector.load %arg4[%c0_5, %c0_6] : memref<16x128xf32, #tpu.memory_space<vmem>>, vector<16x128xf32>
    tpu.vector_store %arg4[%c0_5, %c0_6], %6 {strides = array<i32>} : memref<16x128xf32, #tpu.memory_space<vmem>>, vector<16x128xf32>,
    return
  }
  func.func @transform_0(%arg0: i32) -> (i32, i32) {
    %c0_i32 = arith.constant 0 : i32
    %c0_i32_0 = arith.constant 0 : i32
    return %arg0, %c0_i32 : i32, i32
  }
  func.func @transform_1(%arg0: i32) -> (i32, i32) {
    %c0_i32 = arith.constant 0 : i32
    %c0_i32_0 = arith.constant 0 : i32
    %c0_i32_1 = arith.constant 0 : i32
    return %c0_i32, %c0_i32_0 : i32, i32
  }
  func.func @transform_2(%arg0: i32) -> (i32, i32) {
    %c0_i32 = arith.constant 0 : i32
    %c0_i32_0 = arith.constant 0 : i32
    %c0_i32_1 = arith.constant 0 : i32
    return %c0_i32, %c0_i32_0 : i32, i32
  }
  func.func @transform_3(%arg0: i32) -> (i32, i32) {
    %c0_i32 = arith.constant 0 : i32
    %c0_i32_0 = arith.constant 0 : i32
    return %arg0, %c0_i32 : i32, i32
  }
}

module attributes {stable_mosaic.version = 11 : i64} {
  func.func @_gemm_bias_kernel(%arg0: i32, %arg1: memref<24x16xf32, #tpu.memory_space<vmem>>, %arg2: memref<16x128xbf16, #tpu.memory_space<vmem>>, %arg3: memref<1x128xf32, #tpu.memory_space<vmem>>, %arg4: memref<24x128xf32, #tpu.memory_space<vmem>>) attributes {dimension_semantics = [#tpu.dimension_semantics<parallel>], iteration_bounds = array<i64: 1>, scalar_prefetch = 0 : i64, scratch_operands = 0 : i64, tpu.core_type = #tpu.core_type<tc>, window_params = [{transform_indices = @transform_0, window_bounds = array<i64: 24, 16>}, {pipeline_mode = #tpu.pipeline_mode<synchronous>, transform_indices = @transform_1, window_bounds = array<i64: 16, 128>}, {pipeline_mode = #tpu.pipeline_mode<synchronous>, transform_indices = @transform_2, window_bounds = array<i64: 1, 128>}, {transform_indices = @transform_3, window_bounds = array<i64: 24, 128>}]} {
    %c0 = arith.constant 0 : index
    %c0_0 = arith.constant 0 : index
    %0 = vector.load %arg1[%c0, %c0_0] : memref<24x16xf32, #tpu.memory_space<vmem>>, vector<24x16xf32>
    %c0_1 = arith.constant 0 : index
    %c0_2 = arith.constant 0 : index
    %1 = vector.load %arg2[%c0_1, %c0_2] : memref<16x128xbf16, #tpu.memory_space<vmem>>, vector<16x128xbf16>
    %2 = arith.truncf %0 : vector<24x16xf32> to vector<24x16xbf16>
    %cst = arith.constant dense<0.000000e+00> : vector<24x128xf32>
    %3 = tpu.matmul %2, %1, %cst {dimension_numbers = #tpu.dot_dimension_numbers<[1], [0], [0], [1], [0, 0, 1, 1], [], []>} : vector<24x16xbf16>, vector<16x128xbf16>, vector<24x128xf32> -> vector<24x128xf32>
    %c0_3 = arith.constant 0 : index
    %c0_4 = arith.constant 0 : index
    %4 = vector.load %arg3[%c0_3, %c0_4] : memref<1x128xf32, #tpu.memory_space<vmem>>, vector<1x128xf32>
    %5 = vector.broadcast %4 : vector<1x128xf32> to vector<24x128xf32>
    %6 = arith.addf %3, %5 : vector<24x128xf32>
    %c0_5 = arith.constant 0 : index
    %c0_6 = arith.constant 0 : index
    %7 = vector.load %arg4[%c0_5, %c0_6] : memref<24x128xf32, #tpu.memory_space<vmem>>, vector<24x128xf32>
    tpu.vector_store %arg4[%c0_5, %c0_6], %6 {strides = array<i32>} : memref<24x128xf32, #tpu.memory_space<vmem>>, vector<24x128xf32>,
    return
  }
  func.func @transform_0(%arg0: i32) -> (i32, i32) {
    %c0_i32 = arith.constant 0 : i32
    %c0_i32_0 = arith.constant 0 : i32
    return %arg0, %c0_i32 : i32, i32
  }
  func.func @transform_1(%arg0: i32) -> (i32, i32) {
    %c0_i32 = arith.constant 0 : i32
    %c0_i32_0 = arith.constant 0 : i32
    %c0_i32_1 = arith.constant 0 : i32
    return %c0_i32, %c0_i32_0 : i32, i32
  }
  func.func @transform_2(%arg0: i32) -> (i32, i32) {
    %c0_i32 = arith.constant 0 : i32
    %c0_i32_0 = arith.constant 0 : i32
    %c0_i32_1 = arith.constant 0 : i32
    return %c0_i32, %c0_i32_0 : i32, i32
  }
  func.func @transform_3(%arg0: i32) -> (i32, i32) {
    %c0_i32 = arith.constant 0 : i32
    %c0_i32_0 = arith.constant 0 : i32
    return %arg0, %c0_i32 : i32, i32
  }
}

module attributes {stable_mosaic.version = 11 : i64} {
  func.func @_lstm_last_kernel(%arg0: i32, %arg1: memref<2xi32, #tpu.memory_space<smem>>, %arg2: memref<8x2x128xf32, #tpu.memory_space<vmem>>, %arg3: memref<32x128xbf16, #tpu.memory_space<vmem>>, %arg4: memref<2x32xf32, #tpu.memory_space<vmem>>, %arg5: memref<2x32xf32, #tpu.memory_space<vmem>>, %arg6: memref<2x1xi32, #tpu.memory_space<vmem>>, %arg7: memref<2x32xf32, #tpu.memory_space<vmem>>, %arg8: memref<2x32xf32, #tpu.memory_space<vmem>>, %arg9: memref<2x32xf32, #tpu.memory_space<vmem>>) attributes {dimension_semantics = [#tpu.dimension_semantics<arbitrary>], iteration_bounds = array<i64: 1>, scalar_prefetch = 1 : i64, scratch_operands = 2 : i64, tpu.core_type = #tpu.core_type<tc>, window_params = [{transform_indices = @transform_0, window_bounds = array<i64: 8, 2, 128>}, {pipeline_mode = #tpu.pipeline_mode<synchronous>, transform_indices = @transform_1, window_bounds = array<i64: 32, 128>}, {pipeline_mode = #tpu.pipeline_mode<synchronous>, transform_indices = @transform_2, window_bounds = array<i64: 2, 32>}, {pipeline_mode = #tpu.pipeline_mode<synchronous>, transform_indices = @transform_3, window_bounds = array<i64: 2, 32>}, {pipeline_mode = #tpu.pipeline_mode<synchronous>, transform_indices = @transform_4, window_bounds = array<i64: 2, 1>}, {pipeline_mode = #tpu.pipeline_mode<synchronous>, transform_indices = @transform_5, window_bounds = array<i64: 2, 32>}]} {
    %c0_i32 = arith.constant 0 : i32
    %0 = arith.cmpi eq, %arg0, %c0_i32 : i32
    %1 = arith.extui %0 : i1 to i32
    %c0_i32_0 = arith.constant 0 : i32
    %2 = arith.cmpi ne, %1, %c0_i32_0 : i32
    scf.if %2 {
      %c0_8 = arith.constant 0 : index
      %c0_9 = arith.constant 0 : index
      %17 = vector.load %arg4[%c0_8, %c0_9] : memref<2x32xf32, #tpu.memory_space<vmem>>, vector<2x32xf32>
      %c0_10 = arith.constant 0 : index
      %c0_11 = arith.constant 0 : index
      %18 = vector.load %arg8[%c0_10, %c0_11] : memref<2x32xf32, #tpu.memory_space<vmem>>, vector<2x32xf32>
      tpu.vector_store %arg8[%c0_10, %c0_11], %17 {strides = array<i32>} : memref<2x32xf32, #tpu.memory_space<vmem>>, vector<2x32xf32>,
      %c0_12 = arith.constant 0 : index
      %c0_13 = arith.constant 0 : index
      %19 = vector.load %arg5[%c0_12, %c0_13] : memref<2x32xf32, #tpu.memory_space<vmem>>, vector<2x32xf32>
      %c0_14 = arith.constant 0 : index
      %c0_15 = arith.constant 0 : index
      %20 = vector.load %arg9[%c0_14, %c0_15] : memref<2x32xf32, #tpu.memory_space<vmem>>, vector<2x32xf32>
      tpu.vector_store %arg9[%c0_14, %c0_15], %19 {strides = array<i32>} : memref<2x32xf32, #tpu.memory_space<vmem>>, vector<2x32xf32>,
      %cst = arith.constant 0.000000e+00 : f32
      %21 = vector.broadcast %cst : f32 to vector<2x32xf32>
      %c0_16 = arith.constant 0 : index
      %c0_17 = arith.constant 0 : index
      %22 = vector.load %arg7[%c0_16, %c0_17] : memref<2x32xf32, #tpu.memory_space<vmem>>, vector<2x32xf32>
      tpu.vector_store %arg7[%c0_16, %c0_17], %21 {strides = array<i32>} : memref<2x32xf32, #tpu.memory_space<vmem>>, vector<2x32xf32>,
    } else {
    }
    %c8_i32 = arith.constant 8 : i32
    %3 = arith.muli %arg0, %c8_i32 : i32
    %c0 = arith.constant 0 : index
    %c0_1 = arith.constant 0 : index
    %4 = vector.load %arg3[%c0, %c0_1] : memref<32x128xbf16, #tpu.memory_space<vmem>>, vector<32x128xbf16>
    %c0_2 = arith.constant 0 : index
    %c0_3 = arith.constant 0 : index
    %5 = vector.load %arg6[%c0_2, %c0_3] : memref<2x1xi32, #tpu.memory_space<vmem>>, vector<2x1xi32>
    %c1 = arith.constant 1 : index
    %6 = memref.load %arg1[%c1] : memref<2xi32, #tpu.memory_space<smem>>
    %7 = arith.cmpi sge, %6, %3 : i32
    %c0_4 = arith.constant 0 : index
    %8 = memref.load %arg1[%c0_4] : memref<2xi32, #tpu.memory_space<smem>>
    %c8_i32_5 = arith.constant 8 : i32
    %9 = arith.addi %3, %c8_i32_5 : i32
    %10 = arith.cmpi slt, %8, %9 : i32
    %11 = arith.andi %7, %10 : i1
    %12 = arith.extui %11 : i1 to i32
    %c0_i32_6 = arith.constant 0 : i32
    %13 = arith.cmpi ne, %12, %c0_i32_6 : i32
    scf.if %13 {
      %c0_8 = arith.constant 0 : index
      %c0_9 = arith.constant 0 : index
      %17 = vector.load %arg8[%c0_8, %c0_9] : memref<2x32xf32, #tpu.memory_space<vmem>>, vector<2x32xf32>
      %c0_10 = arith.constant 0 : index
      %c0_11 = arith.constant 0 : index
      %18 = vector.load %arg9[%c0_10, %c0_11] : memref<2x32xf32, #tpu.memory_space<vmem>>, vector<2x32xf32>
      %c0_12 = arith.constant 0 : index
      %c0_13 = arith.constant 0 : index
      %19 = vector.load %arg7[%c0_12, %c0_13] : memref<2x32xf32, #tpu.memory_space<vmem>>, vector<2x32xf32>
      %c0_i32_14 = arith.constant 0 : i32
      %20 = arith.index_cast %c0_i32_14 : i32 to index
      %c0_15 = arith.constant 0 : index
      %c0_16 = arith.constant 0 : index
      %21 = vector.load %arg2[%20, %c0_15, %c0_16] : memref<8x2x128xf32, #tpu.memory_space<vmem>>, vector<1x2x128xf32>
      %22 = vector.shape_cast %21 : vector<1x2x128xf32> to vector<2x128xf32>
      %23 = arith.truncf %17 : vector<2x32xf32> to vector<2x32xbf16>
      %cst = arith.constant dense<0.000000e+00> : vector<2x128xf32>
      %24 = tpu.matmul %23, %4, %cst {dimension_numbers = #tpu.dot_dimension_numbers<[1], [0], [0], [1], [0, 0, 1, 1], [], []>} : vector<2x32xbf16>, vector<32x128xbf16>, vector<2x128xf32> -> vector<2x128xf32>
      %25 = arith.addf %22, %24 : vector<2x128xf32>
      %26 = vector.extract_strided_slice %25 {offsets = [0, 0], sizes = [2, 32], strides = [1, 1]} : vector<2x128xf32> to vector<2x32xf32>
      %27 = arith.negf %26 : vector<2x32xf32>
      %28 = math.exp %27 : vector<2x32xf32>
      %cst_17 = arith.constant 1.000000e+00 : f32
      %29 = vector.broadcast %cst_17 : f32 to vector<2x32xf32>
      %30 = arith.addf %29, %28 : vector<2x32xf32>
      %31 = arith.divf %29, %30 : vector<2x32xf32>
      %32 = vector.extract_strided_slice %25 {offsets = [0, 32], sizes = [2, 32], strides = [1, 1]} : vector<2x128xf32> to vector<2x32xf32>
      %33 = arith.negf %32 : vector<2x32xf32>
      %34 = math.exp %33 : vector<2x32xf32>
      %cst_18 = arith.constant 1.000000e+00 : f32
      %35 = vector.broadcast %cst_18 : f32 to vector<2x32xf32>
      %36 = arith.addf %35, %34 : vector<2x32xf32>
      %37 = arith.divf %35, %36 : vector<2x32xf32>
      %38 = vector.extract_strided_slice %25 {offsets = [0, 64], sizes = [2, 32], strides = [1, 1]} : vector<2x128xf32> to vector<2x32xf32>
      %39 = math.tanh %38 : vector<2x32xf32>
      %40 = vector.extract_strided_slice %25 {offsets = [0, 96], sizes = [2, 32], strides = [1, 1]} : vector<2x128xf32> to vector<2x32xf32>
      %41 = arith.negf %40 : vector<2x32xf32>
      %42 = math.exp %41 : vector<2x32xf32>
      %cst_19 = arith.constant 1.000000e+00 : f32
      %43 = vector.broadcast %cst_19 : f32 to vector<2x32xf32>
      %44 = arith.addf %43, %42 : vector<2x32xf32>
      %45 = arith.divf %43, %44 : vector<2x32xf32>
      %46 = arith.mulf %37, %18 : vector<2x32xf32>
      %47 = arith.mulf %31, %39 : vector<2x32xf32>
      %48 = arith.addf %46, %47 : vector<2x32xf32>
      %49 = math.tanh %48 : vector<2x32xf32>
      %50 = arith.mulf %45, %49 : vector<2x32xf32>
      %51 = arith.addi %3, %c0_i32_14 : i32
      %52 = vector.broadcast %51 : i32 to vector<2x1xi32>
      %53 = arith.cmpi eq, %5, %52 : vector<2x1xi32>
      %54 = vector.shape_cast %53 : vector<2x1xi1> to vector<2x1xi1>
      %55 = vector.broadcast %54 : vector<2x1xi1> to vector<2x32xi1>
      %56 = arith.select %55, %50, %19 : vector<2x32xi1>, vector<2x32xf32>
      %c1_i32 = arith.constant 1 : i32
      %57 = arith.index_cast %c1_i32 : i32 to index
      %c0_20 = arith.constant 0 : index
      %c0_21 = arith.constant 0 : index
      %58 = vector.load %arg2[%57, %c0_20, %c0_21] : memref<8x2x128xf32, #tpu.memory_space<vmem>>, vector<1x2x128xf32>
      %59 = vector.shape_cast %58 : vector<1x2x128xf32> to vector<2x128xf32>
      %60 = arith.truncf %50 : vector<2x32xf32> to vector<2x32xbf16>
      %cst_22 = arith.constant dense<0.000000e+00> : vector<2x128xf32>
      %61 = tpu.matmul %60, %4, %cst_22 {dimension_numbers = #tpu.dot_dimension_numbers<[1], [0], [0], [1], [0, 0, 1, 1], [], []>} : vector<2x32xbf16>, vector<32x128xbf16>, vector<2x128xf32> -> vector<2x128xf32>
      %62 = arith.addf %59, %61 : vector<2x128xf32>
      %63 = vector.extract_strided_slice %62 {offsets = [0, 0], sizes = [2, 32], strides = [1, 1]} : vector<2x128xf32> to vector<2x32xf32>
      %64 = arith.negf %63 : vector<2x32xf32>
      %65 = math.exp %64 : vector<2x32xf32>
      %cst_23 = arith.constant 1.000000e+00 : f32
      %66 = vector.broadcast %cst_23 : f32 to vector<2x32xf32>
      %67 = arith.addf %66, %65 : vector<2x32xf32>
      %68 = arith.divf %66, %67 : vector<2x32xf32>
      %69 = vector.extract_strided_slice %62 {offsets = [0, 32], sizes = [2, 32], strides = [1, 1]} : vector<2x128xf32> to vector<2x32xf32>
      %70 = arith.negf %69 : vector<2x32xf32>
      %71 = math.exp %70 : vector<2x32xf32>
      %cst_24 = arith.constant 1.000000e+00 : f32
      %72 = vector.broadcast %cst_24 : f32 to vector<2x32xf32>
      %73 = arith.addf %72, %71 : vector<2x32xf32>
      %74 = arith.divf %72, %73 : vector<2x32xf32>
      %75 = vector.extract_strided_slice %62 {offsets = [0, 64], sizes = [2, 32], strides = [1, 1]} : vector<2x128xf32> to vector<2x32xf32>
      %76 = math.tanh %75 : vector<2x32xf32>
      %77 = vector.extract_strided_slice %62 {offsets = [0, 96], sizes = [2, 32], strides = [1, 1]} : vector<2x128xf32> to vector<2x32xf32>
      %78 = arith.negf %77 : vector<2x32xf32>
      %79 = math.exp %78 : vector<2x32xf32>
      %cst_25 = arith.constant 1.000000e+00 : f32
      %80 = vector.broadcast %cst_25 : f32 to vector<2x32xf32>
      %81 = arith.addf %80, %79 : vector<2x32xf32>
      %82 = arith.divf %80, %81 : vector<2x32xf32>
      %83 = arith.mulf %74, %48 : vector<2x32xf32>
      %84 = arith.mulf %68, %76 : vector<2x32xf32>
      %85 = arith.addf %83, %84 : vector<2x32xf32>
      %86 = math.tanh %85 : vector<2x32xf32>
      %87 = arith.mulf %82, %86 : vector<2x32xf32>
      %88 = arith.addi %3, %c1_i32 : i32
      %89 = vector.broadcast %88 : i32 to vector<2x1xi32>
      %90 = arith.cmpi eq, %5, %89 : vector<2x1xi32>
      %91 = vector.shape_cast %90 : vector<2x1xi1> to vector<2x1xi1>
      %92 = vector.broadcast %91 : vector<2x1xi1> to vector<2x32xi1>
      %93 = arith.select %92, %87, %56 : vector<2x32xi1>, vector<2x32xf32>
      %c2_i32 = arith.constant 2 : i32
      %94 = arith.index_cast %c2_i32 : i32 to index
      %c0_26 = arith.constant 0 : index
      %c0_27 = arith.constant 0 : index
      %95 = vector.load %arg2[%94, %c0_26, %c0_27] : memref<8x2x128xf32, #tpu.memory_space<vmem>>, vector<1x2x128xf32>
      %96 = vector.shape_cast %95 : vector<1x2x128xf32> to vector<2x128xf32>
      %97 = arith.truncf %87 : vector<2x32xf32> to vector<2x32xbf16>
      %cst_28 = arith.constant dense<0.000000e+00> : vector<2x128xf32>
      %98 = tpu.matmul %97, %4, %cst_28 {dimension_numbers = #tpu.dot_dimension_numbers<[1], [0], [0], [1], [0, 0, 1, 1], [], []>} : vector<2x32xbf16>, vector<32x128xbf16>, vector<2x128xf32> -> vector<2x128xf32>
      %99 = arith.addf %96, %98 : vector<2x128xf32>
      %100 = vector.extract_strided_slice %99 {offsets = [0, 0], sizes = [2, 32], strides = [1, 1]} : vector<2x128xf32> to vector<2x32xf32>
      %101 = arith.negf %100 : vector<2x32xf32>
      %102 = math.exp %101 : vector<2x32xf32>
      %cst_29 = arith.constant 1.000000e+00 : f32
      %103 = vector.broadcast %cst_29 : f32 to vector<2x32xf32>
      %104 = arith.addf %103, %102 : vector<2x32xf32>
      %105 = arith.divf %103, %104 : vector<2x32xf32>
      %106 = vector.extract_strided_slice %99 {offsets = [0, 32], sizes = [2, 32], strides = [1, 1]} : vector<2x128xf32> to vector<2x32xf32>
      %107 = arith.negf %106 : vector<2x32xf32>
      %108 = math.exp %107 : vector<2x32xf32>
      %cst_30 = arith.constant 1.000000e+00 : f32
      %109 = vector.broadcast %cst_30 : f32 to vector<2x32xf32>
      %110 = arith.addf %109, %108 : vector<2x32xf32>
      %111 = arith.divf %109, %110 : vector<2x32xf32>
      %112 = vector.extract_strided_slice %99 {offsets = [0, 64], sizes = [2, 32], strides = [1, 1]} : vector<2x128xf32> to vector<2x32xf32>
      %113 = math.tanh %112 : vector<2x32xf32>
      %114 = vector.extract_strided_slice %99 {offsets = [0, 96], sizes = [2, 32], strides = [1, 1]} : vector<2x128xf32> to vector<2x32xf32>
      %115 = arith.negf %114 : vector<2x32xf32>
      %116 = math.exp %115 : vector<2x32xf32>
      %cst_31 = arith.constant 1.000000e+00 : f32
      %117 = vector.broadcast %cst_31 : f32 to vector<2x32xf32>
      %118 = arith.addf %117, %116 : vector<2x32xf32>
      %119 = arith.divf %117, %118 : vector<2x32xf32>
      %120 = arith.mulf %111, %85 : vector<2x32xf32>
      %121 = arith.mulf %105, %113 : vector<2x32xf32>
      %122 = arith.addf %120, %121 : vector<2x32xf32>
      %123 = math.tanh %122 : vector<2x32xf32>
      %124 = arith.mulf %119, %123 : vector<2x32xf32>
      %125 = arith.addi %3, %c2_i32 : i32
      %126 = vector.broadcast %125 : i32 to vector<2x1xi32>
      %127 = arith.cmpi eq, %5, %126 : vector<2x1xi32>
      %128 = vector.shape_cast %127 : vector<2x1xi1> to vector<2x1xi1>
      %129 = vector.broadcast %128 : vector<2x1xi1> to vector<2x32xi1>
      %130 = arith.select %129, %124, %93 : vector<2x32xi1>, vector<2x32xf32>
      %c3_i32 = arith.constant 3 : i32
      %131 = arith.index_cast %c3_i32 : i32 to index
      %c0_32 = arith.constant 0 : index
      %c0_33 = arith.constant 0 : index
      %132 = vector.load %arg2[%131, %c0_32, %c0_33] : memref<8x2x128xf32, #tpu.memory_space<vmem>>, vector<1x2x128xf32>
      %133 = vector.shape_cast %132 : vector<1x2x128xf32> to vector<2x128xf32>
      %134 = arith.truncf %124 : vector<2x32xf32> to vector<2x32xbf16>
      %cst_34 = arith.constant dense<0.000000e+00> : vector<2x128xf32>
      %135 = tpu.matmul %134, %4, %cst_34 {dimension_numbers = #tpu.dot_dimension_numbers<[1], [0], [0], [1], [0, 0, 1, 1], [], []>} : vector<2x32xbf16>, vector<32x128xbf16>, vector<2x128xf32> -> vector<2x128xf32>
      %136 = arith.addf %133, %135 : vector<2x128xf32>
      %137 = vector.extract_strided_slice %136 {offsets = [0, 0], sizes = [2, 32], strides = [1, 1]} : vector<2x128xf32> to vector<2x32xf32>
      %138 = arith.negf %137 : vector<2x32xf32>
      %139 = math.exp %138 : vector<2x32xf32>
      %cst_35 = arith.constant 1.000000e+00 : f32
      %140 = vector.broadcast %cst_35 : f32 to vector<2x32xf32>
      %141 = arith.addf %140, %139 : vector<2x32xf32>
      %142 = arith.divf %140, %141 : vector<2x32xf32>
      %143 = vector.extract_strided_slice %136 {offsets = [0, 32], sizes = [2, 32], strides = [1, 1]} : vector<2x128xf32> to vector<2x32xf32>
      %144 = arith.negf %143 : vector<2x32xf32>
      %145 = math.exp %144 : vector<2x32xf32>
      %cst_36 = arith.constant 1.000000e+00 : f32
      %146 = vector.broadcast %cst_36 : f32 to vector<2x32xf32>
      %147 = arith.addf %146, %145 : vector<2x32xf32>
      %148 = arith.divf %146, %147 : vector<2x32xf32>
      %149 = vector.extract_strided_slice %136 {offsets = [0, 64], sizes = [2, 32], strides = [1, 1]} : vector<2x128xf32> to vector<2x32xf32>
      %150 = math.tanh %149 : vector<2x32xf32>
      %151 = vector.extract_strided_slice %136 {offsets = [0, 96], sizes = [2, 32], strides = [1, 1]} : vector<2x128xf32> to vector<2x32xf32>
      %152 = arith.negf %151 : vector<2x32xf32>
      %153 = math.exp %152 : vector<2x32xf32>
      %cst_37 = arith.constant 1.000000e+00 : f32
      %154 = vector.broadcast %cst_37 : f32 to vector<2x32xf32>
      %155 = arith.addf %154, %153 : vector<2x32xf32>
      %156 = arith.divf %154, %155 : vector<2x32xf32>
      %157 = arith.mulf %148, %122 : vector<2x32xf32>
      %158 = arith.mulf %142, %150 : vector<2x32xf32>
      %159 = arith.addf %157, %158 : vector<2x32xf32>
      %160 = math.tanh %159 : vector<2x32xf32>
      %161 = arith.mulf %156, %160 : vector<2x32xf32>
      %162 = arith.addi %3, %c3_i32 : i32
      %163 = vector.broadcast %162 : i32 to vector<2x1xi32>
      %164 = arith.cmpi eq, %5, %163 : vector<2x1xi32>
      %165 = vector.shape_cast %164 : vector<2x1xi1> to vector<2x1xi1>
      %166 = vector.broadcast %165 : vector<2x1xi1> to vector<2x32xi1>
      %167 = arith.select %166, %161, %130 : vector<2x32xi1>, vector<2x32xf32>
      %c4_i32 = arith.constant 4 : i32
      %168 = arith.index_cast %c4_i32 : i32 to index
      %c0_38 = arith.constant 0 : index
      %c0_39 = arith.constant 0 : index
      %169 = vector.load %arg2[%168, %c0_38, %c0_39] : memref<8x2x128xf32, #tpu.memory_space<vmem>>, vector<1x2x128xf32>
      %170 = vector.shape_cast %169 : vector<1x2x128xf32> to vector<2x128xf32>
      %171 = arith.truncf %161 : vector<2x32xf32> to vector<2x32xbf16>
      %cst_40 = arith.constant dense<0.000000e+00> : vector<2x128xf32>
      %172 = tpu.matmul %171, %4, %cst_40 {dimension_numbers = #tpu.dot_dimension_numbers<[1], [0], [0], [1], [0, 0, 1, 1], [], []>} : vector<2x32xbf16>, vector<32x128xbf16>, vector<2x128xf32> -> vector<2x128xf32>
      %173 = arith.addf %170, %172 : vector<2x128xf32>
      %174 = vector.extract_strided_slice %173 {offsets = [0, 0], sizes = [2, 32], strides = [1, 1]} : vector<2x128xf32> to vector<2x32xf32>
      %175 = arith.negf %174 : vector<2x32xf32>
      %176 = math.exp %175 : vector<2x32xf32>
      %cst_41 = arith.constant 1.000000e+00 : f32
      %177 = vector.broadcast %cst_41 : f32 to vector<2x32xf32>
      %178 = arith.addf %177, %176 : vector<2x32xf32>
      %179 = arith.divf %177, %178 : vector<2x32xf32>
      %180 = vector.extract_strided_slice %173 {offsets = [0, 32], sizes = [2, 32], strides = [1, 1]} : vector<2x128xf32> to vector<2x32xf32>
      %181 = arith.negf %180 : vector<2x32xf32>
      %182 = math.exp %181 : vector<2x32xf32>
      %cst_42 = arith.constant 1.000000e+00 : f32
      %183 = vector.broadcast %cst_42 : f32 to vector<2x32xf32>
      %184 = arith.addf %183, %182 : vector<2x32xf32>
      %185 = arith.divf %183, %184 : vector<2x32xf32>
      %186 = vector.extract_strided_slice %173 {offsets = [0, 64], sizes = [2, 32], strides = [1, 1]} : vector<2x128xf32> to vector<2x32xf32>
      %187 = math.tanh %186 : vector<2x32xf32>
      %188 = vector.extract_strided_slice %173 {offsets = [0, 96], sizes = [2, 32], strides = [1, 1]} : vector<2x128xf32> to vector<2x32xf32>
      %189 = arith.negf %188 : vector<2x32xf32>
      %190 = math.exp %189 : vector<2x32xf32>
      %cst_43 = arith.constant 1.000000e+00 : f32
      %191 = vector.broadcast %cst_43 : f32 to vector<2x32xf32>
      %192 = arith.addf %191, %190 : vector<2x32xf32>
      %193 = arith.divf %191, %192 : vector<2x32xf32>
      %194 = arith.mulf %185, %159 : vector<2x32xf32>
      %195 = arith.mulf %179, %187 : vector<2x32xf32>
      %196 = arith.addf %194, %195 : vector<2x32xf32>
      %197 = math.tanh %196 : vector<2x32xf32>
      %198 = arith.mulf %193, %197 : vector<2x32xf32>
      %199 = arith.addi %3, %c4_i32 : i32
      %200 = vector.broadcast %199 : i32 to vector<2x1xi32>
      %201 = arith.cmpi eq, %5, %200 : vector<2x1xi32>
      %202 = vector.shape_cast %201 : vector<2x1xi1> to vector<2x1xi1>
      %203 = vector.broadcast %202 : vector<2x1xi1> to vector<2x32xi1>
      %204 = arith.select %203, %198, %167 : vector<2x32xi1>, vector<2x32xf32>
      %c5_i32 = arith.constant 5 : i32
      %205 = arith.index_cast %c5_i32 : i32 to index
      %c0_44 = arith.constant 0 : index
      %c0_45 = arith.constant 0 : index
      %206 = vector.load %arg2[%205, %c0_44, %c0_45] : memref<8x2x128xf32, #tpu.memory_space<vmem>>, vector<1x2x128xf32>
      %207 = vector.shape_cast %206 : vector<1x2x128xf32> to vector<2x128xf32>
      %208 = arith.truncf %198 : vector<2x32xf32> to vector<2x32xbf16>
      %cst_46 = arith.constant dense<0.000000e+00> : vector<2x128xf32>
      %209 = tpu.matmul %208, %4, %cst_46 {dimension_numbers = #tpu.dot_dimension_numbers<[1], [0], [0], [1], [0, 0, 1, 1], [], []>} : vector<2x32xbf16>, vector<32x128xbf16>, vector<2x128xf32> -> vector<2x128xf32>
      %210 = arith.addf %207, %209 : vector<2x128xf32>
      %211 = vector.extract_strided_slice %210 {offsets = [0, 0], sizes = [2, 32], strides = [1, 1]} : vector<2x128xf32> to vector<2x32xf32>
      %212 = arith.negf %211 : vector<2x32xf32>
      %213 = math.exp %212 : vector<2x32xf32>
      %cst_47 = arith.constant 1.000000e+00 : f32
      %214 = vector.broadcast %cst_47 : f32 to vector<2x32xf32>
      %215 = arith.addf %214, %213 : vector<2x32xf32>
      %216 = arith.divf %214, %215 : vector<2x32xf32>
      %217 = vector.extract_strided_slice %210 {offsets = [0, 32], sizes = [2, 32], strides = [1, 1]} : vector<2x128xf32> to vector<2x32xf32>
      %218 = arith.negf %217 : vector<2x32xf32>
      %219 = math.exp %218 : vector<2x32xf32>
      %cst_48 = arith.constant 1.000000e+00 : f32
      %220 = vector.broadcast %cst_48 : f32 to vector<2x32xf32>
      %221 = arith.addf %220, %219 : vector<2x32xf32>
      %222 = arith.divf %220, %221 : vector<2x32xf32>
      %223 = vector.extract_strided_slice %210 {offsets = [0, 64], sizes = [2, 32], strides = [1, 1]} : vector<2x128xf32> to vector<2x32xf32>
      %224 = math.tanh %223 : vector<2x32xf32>
      %225 = vector.extract_strided_slice %210 {offsets = [0, 96], sizes = [2, 32], strides = [1, 1]} : vector<2x128xf32> to vector<2x32xf32>
      %226 = arith.negf %225 : vector<2x32xf32>
      %227 = math.exp %226 : vector<2x32xf32>
      %cst_49 = arith.constant 1.000000e+00 : f32
      %228 = vector.broadcast %cst_49 : f32 to vector<2x32xf32>
      %229 = arith.addf %228, %227 : vector<2x32xf32>
      %230 = arith.divf %228, %229 : vector<2x32xf32>
      %231 = arith.mulf %222, %196 : vector<2x32xf32>
      %232 = arith.mulf %216, %224 : vector<2x32xf32>
      %233 = arith.addf %231, %232 : vector<2x32xf32>
      %234 = math.tanh %233 : vector<2x32xf32>
      %235 = arith.mulf %230, %234 : vector<2x32xf32>
      %236 = arith.addi %3, %c5_i32 : i32
      %237 = vector.broadcast %236 : i32 to vector<2x1xi32>
      %238 = arith.cmpi eq, %5, %237 : vector<2x1xi32>
      %239 = vector.shape_cast %238 : vector<2x1xi1> to vector<2x1xi1>
      %240 = vector.broadcast %239 : vector<2x1xi1> to vector<2x32xi1>
      %241 = arith.select %240, %235, %204 : vector<2x32xi1>, vector<2x32xf32>
      %c6_i32 = arith.constant 6 : i32
      %242 = arith.index_cast %c6_i32 : i32 to index
      %c0_50 = arith.constant 0 : index
      %c0_51 = arith.constant 0 : index
      %243 = vector.load %arg2[%242, %c0_50, %c0_51] : memref<8x2x128xf32, #tpu.memory_space<vmem>>, vector<1x2x128xf32>
      %244 = vector.shape_cast %243 : vector<1x2x128xf32> to vector<2x128xf32>
      %245 = arith.truncf %235 : vector<2x32xf32> to vector<2x32xbf16>
      %cst_52 = arith.constant dense<0.000000e+00> : vector<2x128xf32>
      %246 = tpu.matmul %245, %4, %cst_52 {dimension_numbers = #tpu.dot_dimension_numbers<[1], [0], [0], [1], [0, 0, 1, 1], [], []>} : vector<2x32xbf16>, vector<32x128xbf16>, vector<2x128xf32> -> vector<2x128xf32>
      %247 = arith.addf %244, %246 : vector<2x128xf32>
      %248 = vector.extract_strided_slice %247 {offsets = [0, 0], sizes = [2, 32], strides = [1, 1]} : vector<2x128xf32> to vector<2x32xf32>
      %249 = arith.negf %248 : vector<2x32xf32>
      %250 = math.exp %249 : vector<2x32xf32>
      %cst_53 = arith.constant 1.000000e+00 : f32
      %251 = vector.broadcast %cst_53 : f32 to vector<2x32xf32>
      %252 = arith.addf %251, %250 : vector<2x32xf32>
      %253 = arith.divf %251, %252 : vector<2x32xf32>
      %254 = vector.extract_strided_slice %247 {offsets = [0, 32], sizes = [2, 32], strides = [1, 1]} : vector<2x128xf32> to vector<2x32xf32>
      %255 = arith.negf %254 : vector<2x32xf32>
      %256 = math.exp %255 : vector<2x32xf32>
      %cst_54 = arith.constant 1.000000e+00 : f32
      %257 = vector.broadcast %cst_54 : f32 to vector<2x32xf32>
      %258 = arith.addf %257, %256 : vector<2x32xf32>
      %259 = arith.divf %257, %258 : vector<2x32xf32>
      %260 = vector.extract_strided_slice %247 {offsets = [0, 64], sizes = [2, 32], strides = [1, 1]} : vector<2x128xf32> to vector<2x32xf32>
      %261 = math.tanh %260 : vector<2x32xf32>
      %262 = vector.extract_strided_slice %247 {offsets = [0, 96], sizes = [2, 32], strides = [1, 1]} : vector<2x128xf32> to vector<2x32xf32>
      %263 = arith.negf %262 : vector<2x32xf32>
      %264 = math.exp %263 : vector<2x32xf32>
      %cst_55 = arith.constant 1.000000e+00 : f32
      %265 = vector.broadcast %cst_55 : f32 to vector<2x32xf32>
      %266 = arith.addf %265, %264 : vector<2x32xf32>
      %267 = arith.divf %265, %266 : vector<2x32xf32>
      %268 = arith.mulf %259, %233 : vector<2x32xf32>
      %269 = arith.mulf %253, %261 : vector<2x32xf32>
      %270 = arith.addf %268, %269 : vector<2x32xf32>
      %271 = math.tanh %270 : vector<2x32xf32>
      %272 = arith.mulf %267, %271 : vector<2x32xf32>
      %273 = arith.addi %3, %c6_i32 : i32
      %274 = vector.broadcast %273 : i32 to vector<2x1xi32>
      %275 = arith.cmpi eq, %5, %274 : vector<2x1xi32>
      %276 = vector.shape_cast %275 : vector<2x1xi1> to vector<2x1xi1>
      %277 = vector.broadcast %276 : vector<2x1xi1> to vector<2x32xi1>
      %278 = arith.select %277, %272, %241 : vector<2x32xi1>, vector<2x32xf32>
      %c7_i32 = arith.constant 7 : i32
      %279 = arith.index_cast %c7_i32 : i32 to index
      %c0_56 = arith.constant 0 : index
      %c0_57 = arith.constant 0 : index
      %280 = vector.load %arg2[%279, %c0_56, %c0_57] : memref<8x2x128xf32, #tpu.memory_space<vmem>>, vector<1x2x128xf32>
      %281 = vector.shape_cast %280 : vector<1x2x128xf32> to vector<2x128xf32>
      %282 = arith.truncf %272 : vector<2x32xf32> to vector<2x32xbf16>
      %cst_58 = arith.constant dense<0.000000e+00> : vector<2x128xf32>
      %283 = tpu.matmul %282, %4, %cst_58 {dimension_numbers = #tpu.dot_dimension_numbers<[1], [0], [0], [1], [0, 0, 1, 1], [], []>} : vector<2x32xbf16>, vector<32x128xbf16>, vector<2x128xf32> -> vector<2x128xf32>
      %284 = arith.addf %281, %283 : vector<2x128xf32>
      %285 = vector.extract_strided_slice %284 {offsets = [0, 0], sizes = [2, 32], strides = [1, 1]} : vector<2x128xf32> to vector<2x32xf32>
      %286 = arith.negf %285 : vector<2x32xf32>
      %287 = math.exp %286 : vector<2x32xf32>
      %cst_59 = arith.constant 1.000000e+00 : f32
      %288 = vector.broadcast %cst_59 : f32 to vector<2x32xf32>
      %289 = arith.addf %288, %287 : vector<2x32xf32>
      %290 = arith.divf %288, %289 : vector<2x32xf32>
      %291 = vector.extract_strided_slice %284 {offsets = [0, 32], sizes = [2, 32], strides = [1, 1]} : vector<2x128xf32> to vector<2x32xf32>
      %292 = arith.negf %291 : vector<2x32xf32>
      %293 = math.exp %292 : vector<2x32xf32>
      %cst_60 = arith.constant 1.000000e+00 : f32
      %294 = vector.broadcast %cst_60 : f32 to vector<2x32xf32>
      %295 = arith.addf %294, %293 : vector<2x32xf32>
      %296 = arith.divf %294, %295 : vector<2x32xf32>
      %297 = vector.extract_strided_slice %284 {offsets = [0, 64], sizes = [2, 32], strides = [1, 1]} : vector<2x128xf32> to vector<2x32xf32>
      %298 = math.tanh %297 : vector<2x32xf32>
      %299 = vector.extract_strided_slice %284 {offsets = [0, 96], sizes = [2, 32], strides = [1, 1]} : vector<2x128xf32> to vector<2x32xf32>
      %300 = arith.negf %299 : vector<2x32xf32>
      %301 = math.exp %300 : vector<2x32xf32>
      %cst_61 = arith.constant 1.000000e+00 : f32
      %302 = vector.broadcast %cst_61 : f32 to vector<2x32xf32>
      %303 = arith.addf %302, %301 : vector<2x32xf32>
      %304 = arith.divf %302, %303 : vector<2x32xf32>
      %305 = arith.mulf %296, %270 : vector<2x32xf32>
      %306 = arith.mulf %290, %298 : vector<2x32xf32>
      %307 = arith.addf %305, %306 : vector<2x32xf32>
      %308 = math.tanh %307 : vector<2x32xf32>
      %309 = arith.mulf %304, %308 : vector<2x32xf32>
      %310 = arith.addi %3, %c7_i32 : i32
      %311 = vector.broadcast %310 : i32 to vector<2x1xi32>
      %312 = arith.cmpi eq, %5, %311 : vector<2x1xi32>
      %313 = vector.shape_cast %312 : vector<2x1xi1> to vector<2x1xi1>
      %314 = vector.broadcast %313 : vector<2x1xi1> to vector<2x32xi1>
      %315 = arith.select %314, %309, %278 : vector<2x32xi1>, vector<2x32xf32>
      %c8_i32_62 = arith.constant 8 : i32
      %c0_63 = arith.constant 0 : index
      %c0_64 = arith.constant 0 : index
      %316 = vector.load %arg8[%c0_63, %c0_64] : memref<2x32xf32, #tpu.memory_space<vmem>>, vector<2x32xf32>
      tpu.vector_store %arg8[%c0_63, %c0_64], %309 {strides = array<i32>} : memref<2x32xf32, #tpu.memory_space<vmem>>, vector<2x32xf32>,
      %c0_65 = arith.constant 0 : index
      %c0_66 = arith.constant 0 : index
      %317 = vector.load %arg9[%c0_65, %c0_66] : memref<2x32xf32, #tpu.memory_space<vmem>>, vector<2x32xf32>
      tpu.vector_store %arg9[%c0_65, %c0_66], %307 {strides = array<i32>} : memref<2x32xf32, #tpu.memory_space<vmem>>, vector<2x32xf32>,
      %c0_67 = arith.constant 0 : index
      %c0_68 = arith.constant 0 : index
      %318 = vector.load %arg7[%c0_67, %c0_68] : memref<2x32xf32, #tpu.memory_space<vmem>>, vector<2x32xf32>
      tpu.vector_store %arg7[%c0_67, %c0_68], %315 {strides = array<i32>} : memref<2x32xf32, #tpu.memory_space<vmem>>, vector<2x32xf32>,
    } else {
    }
    %true = arith.constant true
    %14 = arith.xori %11, %true : i1
    %15 = arith.extui %14 : i1 to i32
    %c0_i32_7 = arith.constant 0 : i32
    %16 = arith.cmpi ne, %15, %c0_i32_7 : i32
    scf.if %16 {
      %c0_8 = arith.constant 0 : index
      %c0_9 = arith.constant 0 : index
      %17 = vector.load %arg8[%c0_8, %c0_9] : memref<2x32xf32, #tpu.memory_space<vmem>>, vector<2x32xf32>
      %c0_10 = arith.constant 0 : index
      %c0_11 = arith.constant 0 : index
      %18 = vector.load %arg9[%c0_10, %c0_11] : memref<2x32xf32, #tpu.memory_space<vmem>>, vector<2x32xf32>
      %c0_i32_12 = arith.constant 0 : i32
      %19 = arith.index_cast %c0_i32_12 : i32 to index
      %c0_13 = arith.constant 0 : index
      %c0_14 = arith.constant 0 : index
      %20 = vector.load %arg2[%19, %c0_13, %c0_14] : memref<8x2x128xf32, #tpu.memory_space<vmem>>, vector<1x2x128xf32>
      %21 = vector.shape_cast %20 : vector<1x2x128xf32> to vector<2x128xf32>
      %22 = arith.truncf %17 : vector<2x32xf32> to vector<2x32xbf16>
      %cst = arith.constant dense<0.000000e+00> : vector<2x128xf32>
      %23 = tpu.matmul %22, %4, %cst {dimension_numbers = #tpu.dot_dimension_numbers<[1], [0], [0], [1], [0, 0, 1, 1], [], []>} : vector<2x32xbf16>, vector<32x128xbf16>, vector<2x128xf32> -> vector<2x128xf32>
      %24 = arith.addf %21, %23 : vector<2x128xf32>
      %25 = vector.extract_strided_slice %24 {offsets = [0, 0], sizes = [2, 32], strides = [1, 1]} : vector<2x128xf32> to vector<2x32xf32>
      %26 = arith.negf %25 : vector<2x32xf32>
      %27 = math.exp %26 : vector<2x32xf32>
      %cst_15 = arith.constant 1.000000e+00 : f32
      %28 = vector.broadcast %cst_15 : f32 to vector<2x32xf32>
      %29 = arith.addf %28, %27 : vector<2x32xf32>
      %30 = arith.divf %28, %29 : vector<2x32xf32>
      %31 = vector.extract_strided_slice %24 {offsets = [0, 32], sizes = [2, 32], strides = [1, 1]} : vector<2x128xf32> to vector<2x32xf32>
      %32 = arith.negf %31 : vector<2x32xf32>
      %33 = math.exp %32 : vector<2x32xf32>
      %cst_16 = arith.constant 1.000000e+00 : f32
      %34 = vector.broadcast %cst_16 : f32 to vector<2x32xf32>
      %35 = arith.addf %34, %33 : vector<2x32xf32>
      %36 = arith.divf %34, %35 : vector<2x32xf32>
      %37 = vector.extract_strided_slice %24 {offsets = [0, 64], sizes = [2, 32], strides = [1, 1]} : vector<2x128xf32> to vector<2x32xf32>
      %38 = math.tanh %37 : vector<2x32xf32>
      %39 = vector.extract_strided_slice %24 {offsets = [0, 96], sizes = [2, 32], strides = [1, 1]} : vector<2x128xf32> to vector<2x32xf32>
      %40 = arith.negf %39 : vector<2x32xf32>
      %41 = math.exp %40 : vector<2x32xf32>
      %cst_17 = arith.constant 1.000000e+00 : f32
      %42 = vector.broadcast %cst_17 : f32 to vector<2x32xf32>
      %43 = arith.addf %42, %41 : vector<2x32xf32>
      %44 = arith.divf %42, %43 : vector<2x32xf32>
      %45 = arith.mulf %36, %18 : vector<2x32xf32>
      %46 = arith.mulf %30, %38 : vector<2x32xf32>
      %47 = arith.addf %45, %46 : vector<2x32xf32>
      %48 = math.tanh %47 : vector<2x32xf32>
      %49 = arith.mulf %44, %48 : vector<2x32xf32>
      %c1_i32 = arith.constant 1 : i32
      %50 = arith.index_cast %c1_i32 : i32 to index
      %c0_18 = arith.constant 0 : index
      %c0_19 = arith.constant 0 : index
      %51 = vector.load %arg2[%50, %c0_18, %c0_19] : memref<8x2x128xf32, #tpu.memory_space<vmem>>, vector<1x2x128xf32>
      %52 = vector.shape_cast %51 : vector<1x2x128xf32> to vector<2x128xf32>
      %53 = arith.truncf %49 : vector<2x32xf32> to vector<2x32xbf16>
      %cst_20 = arith.constant dense<0.000000e+00> : vector<2x128xf32>
      %54 = tpu.matmul %53, %4, %cst_20 {dimension_numbers = #tpu.dot_dimension_numbers<[1], [0], [0], [1], [0, 0, 1, 1], [], []>} : vector<2x32xbf16>, vector<32x128xbf16>, vector<2x128xf32> -> vector<2x128xf32>
      %55 = arith.addf %52, %54 : vector<2x128xf32>
      %56 = vector.extract_strided_slice %55 {offsets = [0, 0], sizes = [2, 32], strides = [1, 1]} : vector<2x128xf32> to vector<2x32xf32>
      %57 = arith.negf %56 : vector<2x32xf32>
      %58 = math.exp %57 : vector<2x32xf32>
      %cst_21 = arith.constant 1.000000e+00 : f32
      %59 = vector.broadcast %cst_21 : f32 to vector<2x32xf32>
      %60 = arith.addf %59, %58 : vector<2x32xf32>
      %61 = arith.divf %59, %60 : vector<2x32xf32>
      %62 = vector.extract_strided_slice %55 {offsets = [0, 32], sizes = [2, 32], strides = [1, 1]} : vector<2x128xf32> to vector<2x32xf32>
      %63 = arith.negf %62 : vector<2x32xf32>
      %64 = math.exp %63 : vector<2x32xf32>
      %cst_22 = arith.constant 1.000000e+00 : f32
      %65 = vector.broadcast %cst_22 : f32 to vector<2x32xf32>
      %66 = arith.addf %65, %64 : vector<2x32xf32>
      %67 = arith.divf %65, %66 : vector<2x32xf32>
      %68 = vector.extract_strided_slice %55 {offsets = [0, 64], sizes = [2, 32], strides = [1, 1]} : vector<2x128xf32> to vector<2x32xf32>
      %69 = math.tanh %68 : vector<2x32xf32>
      %70 = vector.extract_strided_slice %55 {offsets = [0, 96], sizes = [2, 32], strides = [1, 1]} : vector<2x128xf32> to vector<2x32xf32>
      %71 = arith.negf %70 : vector<2x32xf32>
      %72 = math.exp %71 : vector<2x32xf32>
      %cst_23 = arith.constant 1.000000e+00 : f32
      %73 = vector.broadcast %cst_23 : f32 to vector<2x32xf32>
      %74 = arith.addf %73, %72 : vector<2x32xf32>
      %75 = arith.divf %73, %74 : vector<2x32xf32>
      %76 = arith.mulf %67, %47 : vector<2x32xf32>
      %77 = arith.mulf %61, %69 : vector<2x32xf32>
      %78 = arith.addf %76, %77 : vector<2x32xf32>
      %79 = math.tanh %78 : vector<2x32xf32>
      %80 = arith.mulf %75, %79 : vector<2x32xf32>
      %c2_i32 = arith.constant 2 : i32
      %81 = arith.index_cast %c2_i32 : i32 to index
      %c0_24 = arith.constant 0 : index
      %c0_25 = arith.constant 0 : index
      %82 = vector.load %arg2[%81, %c0_24, %c0_25] : memref<8x2x128xf32, #tpu.memory_space<vmem>>, vector<1x2x128xf32>
      %83 = vector.shape_cast %82 : vector<1x2x128xf32> to vector<2x128xf32>
      %84 = arith.truncf %80 : vector<2x32xf32> to vector<2x32xbf16>
      %cst_26 = arith.constant dense<0.000000e+00> : vector<2x128xf32>
      %85 = tpu.matmul %84, %4, %cst_26 {dimension_numbers = #tpu.dot_dimension_numbers<[1], [0], [0], [1], [0, 0, 1, 1], [], []>} : vector<2x32xbf16>, vector<32x128xbf16>, vector<2x128xf32> -> vector<2x128xf32>
      %86 = arith.addf %83, %85 : vector<2x128xf32>
      %87 = vector.extract_strided_slice %86 {offsets = [0, 0], sizes = [2, 32], strides = [1, 1]} : vector<2x128xf32> to vector<2x32xf32>
      %88 = arith.negf %87 : vector<2x32xf32>
      %89 = math.exp %88 : vector<2x32xf32>
      %cst_27 = arith.constant 1.000000e+00 : f32
      %90 = vector.broadcast %cst_27 : f32 to vector<2x32xf32>
      %91 = arith.addf %90, %89 : vector<2x32xf32>
      %92 = arith.divf %90, %91 : vector<2x32xf32>
      %93 = vector.extract_strided_slice %86 {offsets = [0, 32], sizes = [2, 32], strides = [1, 1]} : vector<2x128xf32> to vector<2x32xf32>
      %94 = arith.negf %93 : vector<2x32xf32>
      %95 = math.exp %94 : vector<2x32xf32>
      %cst_28 = arith.constant 1.000000e+00 : f32
      %96 = vector.broadcast %cst_28 : f32 to vector<2x32xf32>
      %97 = arith.addf %96, %95 : vector<2x32xf32>
      %98 = arith.divf %96, %97 : vector<2x32xf32>
      %99 = vector.extract_strided_slice %86 {offsets = [0, 64], sizes = [2, 32], strides = [1, 1]} : vector<2x128xf32> to vector<2x32xf32>
      %100 = math.tanh %99 : vector<2x32xf32>
      %101 = vector.extract_strided_slice %86 {offsets = [0, 96], sizes = [2, 32], strides = [1, 1]} : vector<2x128xf32> to vector<2x32xf32>
      %102 = arith.negf %101 : vector<2x32xf32>
      %103 = math.exp %102 : vector<2x32xf32>
      %cst_29 = arith.constant 1.000000e+00 : f32
      %104 = vector.broadcast %cst_29 : f32 to vector<2x32xf32>
      %105 = arith.addf %104, %103 : vector<2x32xf32>
      %106 = arith.divf %104, %105 : vector<2x32xf32>
      %107 = arith.mulf %98, %78 : vector<2x32xf32>
      %108 = arith.mulf %92, %100 : vector<2x32xf32>
      %109 = arith.addf %107, %108 : vector<2x32xf32>
      %110 = math.tanh %109 : vector<2x32xf32>
      %111 = arith.mulf %106, %110 : vector<2x32xf32>
      %c3_i32 = arith.constant 3 : i32
      %112 = arith.index_cast %c3_i32 : i32 to index
      %c0_30 = arith.constant 0 : index
      %c0_31 = arith.constant 0 : index
      %113 = vector.load %arg2[%112, %c0_30, %c0_31] : memref<8x2x128xf32, #tpu.memory_space<vmem>>, vector<1x2x128xf32>
      %114 = vector.shape_cast %113 : vector<1x2x128xf32> to vector<2x128xf32>
      %115 = arith.truncf %111 : vector<2x32xf32> to vector<2x32xbf16>
      %cst_32 = arith.constant dense<0.000000e+00> : vector<2x128xf32>
      %116 = tpu.matmul %115, %4, %cst_32 {dimension_numbers = #tpu.dot_dimension_numbers<[1], [0], [0], [1], [0, 0, 1, 1], [], []>} : vector<2x32xbf16>, vector<32x128xbf16>, vector<2x128xf32> -> vector<2x128xf32>
      %117 = arith.addf %114, %116 : vector<2x128xf32>
      %118 = vector.extract_strided_slice %117 {offsets = [0, 0], sizes = [2, 32], strides = [1, 1]} : vector<2x128xf32> to vector<2x32xf32>
      %119 = arith.negf %118 : vector<2x32xf32>
      %120 = math.exp %119 : vector<2x32xf32>
      %cst_33 = arith.constant 1.000000e+00 : f32
      %121 = vector.broadcast %cst_33 : f32 to vector<2x32xf32>
      %122 = arith.addf %121, %120 : vector<2x32xf32>
      %123 = arith.divf %121, %122 : vector<2x32xf32>
      %124 = vector.extract_strided_slice %117 {offsets = [0, 32], sizes = [2, 32], strides = [1, 1]} : vector<2x128xf32> to vector<2x32xf32>
      %125 = arith.negf %124 : vector<2x32xf32>
      %126 = math.exp %125 : vector<2x32xf32>
      %cst_34 = arith.constant 1.000000e+00 : f32
      %127 = vector.broadcast %cst_34 : f32 to vector<2x32xf32>
      %128 = arith.addf %127, %126 : vector<2x32xf32>
      %129 = arith.divf %127, %128 : vector<2x32xf32>
      %130 = vector.extract_strided_slice %117 {offsets = [0, 64], sizes = [2, 32], strides = [1, 1]} : vector<2x128xf32> to vector<2x32xf32>
      %131 = math.tanh %130 : vector<2x32xf32>
      %132 = vector.extract_strided_slice %117 {offsets = [0, 96], sizes = [2, 32], strides = [1, 1]} : vector<2x128xf32> to vector<2x32xf32>
      %133 = arith.negf %132 : vector<2x32xf32>
      %134 = math.exp %133 : vector<2x32xf32>
      %cst_35 = arith.constant 1.000000e+00 : f32
      %135 = vector.broadcast %cst_35 : f32 to vector<2x32xf32>
      %136 = arith.addf %135, %134 : vector<2x32xf32>
      %137 = arith.divf %135, %136 : vector<2x32xf32>
      %138 = arith.mulf %129, %109 : vector<2x32xf32>
      %139 = arith.mulf %123, %131 : vector<2x32xf32>
      %140 = arith.addf %138, %139 : vector<2x32xf32>
      %141 = math.tanh %140 : vector<2x32xf32>
      %142 = arith.mulf %137, %141 : vector<2x32xf32>
      %c4_i32 = arith.constant 4 : i32
      %143 = arith.index_cast %c4_i32 : i32 to index
      %c0_36 = arith.constant 0 : index
      %c0_37 = arith.constant 0 : index
      %144 = vector.load %arg2[%143, %c0_36, %c0_37] : memref<8x2x128xf32, #tpu.memory_space<vmem>>, vector<1x2x128xf32>
      %145 = vector.shape_cast %144 : vector<1x2x128xf32> to vector<2x128xf32>
      %146 = arith.truncf %142 : vector<2x32xf32> to vector<2x32xbf16>
      %cst_38 = arith.constant dense<0.000000e+00> : vector<2x128xf32>
      %147 = tpu.matmul %146, %4, %cst_38 {dimension_numbers = #tpu.dot_dimension_numbers<[1], [0], [0], [1], [0, 0, 1, 1], [], []>} : vector<2x32xbf16>, vector<32x128xbf16>, vector<2x128xf32> -> vector<2x128xf32>
      %148 = arith.addf %145, %147 : vector<2x128xf32>
      %149 = vector.extract_strided_slice %148 {offsets = [0, 0], sizes = [2, 32], strides = [1, 1]} : vector<2x128xf32> to vector<2x32xf32>
      %150 = arith.negf %149 : vector<2x32xf32>
      %151 = math.exp %150 : vector<2x32xf32>
      %cst_39 = arith.constant 1.000000e+00 : f32
      %152 = vector.broadcast %cst_39 : f32 to vector<2x32xf32>
      %153 = arith.addf %152, %151 : vector<2x32xf32>
      %154 = arith.divf %152, %153 : vector<2x32xf32>
      %155 = vector.extract_strided_slice %148 {offsets = [0, 32], sizes = [2, 32], strides = [1, 1]} : vector<2x128xf32> to vector<2x32xf32>
      %156 = arith.negf %155 : vector<2x32xf32>
      %157 = math.exp %156 : vector<2x32xf32>
      %cst_40 = arith.constant 1.000000e+00 : f32
      %158 = vector.broadcast %cst_40 : f32 to vector<2x32xf32>
      %159 = arith.addf %158, %157 : vector<2x32xf32>
      %160 = arith.divf %158, %159 : vector<2x32xf32>
      %161 = vector.extract_strided_slice %148 {offsets = [0, 64], sizes = [2, 32], strides = [1, 1]} : vector<2x128xf32> to vector<2x32xf32>
      %162 = math.tanh %161 : vector<2x32xf32>
      %163 = vector.extract_strided_slice %148 {offsets = [0, 96], sizes = [2, 32], strides = [1, 1]} : vector<2x128xf32> to vector<2x32xf32>
      %164 = arith.negf %163 : vector<2x32xf32>
      %165 = math.exp %164 : vector<2x32xf32>
      %cst_41 = arith.constant 1.000000e+00 : f32
      %166 = vector.broadcast %cst_41 : f32 to vector<2x32xf32>
      %167 = arith.addf %166, %165 : vector<2x32xf32>
      %168 = arith.divf %166, %167 : vector<2x32xf32>
      %169 = arith.mulf %160, %140 : vector<2x32xf32>
      %170 = arith.mulf %154, %162 : vector<2x32xf32>
      %171 = arith.addf %169, %170 : vector<2x32xf32>
      %172 = math.tanh %171 : vector<2x32xf32>
      %173 = arith.mulf %168, %172 : vector<2x32xf32>
      %c5_i32 = arith.constant 5 : i32
      %174 = arith.index_cast %c5_i32 : i32 to index
      %c0_42 = arith.constant 0 : index
      %c0_43 = arith.constant 0 : index
      %175 = vector.load %arg2[%174, %c0_42, %c0_43] : memref<8x2x128xf32, #tpu.memory_space<vmem>>, vector<1x2x128xf32>
      %176 = vector.shape_cast %175 : vector<1x2x128xf32> to vector<2x128xf32>
      %177 = arith.truncf %173 : vector<2x32xf32> to vector<2x32xbf16>
      %cst_44 = arith.constant dense<0.000000e+00> : vector<2x128xf32>
      %178 = tpu.matmul %177, %4, %cst_44 {dimension_numbers = #tpu.dot_dimension_numbers<[1], [0], [0], [1], [0, 0, 1, 1], [], []>} : vector<2x32xbf16>, vector<32x128xbf16>, vector<2x128xf32> -> vector<2x128xf32>
      %179 = arith.addf %176, %178 : vector<2x128xf32>
      %180 = vector.extract_strided_slice %179 {offsets = [0, 0], sizes = [2, 32], strides = [1, 1]} : vector<2x128xf32> to vector<2x32xf32>
      %181 = arith.negf %180 : vector<2x32xf32>
      %182 = math.exp %181 : vector<2x32xf32>
      %cst_45 = arith.constant 1.000000e+00 : f32
      %183 = vector.broadcast %cst_45 : f32 to vector<2x32xf32>
      %184 = arith.addf %183, %182 : vector<2x32xf32>
      %185 = arith.divf %183, %184 : vector<2x32xf32>
      %186 = vector.extract_strided_slice %179 {offsets = [0, 32], sizes = [2, 32], strides = [1, 1]} : vector<2x128xf32> to vector<2x32xf32>
      %187 = arith.negf %186 : vector<2x32xf32>
      %188 = math.exp %187 : vector<2x32xf32>
      %cst_46 = arith.constant 1.000000e+00 : f32
      %189 = vector.broadcast %cst_46 : f32 to vector<2x32xf32>
      %190 = arith.addf %189, %188 : vector<2x32xf32>
      %191 = arith.divf %189, %190 : vector<2x32xf32>
      %192 = vector.extract_strided_slice %179 {offsets = [0, 64], sizes = [2, 32], strides = [1, 1]} : vector<2x128xf32> to vector<2x32xf32>
      %193 = math.tanh %192 : vector<2x32xf32>
      %194 = vector.extract_strided_slice %179 {offsets = [0, 96], sizes = [2, 32], strides = [1, 1]} : vector<2x128xf32> to vector<2x32xf32>
      %195 = arith.negf %194 : vector<2x32xf32>
      %196 = math.exp %195 : vector<2x32xf32>
      %cst_47 = arith.constant 1.000000e+00 : f32
      %197 = vector.broadcast %cst_47 : f32 to vector<2x32xf32>
      %198 = arith.addf %197, %196 : vector<2x32xf32>
      %199 = arith.divf %197, %198 : vector<2x32xf32>
      %200 = arith.mulf %191, %171 : vector<2x32xf32>
      %201 = arith.mulf %185, %193 : vector<2x32xf32>
      %202 = arith.addf %200, %201 : vector<2x32xf32>
      %203 = math.tanh %202 : vector<2x32xf32>
      %204 = arith.mulf %199, %203 : vector<2x32xf32>
      %c6_i32 = arith.constant 6 : i32
      %205 = arith.index_cast %c6_i32 : i32 to index
      %c0_48 = arith.constant 0 : index
      %c0_49 = arith.constant 0 : index
      %206 = vector.load %arg2[%205, %c0_48, %c0_49] : memref<8x2x128xf32, #tpu.memory_space<vmem>>, vector<1x2x128xf32>
      %207 = vector.shape_cast %206 : vector<1x2x128xf32> to vector<2x128xf32>
      %208 = arith.truncf %204 : vector<2x32xf32> to vector<2x32xbf16>
      %cst_50 = arith.constant dense<0.000000e+00> : vector<2x128xf32>
      %209 = tpu.matmul %208, %4, %cst_50 {dimension_numbers = #tpu.dot_dimension_numbers<[1], [0], [0], [1], [0, 0, 1, 1], [], []>} : vector<2x32xbf16>, vector<32x128xbf16>, vector<2x128xf32> -> vector<2x128xf32>
      %210 = arith.addf %207, %209 : vector<2x128xf32>
      %211 = vector.extract_strided_slice %210 {offsets = [0, 0], sizes = [2, 32], strides = [1, 1]} : vector<2x128xf32> to vector<2x32xf32>
      %212 = arith.negf %211 : vector<2x32xf32>
      %213 = math.exp %212 : vector<2x32xf32>
      %cst_51 = arith.constant 1.000000e+00 : f32
      %214 = vector.broadcast %cst_51 : f32 to vector<2x32xf32>
      %215 = arith.addf %214, %213 : vector<2x32xf32>
      %216 = arith.divf %214, %215 : vector<2x32xf32>
      %217 = vector.extract_strided_slice %210 {offsets = [0, 32], sizes = [2, 32], strides = [1, 1]} : vector<2x128xf32> to vector<2x32xf32>
      %218 = arith.negf %217 : vector<2x32xf32>
      %219 = math.exp %218 : vector<2x32xf32>
      %cst_52 = arith.constant 1.000000e+00 : f32
      %220 = vector.broadcast %cst_52 : f32 to vector<2x32xf32>
      %221 = arith.addf %220, %219 : vector<2x32xf32>
      %222 = arith.divf %220, %221 : vector<2x32xf32>
      %223 = vector.extract_strided_slice %210 {offsets = [0, 64], sizes = [2, 32], strides = [1, 1]} : vector<2x128xf32> to vector<2x32xf32>
      %224 = math.tanh %223 : vector<2x32xf32>
      %225 = vector.extract_strided_slice %210 {offsets = [0, 96], sizes = [2, 32], strides = [1, 1]} : vector<2x128xf32> to vector<2x32xf32>
      %226 = arith.negf %225 : vector<2x32xf32>
      %227 = math.exp %226 : vector<2x32xf32>
      %cst_53 = arith.constant 1.000000e+00 : f32
      %228 = vector.broadcast %cst_53 : f32 to vector<2x32xf32>
      %229 = arith.addf %228, %227 : vector<2x32xf32>
      %230 = arith.divf %228, %229 : vector<2x32xf32>
      %231 = arith.mulf %222, %202 : vector<2x32xf32>
      %232 = arith.mulf %216, %224 : vector<2x32xf32>
      %233 = arith.addf %231, %232 : vector<2x32xf32>
      %234 = math.tanh %233 : vector<2x32xf32>
      %235 = arith.mulf %230, %234 : vector<2x32xf32>
      %c7_i32 = arith.constant 7 : i32
      %236 = arith.index_cast %c7_i32 : i32 to index
      %c0_54 = arith.constant 0 : index
      %c0_55 = arith.constant 0 : index
      %237 = vector.load %arg2[%236, %c0_54, %c0_55] : memref<8x2x128xf32, #tpu.memory_space<vmem>>, vector<1x2x128xf32>
      %238 = vector.shape_cast %237 : vector<1x2x128xf32> to vector<2x128xf32>
      %239 = arith.truncf %235 : vector<2x32xf32> to vector<2x32xbf16>
      %cst_56 = arith.constant dense<0.000000e+00> : vector<2x128xf32>
      %240 = tpu.matmul %239, %4, %cst_56 {dimension_numbers = #tpu.dot_dimension_numbers<[1], [0], [0], [1], [0, 0, 1, 1], [], []>} : vector<2x32xbf16>, vector<32x128xbf16>, vector<2x128xf32> -> vector<2x128xf32>
      %241 = arith.addf %238, %240 : vector<2x128xf32>
      %242 = vector.extract_strided_slice %241 {offsets = [0, 0], sizes = [2, 32], strides = [1, 1]} : vector<2x128xf32> to vector<2x32xf32>
      %243 = arith.negf %242 : vector<2x32xf32>
      %244 = math.exp %243 : vector<2x32xf32>
      %cst_57 = arith.constant 1.000000e+00 : f32
      %245 = vector.broadcast %cst_57 : f32 to vector<2x32xf32>
      %246 = arith.addf %245, %244 : vector<2x32xf32>
      %247 = arith.divf %245, %246 : vector<2x32xf32>
      %248 = vector.extract_strided_slice %241 {offsets = [0, 32], sizes = [2, 32], strides = [1, 1]} : vector<2x128xf32> to vector<2x32xf32>
      %249 = arith.negf %248 : vector<2x32xf32>
      %250 = math.exp %249 : vector<2x32xf32>
      %cst_58 = arith.constant 1.000000e+00 : f32
      %251 = vector.broadcast %cst_58 : f32 to vector<2x32xf32>
      %252 = arith.addf %251, %250 : vector<2x32xf32>
      %253 = arith.divf %251, %252 : vector<2x32xf32>
      %254 = vector.extract_strided_slice %241 {offsets = [0, 64], sizes = [2, 32], strides = [1, 1]} : vector<2x128xf32> to vector<2x32xf32>
      %255 = math.tanh %254 : vector<2x32xf32>
      %256 = vector.extract_strided_slice %241 {offsets = [0, 96], sizes = [2, 32], strides = [1, 1]} : vector<2x128xf32> to vector<2x32xf32>
      %257 = arith.negf %256 : vector<2x32xf32>
      %258 = math.exp %257 : vector<2x32xf32>
      %cst_59 = arith.constant 1.000000e+00 : f32
      %259 = vector.broadcast %cst_59 : f32 to vector<2x32xf32>
      %260 = arith.addf %259, %258 : vector<2x32xf32>
      %261 = arith.divf %259, %260 : vector<2x32xf32>
      %262 = arith.mulf %253, %233 : vector<2x32xf32>
      %263 = arith.mulf %247, %255 : vector<2x32xf32>
      %264 = arith.addf %262, %263 : vector<2x32xf32>
      %265 = math.tanh %264 : vector<2x32xf32>
      %266 = arith.mulf %261, %265 : vector<2x32xf32>
      %c8_i32_60 = arith.constant 8 : i32
      %c0_61 = arith.constant 0 : index
      %c0_62 = arith.constant 0 : index
      %267 = vector.load %arg8[%c0_61, %c0_62] : memref<2x32xf32, #tpu.memory_space<vmem>>, vector<2x32xf32>
      tpu.vector_store %arg8[%c0_61, %c0_62], %266 {strides = array<i32>} : memref<2x32xf32, #tpu.memory_space<vmem>>, vector<2x32xf32>,
      %c0_63 = arith.constant 0 : index
      %c0_64 = arith.constant 0 : index
      %268 = vector.load %arg9[%c0_63, %c0_64] : memref<2x32xf32, #tpu.memory_space<vmem>>, vector<2x32xf32>
      tpu.vector_store %arg9[%c0_63, %c0_64], %264 {strides = array<i32>} : memref<2x32xf32, #tpu.memory_space<vmem>>, vector<2x32xf32>,
    } else {
    }
    return
  }
  func.func @transform_0(%arg0: i32, %arg1: memref<2xi32, #tpu.memory_space<smem>>) -> (i32, i32, i32) {
    %c0_i32 = arith.constant 0 : i32
    %c0_i32_0 = arith.constant 0 : i32
    %c0_i32_1 = arith.constant 0 : i32
    return %arg0, %c0_i32, %c0_i32_0 : i32, i32, i32
  }
  func.func @transform_1(%arg0: i32, %arg1: memref<2xi32, #tpu.memory_space<smem>>) -> (i32, i32) {
    %c0_i32 = arith.constant 0 : i32
    %c0_i32_0 = arith.constant 0 : i32
    %c0_i32_1 = arith.constant 0 : i32
    return %c0_i32, %c0_i32_0 : i32, i32
  }
  func.func @transform_2(%arg0: i32, %arg1: memref<2xi32, #tpu.memory_space<smem>>) -> (i32, i32) {
    %c0_i32 = arith.constant 0 : i32
    %c0_i32_0 = arith.constant 0 : i32
    %c0_i32_1 = arith.constant 0 : i32
    return %c0_i32, %c0_i32_0 : i32, i32
  }
  func.func @transform_3(%arg0: i32, %arg1: memref<2xi32, #tpu.memory_space<smem>>) -> (i32, i32) {
    %c0_i32 = arith.constant 0 : i32
    %c0_i32_0 = arith.constant 0 : i32
    %c0_i32_1 = arith.constant 0 : i32
    return %c0_i32, %c0_i32_0 : i32, i32
  }
  func.func @transform_4(%arg0: i32, %arg1: memref<2xi32, #tpu.memory_space<smem>>) -> (i32, i32) {
    %c0_i32 = arith.constant 0 : i32
    %c0_i32_0 = arith.constant 0 : i32
    %c0_i32_1 = arith.constant 0 : i32
    return %c0_i32, %c0_i32_0 : i32, i32
  }
  func.func @transform_5(%arg0: i32, %arg1: memref<2xi32, #tpu.memory_space<smem>>) -> (i32, i32) {
    %c0_i32 = arith.constant 0 : i32
    %c0_i32_0 = arith.constant 0 : i32
    %c0_i32_1 = arith.constant 0 : i32
    return %c0_i32, %c0_i32_0 : i32, i32
  }
}

module attributes {stable_mosaic.version = 11 : i64} {
  func.func @_lstm_seq_kernel(%arg0: i32, %arg1: memref<10x2x128xf32, #tpu.memory_space<vmem>>, %arg2: memref<32x128xbf16, #tpu.memory_space<vmem>>, %arg3: memref<2x32xf32, #tpu.memory_space<vmem>>, %arg4: memref<2x32xf32, #tpu.memory_space<vmem>>, %arg5: memref<10x2x32xf32, #tpu.memory_space<vmem>>, %arg6: memref<2x32xf32, #tpu.memory_space<vmem>>, %arg7: memref<2x32xf32, #tpu.memory_space<vmem>>) attributes {dimension_semantics = [#tpu.dimension_semantics<arbitrary>], iteration_bounds = array<i64: 1>, scalar_prefetch = 0 : i64, scratch_operands = 2 : i64, tpu.core_type = #tpu.core_type<tc>, window_params = [{transform_indices = @transform_0, window_bounds = array<i64: 10, 2, 128>}, {pipeline_mode = #tpu.pipeline_mode<synchronous>, transform_indices = @transform_1, window_bounds = array<i64: 32, 128>}, {pipeline_mode = #tpu.pipeline_mode<synchronous>, transform_indices = @transform_2, window_bounds = array<i64: 2, 32>}, {pipeline_mode = #tpu.pipeline_mode<synchronous>, transform_indices = @transform_3, window_bounds = array<i64: 2, 32>}, {transform_indices = @transform_4, window_bounds = array<i64: 10, 2, 32>}]} {
    %c0_i32 = arith.constant 0 : i32
    %0 = arith.cmpi eq, %arg0, %c0_i32 : i32
    %1 = arith.extui %0 : i1 to i32
    %c0_i32_0 = arith.constant 0 : i32
    %2 = arith.cmpi ne, %1, %c0_i32_0 : i32
    scf.if %2 {
      %c0_90 = arith.constant 0 : index
      %c0_91 = arith.constant 0 : index
      %358 = vector.load %arg3[%c0_90, %c0_91] : memref<2x32xf32, #tpu.memory_space<vmem>>, vector<2x32xf32>
      %c0_92 = arith.constant 0 : index
      %c0_93 = arith.constant 0 : index
      %359 = vector.load %arg6[%c0_92, %c0_93] : memref<2x32xf32, #tpu.memory_space<vmem>>, vector<2x32xf32>
      tpu.vector_store %arg6[%c0_92, %c0_93], %358 {strides = array<i32>} : memref<2x32xf32, #tpu.memory_space<vmem>>, vector<2x32xf32>,
      %c0_94 = arith.constant 0 : index
      %c0_95 = arith.constant 0 : index
      %360 = vector.load %arg4[%c0_94, %c0_95] : memref<2x32xf32, #tpu.memory_space<vmem>>, vector<2x32xf32>
      %c0_96 = arith.constant 0 : index
      %c0_97 = arith.constant 0 : index
      %361 = vector.load %arg7[%c0_96, %c0_97] : memref<2x32xf32, #tpu.memory_space<vmem>>, vector<2x32xf32>
      tpu.vector_store %arg7[%c0_96, %c0_97], %360 {strides = array<i32>} : memref<2x32xf32, #tpu.memory_space<vmem>>, vector<2x32xf32>,
    } else {
    }
    %c0 = arith.constant 0 : index
    %c0_1 = arith.constant 0 : index
    %3 = vector.load %arg2[%c0, %c0_1] : memref<32x128xbf16, #tpu.memory_space<vmem>>, vector<32x128xbf16>
    %c0_2 = arith.constant 0 : index
    %c0_3 = arith.constant 0 : index
    %4 = vector.load %arg6[%c0_2, %c0_3] : memref<2x32xf32, #tpu.memory_space<vmem>>, vector<2x32xf32>
    %c0_4 = arith.constant 0 : index
    %c0_5 = arith.constant 0 : index
    %5 = vector.load %arg7[%c0_4, %c0_5] : memref<2x32xf32, #tpu.memory_space<vmem>>, vector<2x32xf32>
    %c0_i32_6 = arith.constant 0 : i32
    %6 = arith.index_cast %c0_i32_6 : i32 to index
    %c0_7 = arith.constant 0 : index
    %c0_8 = arith.constant 0 : index
    %7 = vector.load %arg1[%6, %c0_7, %c0_8] : memref<10x2x128xf32, #tpu.memory_space<vmem>>, vector<1x2x128xf32>
    %8 = vector.shape_cast %7 : vector<1x2x128xf32> to vector<2x128xf32>
    %9 = arith.truncf %4 : vector<2x32xf32> to vector<2x32xbf16>
    %cst = arith.constant dense<0.000000e+00> : vector<2x128xf32>
    %10 = tpu.matmul %9, %3, %cst {dimension_numbers = #tpu.dot_dimension_numbers<[1], [0], [0], [1], [0, 0, 1, 1], [], []>} : vector<2x32xbf16>, vector<32x128xbf16>, vector<2x128xf32> -> vector<2x128xf32>
    %11 = arith.addf %8, %10 : vector<2x128xf32>
    %12 = vector.extract_strided_slice %11 {offsets = [0, 0], sizes = [2, 32], strides = [1, 1]} : vector<2x128xf32> to vector<2x32xf32>
    %13 = arith.negf %12 : vector<2x32xf32>
    %14 = math.exp %13 : vector<2x32xf32>
    %cst_9 = arith.constant 1.000000e+00 : f32
    %15 = vector.broadcast %cst_9 : f32 to vector<2x32xf32>
    %16 = arith.addf %15, %14 : vector<2x32xf32>
    %17 = arith.divf %15, %16 : vector<2x32xf32>
    %18 = vector.extract_strided_slice %11 {offsets = [0, 32], sizes = [2, 32], strides = [1, 1]} : vector<2x128xf32> to vector<2x32xf32>
    %19 = arith.negf %18 : vector<2x32xf32>
    %20 = math.exp %19 : vector<2x32xf32>
    %cst_10 = arith.constant 1.000000e+00 : f32
    %21 = vector.broadcast %cst_10 : f32 to vector<2x32xf32>
    %22 = arith.addf %21, %20 : vector<2x32xf32>
    %23 = arith.divf %21, %22 : vector<2x32xf32>
    %24 = vector.extract_strided_slice %11 {offsets = [0, 64], sizes = [2, 32], strides = [1, 1]} : vector<2x128xf32> to vector<2x32xf32>
    %25 = math.tanh %24 : vector<2x32xf32>
    %26 = vector.extract_strided_slice %11 {offsets = [0, 96], sizes = [2, 32], strides = [1, 1]} : vector<2x128xf32> to vector<2x32xf32>
    %27 = arith.negf %26 : vector<2x32xf32>
    %28 = math.exp %27 : vector<2x32xf32>
    %cst_11 = arith.constant 1.000000e+00 : f32
    %29 = vector.broadcast %cst_11 : f32 to vector<2x32xf32>
    %30 = arith.addf %29, %28 : vector<2x32xf32>
    %31 = arith.divf %29, %30 : vector<2x32xf32>
    %32 = arith.mulf %23, %5 : vector<2x32xf32>
    %33 = arith.mulf %17, %25 : vector<2x32xf32>
    %34 = arith.addf %32, %33 : vector<2x32xf32>
    %35 = math.tanh %34 : vector<2x32xf32>
    %36 = arith.mulf %31, %35 : vector<2x32xf32>
    %37 = arith.index_cast %c0_i32_6 : i32 to index
    %c0_12 = arith.constant 0 : index
    %c0_13 = arith.constant 0 : index
    %38 = vector.load %arg5[%37, %c0_12, %c0_13] : memref<10x2x32xf32, #tpu.memory_space<vmem>>, vector<1x2x32xf32>
    %39 = vector.shape_cast %38 : vector<1x2x32xf32> to vector<2x32xf32>
    %40 = vector.shape_cast %36 : vector<2x32xf32> to vector<1x2x32xf32>
    tpu.vector_store %arg5[%37, %c0_12, %c0_13], %40 {strides = array<i32>} : memref<10x2x32xf32, #tpu.memory_space<vmem>>, vector<1x2x32xf32>,
    %c1_i32 = arith.constant 1 : i32
    %41 = arith.index_cast %c1_i32 : i32 to index
    %c0_14 = arith.constant 0 : index
    %c0_15 = arith.constant 0 : index
    %42 = vector.load %arg1[%41, %c0_14, %c0_15] : memref<10x2x128xf32, #tpu.memory_space<vmem>>, vector<1x2x128xf32>
    %43 = vector.shape_cast %42 : vector<1x2x128xf32> to vector<2x128xf32>
    %44 = arith.truncf %36 : vector<2x32xf32> to vector<2x32xbf16>
    %cst_16 = arith.constant dense<0.000000e+00> : vector<2x128xf32>
    %45 = tpu.matmul %44, %3, %cst_16 {dimension_numbers = #tpu.dot_dimension_numbers<[1], [0], [0], [1], [0, 0, 1, 1], [], []>} : vector<2x32xbf16>, vector<32x128xbf16>, vector<2x128xf32> -> vector<2x128xf32>
    %46 = arith.addf %43, %45 : vector<2x128xf32>
    %47 = vector.extract_strided_slice %46 {offsets = [0, 0], sizes = [2, 32], strides = [1, 1]} : vector<2x128xf32> to vector<2x32xf32>
    %48 = arith.negf %47 : vector<2x32xf32>
    %49 = math.exp %48 : vector<2x32xf32>
    %cst_17 = arith.constant 1.000000e+00 : f32
    %50 = vector.broadcast %cst_17 : f32 to vector<2x32xf32>
    %51 = arith.addf %50, %49 : vector<2x32xf32>
    %52 = arith.divf %50, %51 : vector<2x32xf32>
    %53 = vector.extract_strided_slice %46 {offsets = [0, 32], sizes = [2, 32], strides = [1, 1]} : vector<2x128xf32> to vector<2x32xf32>
    %54 = arith.negf %53 : vector<2x32xf32>
    %55 = math.exp %54 : vector<2x32xf32>
    %cst_18 = arith.constant 1.000000e+00 : f32
    %56 = vector.broadcast %cst_18 : f32 to vector<2x32xf32>
    %57 = arith.addf %56, %55 : vector<2x32xf32>
    %58 = arith.divf %56, %57 : vector<2x32xf32>
    %59 = vector.extract_strided_slice %46 {offsets = [0, 64], sizes = [2, 32], strides = [1, 1]} : vector<2x128xf32> to vector<2x32xf32>
    %60 = math.tanh %59 : vector<2x32xf32>
    %61 = vector.extract_strided_slice %46 {offsets = [0, 96], sizes = [2, 32], strides = [1, 1]} : vector<2x128xf32> to vector<2x32xf32>
    %62 = arith.negf %61 : vector<2x32xf32>
    %63 = math.exp %62 : vector<2x32xf32>
    %cst_19 = arith.constant 1.000000e+00 : f32
    %64 = vector.broadcast %cst_19 : f32 to vector<2x32xf32>
    %65 = arith.addf %64, %63 : vector<2x32xf32>
    %66 = arith.divf %64, %65 : vector<2x32xf32>
    %67 = arith.mulf %58, %34 : vector<2x32xf32>
    %68 = arith.mulf %52, %60 : vector<2x32xf32>
    %69 = arith.addf %67, %68 : vector<2x32xf32>
    %70 = math.tanh %69 : vector<2x32xf32>
    %71 = arith.mulf %66, %70 : vector<2x32xf32>
    %72 = arith.index_cast %c1_i32 : i32 to index
    %c0_20 = arith.constant 0 : index
    %c0_21 = arith.constant 0 : index
    %73 = vector.load %arg5[%72, %c0_20, %c0_21] : memref<10x2x32xf32, #tpu.memory_space<vmem>>, vector<1x2x32xf32>
    %74 = vector.shape_cast %73 : vector<1x2x32xf32> to vector<2x32xf32>
    %75 = vector.shape_cast %71 : vector<2x32xf32> to vector<1x2x32xf32>
    tpu.vector_store %arg5[%72, %c0_20, %c0_21], %75 {strides = array<i32>} : memref<10x2x32xf32, #tpu.memory_space<vmem>>, vector<1x2x32xf32>,
    %c2_i32 = arith.constant 2 : i32
    %76 = arith.index_cast %c2_i32 : i32 to index
    %c0_22 = arith.constant 0 : index
    %c0_23 = arith.constant 0 : index
    %77 = vector.load %arg1[%76, %c0_22, %c0_23] : memref<10x2x128xf32, #tpu.memory_space<vmem>>, vector<1x2x128xf32>
    %78 = vector.shape_cast %77 : vector<1x2x128xf32> to vector<2x128xf32>
    %79 = arith.truncf %71 : vector<2x32xf32> to vector<2x32xbf16>
    %cst_24 = arith.constant dense<0.000000e+00> : vector<2x128xf32>
    %80 = tpu.matmul %79, %3, %cst_24 {dimension_numbers = #tpu.dot_dimension_numbers<[1], [0], [0], [1], [0, 0, 1, 1], [], []>} : vector<2x32xbf16>, vector<32x128xbf16>, vector<2x128xf32> -> vector<2x128xf32>
    %81 = arith.addf %78, %80 : vector<2x128xf32>
    %82 = vector.extract_strided_slice %81 {offsets = [0, 0], sizes = [2, 32], strides = [1, 1]} : vector<2x128xf32> to vector<2x32xf32>
    %83 = arith.negf %82 : vector<2x32xf32>
    %84 = math.exp %83 : vector<2x32xf32>
    %cst_25 = arith.constant 1.000000e+00 : f32
    %85 = vector.broadcast %cst_25 : f32 to vector<2x32xf32>
    %86 = arith.addf %85, %84 : vector<2x32xf32>
    %87 = arith.divf %85, %86 : vector<2x32xf32>
    %88 = vector.extract_strided_slice %81 {offsets = [0, 32], sizes = [2, 32], strides = [1, 1]} : vector<2x128xf32> to vector<2x32xf32>
    %89 = arith.negf %88 : vector<2x32xf32>
    %90 = math.exp %89 : vector<2x32xf32>
    %cst_26 = arith.constant 1.000000e+00 : f32
    %91 = vector.broadcast %cst_26 : f32 to vector<2x32xf32>
    %92 = arith.addf %91, %90 : vector<2x32xf32>
    %93 = arith.divf %91, %92 : vector<2x32xf32>
    %94 = vector.extract_strided_slice %81 {offsets = [0, 64], sizes = [2, 32], strides = [1, 1]} : vector<2x128xf32> to vector<2x32xf32>
    %95 = math.tanh %94 : vector<2x32xf32>
    %96 = vector.extract_strided_slice %81 {offsets = [0, 96], sizes = [2, 32], strides = [1, 1]} : vector<2x128xf32> to vector<2x32xf32>
    %97 = arith.negf %96 : vector<2x32xf32>
    %98 = math.exp %97 : vector<2x32xf32>
    %cst_27 = arith.constant 1.000000e+00 : f32
    %99 = vector.broadcast %cst_27 : f32 to vector<2x32xf32>
    %100 = arith.addf %99, %98 : vector<2x32xf32>
    %101 = arith.divf %99, %100 : vector<2x32xf32>
    %102 = arith.mulf %93, %69 : vector<2x32xf32>
    %103 = arith.mulf %87, %95 : vector<2x32xf32>
    %104 = arith.addf %102, %103 : vector<2x32xf32>
    %105 = math.tanh %104 : vector<2x32xf32>
    %106 = arith.mulf %101, %105 : vector<2x32xf32>
    %107 = arith.index_cast %c2_i32 : i32 to index
    %c0_28 = arith.constant 0 : index
    %c0_29 = arith.constant 0 : index
    %108 = vector.load %arg5[%107, %c0_28, %c0_29] : memref<10x2x32xf32, #tpu.memory_space<vmem>>, vector<1x2x32xf32>
    %109 = vector.shape_cast %108 : vector<1x2x32xf32> to vector<2x32xf32>
    %110 = vector.shape_cast %106 : vector<2x32xf32> to vector<1x2x32xf32>
    tpu.vector_store %arg5[%107, %c0_28, %c0_29], %110 {strides = array<i32>} : memref<10x2x32xf32, #tpu.memory_space<vmem>>, vector<1x2x32xf32>,
    %c3_i32 = arith.constant 3 : i32
    %111 = arith.index_cast %c3_i32 : i32 to index
    %c0_30 = arith.constant 0 : index
    %c0_31 = arith.constant 0 : index
    %112 = vector.load %arg1[%111, %c0_30, %c0_31] : memref<10x2x128xf32, #tpu.memory_space<vmem>>, vector<1x2x128xf32>
    %113 = vector.shape_cast %112 : vector<1x2x128xf32> to vector<2x128xf32>
    %114 = arith.truncf %106 : vector<2x32xf32> to vector<2x32xbf16>
    %cst_32 = arith.constant dense<0.000000e+00> : vector<2x128xf32>
    %115 = tpu.matmul %114, %3, %cst_32 {dimension_numbers = #tpu.dot_dimension_numbers<[1], [0], [0], [1], [0, 0, 1, 1], [], []>} : vector<2x32xbf16>, vector<32x128xbf16>, vector<2x128xf32> -> vector<2x128xf32>
    %116 = arith.addf %113, %115 : vector<2x128xf32>
    %117 = vector.extract_strided_slice %116 {offsets = [0, 0], sizes = [2, 32], strides = [1, 1]} : vector<2x128xf32> to vector<2x32xf32>
    %118 = arith.negf %117 : vector<2x32xf32>
    %119 = math.exp %118 : vector<2x32xf32>
    %cst_33 = arith.constant 1.000000e+00 : f32
    %120 = vector.broadcast %cst_33 : f32 to vector<2x32xf32>
    %121 = arith.addf %120, %119 : vector<2x32xf32>
    %122 = arith.divf %120, %121 : vector<2x32xf32>
    %123 = vector.extract_strided_slice %116 {offsets = [0, 32], sizes = [2, 32], strides = [1, 1]} : vector<2x128xf32> to vector<2x32xf32>
    %124 = arith.negf %123 : vector<2x32xf32>
    %125 = math.exp %124 : vector<2x32xf32>
    %cst_34 = arith.constant 1.000000e+00 : f32
    %126 = vector.broadcast %cst_34 : f32 to vector<2x32xf32>
    %127 = arith.addf %126, %125 : vector<2x32xf32>
    %128 = arith.divf %126, %127 : vector<2x32xf32>
    %129 = vector.extract_strided_slice %116 {offsets = [0, 64], sizes = [2, 32], strides = [1, 1]} : vector<2x128xf32> to vector<2x32xf32>
    %130 = math.tanh %129 : vector<2x32xf32>
    %131 = vector.extract_strided_slice %116 {offsets = [0, 96], sizes = [2, 32], strides = [1, 1]} : vector<2x128xf32> to vector<2x32xf32>
    %132 = arith.negf %131 : vector<2x32xf32>
    %133 = math.exp %132 : vector<2x32xf32>
    %cst_35 = arith.constant 1.000000e+00 : f32
    %134 = vector.broadcast %cst_35 : f32 to vector<2x32xf32>
    %135 = arith.addf %134, %133 : vector<2x32xf32>
    %136 = arith.divf %134, %135 : vector<2x32xf32>
    %137 = arith.mulf %128, %104 : vector<2x32xf32>
    %138 = arith.mulf %122, %130 : vector<2x32xf32>
    %139 = arith.addf %137, %138 : vector<2x32xf32>
    %140 = math.tanh %139 : vector<2x32xf32>
    %141 = arith.mulf %136, %140 : vector<2x32xf32>
    %142 = arith.index_cast %c3_i32 : i32 to index
    %c0_36 = arith.constant 0 : index
    %c0_37 = arith.constant 0 : index
    %143 = vector.load %arg5[%142, %c0_36, %c0_37] : memref<10x2x32xf32, #tpu.memory_space<vmem>>, vector<1x2x32xf32>
    %144 = vector.shape_cast %143 : vector<1x2x32xf32> to vector<2x32xf32>
    %145 = vector.shape_cast %141 : vector<2x32xf32> to vector<1x2x32xf32>
    tpu.vector_store %arg5[%142, %c0_36, %c0_37], %145 {strides = array<i32>} : memref<10x2x32xf32, #tpu.memory_space<vmem>>, vector<1x2x32xf32>,
    %c4_i32 = arith.constant 4 : i32
    %146 = arith.index_cast %c4_i32 : i32 to index
    %c0_38 = arith.constant 0 : index
    %c0_39 = arith.constant 0 : index
    %147 = vector.load %arg1[%146, %c0_38, %c0_39] : memref<10x2x128xf32, #tpu.memory_space<vmem>>, vector<1x2x128xf32>
    %148 = vector.shape_cast %147 : vector<1x2x128xf32> to vector<2x128xf32>
    %149 = arith.truncf %141 : vector<2x32xf32> to vector<2x32xbf16>
    %cst_40 = arith.constant dense<0.000000e+00> : vector<2x128xf32>
    %150 = tpu.matmul %149, %3, %cst_40 {dimension_numbers = #tpu.dot_dimension_numbers<[1], [0], [0], [1], [0, 0, 1, 1], [], []>} : vector<2x32xbf16>, vector<32x128xbf16>, vector<2x128xf32> -> vector<2x128xf32>
    %151 = arith.addf %148, %150 : vector<2x128xf32>
    %152 = vector.extract_strided_slice %151 {offsets = [0, 0], sizes = [2, 32], strides = [1, 1]} : vector<2x128xf32> to vector<2x32xf32>
    %153 = arith.negf %152 : vector<2x32xf32>
    %154 = math.exp %153 : vector<2x32xf32>
    %cst_41 = arith.constant 1.000000e+00 : f32
    %155 = vector.broadcast %cst_41 : f32 to vector<2x32xf32>
    %156 = arith.addf %155, %154 : vector<2x32xf32>
    %157 = arith.divf %155, %156 : vector<2x32xf32>
    %158 = vector.extract_strided_slice %151 {offsets = [0, 32], sizes = [2, 32], strides = [1, 1]} : vector<2x128xf32> to vector<2x32xf32>
    %159 = arith.negf %158 : vector<2x32xf32>
    %160 = math.exp %159 : vector<2x32xf32>
    %cst_42 = arith.constant 1.000000e+00 : f32
    %161 = vector.broadcast %cst_42 : f32 to vector<2x32xf32>
    %162 = arith.addf %161, %160 : vector<2x32xf32>
    %163 = arith.divf %161, %162 : vector<2x32xf32>
    %164 = vector.extract_strided_slice %151 {offsets = [0, 64], sizes = [2, 32], strides = [1, 1]} : vector<2x128xf32> to vector<2x32xf32>
    %165 = math.tanh %164 : vector<2x32xf32>
    %166 = vector.extract_strided_slice %151 {offsets = [0, 96], sizes = [2, 32], strides = [1, 1]} : vector<2x128xf32> to vector<2x32xf32>
    %167 = arith.negf %166 : vector<2x32xf32>
    %168 = math.exp %167 : vector<2x32xf32>
    %cst_43 = arith.constant 1.000000e+00 : f32
    %169 = vector.broadcast %cst_43 : f32 to vector<2x32xf32>
    %170 = arith.addf %169, %168 : vector<2x32xf32>
    %171 = arith.divf %169, %170 : vector<2x32xf32>
    %172 = arith.mulf %163, %139 : vector<2x32xf32>
    %173 = arith.mulf %157, %165 : vector<2x32xf32>
    %174 = arith.addf %172, %173 : vector<2x32xf32>
    %175 = math.tanh %174 : vector<2x32xf32>
    %176 = arith.mulf %171, %175 : vector<2x32xf32>
    %177 = arith.index_cast %c4_i32 : i32 to index
    %c0_44 = arith.constant 0 : index
    %c0_45 = arith.constant 0 : index
    %178 = vector.load %arg5[%177, %c0_44, %c0_45] : memref<10x2x32xf32, #tpu.memory_space<vmem>>, vector<1x2x32xf32>
    %179 = vector.shape_cast %178 : vector<1x2x32xf32> to vector<2x32xf32>
    %180 = vector.shape_cast %176 : vector<2x32xf32> to vector<1x2x32xf32>
    tpu.vector_store %arg5[%177, %c0_44, %c0_45], %180 {strides = array<i32>} : memref<10x2x32xf32, #tpu.memory_space<vmem>>, vector<1x2x32xf32>,
    %c5_i32 = arith.constant 5 : i32
    %181 = arith.index_cast %c5_i32 : i32 to index
    %c0_46 = arith.constant 0 : index
    %c0_47 = arith.constant 0 : index
    %182 = vector.load %arg1[%181, %c0_46, %c0_47] : memref<10x2x128xf32, #tpu.memory_space<vmem>>, vector<1x2x128xf32>
    %183 = vector.shape_cast %182 : vector<1x2x128xf32> to vector<2x128xf32>
    %184 = arith.truncf %176 : vector<2x32xf32> to vector<2x32xbf16>
    %cst_48 = arith.constant dense<0.000000e+00> : vector<2x128xf32>
    %185 = tpu.matmul %184, %3, %cst_48 {dimension_numbers = #tpu.dot_dimension_numbers<[1], [0], [0], [1], [0, 0, 1, 1], [], []>} : vector<2x32xbf16>, vector<32x128xbf16>, vector<2x128xf32> -> vector<2x128xf32>
    %186 = arith.addf %183, %185 : vector<2x128xf32>
    %187 = vector.extract_strided_slice %186 {offsets = [0, 0], sizes = [2, 32], strides = [1, 1]} : vector<2x128xf32> to vector<2x32xf32>
    %188 = arith.negf %187 : vector<2x32xf32>
    %189 = math.exp %188 : vector<2x32xf32>
    %cst_49 = arith.constant 1.000000e+00 : f32
    %190 = vector.broadcast %cst_49 : f32 to vector<2x32xf32>
    %191 = arith.addf %190, %189 : vector<2x32xf32>
    %192 = arith.divf %190, %191 : vector<2x32xf32>
    %193 = vector.extract_strided_slice %186 {offsets = [0, 32], sizes = [2, 32], strides = [1, 1]} : vector<2x128xf32> to vector<2x32xf32>
    %194 = arith.negf %193 : vector<2x32xf32>
    %195 = math.exp %194 : vector<2x32xf32>
    %cst_50 = arith.constant 1.000000e+00 : f32
    %196 = vector.broadcast %cst_50 : f32 to vector<2x32xf32>
    %197 = arith.addf %196, %195 : vector<2x32xf32>
    %198 = arith.divf %196, %197 : vector<2x32xf32>
    %199 = vector.extract_strided_slice %186 {offsets = [0, 64], sizes = [2, 32], strides = [1, 1]} : vector<2x128xf32> to vector<2x32xf32>
    %200 = math.tanh %199 : vector<2x32xf32>
    %201 = vector.extract_strided_slice %186 {offsets = [0, 96], sizes = [2, 32], strides = [1, 1]} : vector<2x128xf32> to vector<2x32xf32>
    %202 = arith.negf %201 : vector<2x32xf32>
    %203 = math.exp %202 : vector<2x32xf32>
    %cst_51 = arith.constant 1.000000e+00 : f32
    %204 = vector.broadcast %cst_51 : f32 to vector<2x32xf32>
    %205 = arith.addf %204, %203 : vector<2x32xf32>
    %206 = arith.divf %204, %205 : vector<2x32xf32>
    %207 = arith.mulf %198, %174 : vector<2x32xf32>
    %208 = arith.mulf %192, %200 : vector<2x32xf32>
    %209 = arith.addf %207, %208 : vector<2x32xf32>
    %210 = math.tanh %209 : vector<2x32xf32>
    %211 = arith.mulf %206, %210 : vector<2x32xf32>
    %212 = arith.index_cast %c5_i32 : i32 to index
    %c0_52 = arith.constant 0 : index
    %c0_53 = arith.constant 0 : index
    %213 = vector.load %arg5[%212, %c0_52, %c0_53] : memref<10x2x32xf32, #tpu.memory_space<vmem>>, vector<1x2x32xf32>
    %214 = vector.shape_cast %213 : vector<1x2x32xf32> to vector<2x32xf32>
    %215 = vector.shape_cast %211 : vector<2x32xf32> to vector<1x2x32xf32>
    tpu.vector_store %arg5[%212, %c0_52, %c0_53], %215 {strides = array<i32>} : memref<10x2x32xf32, #tpu.memory_space<vmem>>, vector<1x2x32xf32>,
    %c6_i32 = arith.constant 6 : i32
    %216 = arith.index_cast %c6_i32 : i32 to index
    %c0_54 = arith.constant 0 : index
    %c0_55 = arith.constant 0 : index
    %217 = vector.load %arg1[%216, %c0_54, %c0_55] : memref<10x2x128xf32, #tpu.memory_space<vmem>>, vector<1x2x128xf32>
    %218 = vector.shape_cast %217 : vector<1x2x128xf32> to vector<2x128xf32>
    %219 = arith.truncf %211 : vector<2x32xf32> to vector<2x32xbf16>
    %cst_56 = arith.constant dense<0.000000e+00> : vector<2x128xf32>
    %220 = tpu.matmul %219, %3, %cst_56 {dimension_numbers = #tpu.dot_dimension_numbers<[1], [0], [0], [1], [0, 0, 1, 1], [], []>} : vector<2x32xbf16>, vector<32x128xbf16>, vector<2x128xf32> -> vector<2x128xf32>
    %221 = arith.addf %218, %220 : vector<2x128xf32>
    %222 = vector.extract_strided_slice %221 {offsets = [0, 0], sizes = [2, 32], strides = [1, 1]} : vector<2x128xf32> to vector<2x32xf32>
    %223 = arith.negf %222 : vector<2x32xf32>
    %224 = math.exp %223 : vector<2x32xf32>
    %cst_57 = arith.constant 1.000000e+00 : f32
    %225 = vector.broadcast %cst_57 : f32 to vector<2x32xf32>
    %226 = arith.addf %225, %224 : vector<2x32xf32>
    %227 = arith.divf %225, %226 : vector<2x32xf32>
    %228 = vector.extract_strided_slice %221 {offsets = [0, 32], sizes = [2, 32], strides = [1, 1]} : vector<2x128xf32> to vector<2x32xf32>
    %229 = arith.negf %228 : vector<2x32xf32>
    %230 = math.exp %229 : vector<2x32xf32>
    %cst_58 = arith.constant 1.000000e+00 : f32
    %231 = vector.broadcast %cst_58 : f32 to vector<2x32xf32>
    %232 = arith.addf %231, %230 : vector<2x32xf32>
    %233 = arith.divf %231, %232 : vector<2x32xf32>
    %234 = vector.extract_strided_slice %221 {offsets = [0, 64], sizes = [2, 32], strides = [1, 1]} : vector<2x128xf32> to vector<2x32xf32>
    %235 = math.tanh %234 : vector<2x32xf32>
    %236 = vector.extract_strided_slice %221 {offsets = [0, 96], sizes = [2, 32], strides = [1, 1]} : vector<2x128xf32> to vector<2x32xf32>
    %237 = arith.negf %236 : vector<2x32xf32>
    %238 = math.exp %237 : vector<2x32xf32>
    %cst_59 = arith.constant 1.000000e+00 : f32
    %239 = vector.broadcast %cst_59 : f32 to vector<2x32xf32>
    %240 = arith.addf %239, %238 : vector<2x32xf32>
    %241 = arith.divf %239, %240 : vector<2x32xf32>
    %242 = arith.mulf %233, %209 : vector<2x32xf32>
    %243 = arith.mulf %227, %235 : vector<2x32xf32>
    %244 = arith.addf %242, %243 : vector<2x32xf32>
    %245 = math.tanh %244 : vector<2x32xf32>
    %246 = arith.mulf %241, %245 : vector<2x32xf32>
    %247 = arith.index_cast %c6_i32 : i32 to index
    %c0_60 = arith.constant 0 : index
    %c0_61 = arith.constant 0 : index
    %248 = vector.load %arg5[%247, %c0_60, %c0_61] : memref<10x2x32xf32, #tpu.memory_space<vmem>>, vector<1x2x32xf32>
    %249 = vector.shape_cast %248 : vector<1x2x32xf32> to vector<2x32xf32>
    %250 = vector.shape_cast %246 : vector<2x32xf32> to vector<1x2x32xf32>
    tpu.vector_store %arg5[%247, %c0_60, %c0_61], %250 {strides = array<i32>} : memref<10x2x32xf32, #tpu.memory_space<vmem>>, vector<1x2x32xf32>,
    %c7_i32 = arith.constant 7 : i32
    %251 = arith.index_cast %c7_i32 : i32 to index
    %c0_62 = arith.constant 0 : index
    %c0_63 = arith.constant 0 : index
    %252 = vector.load %arg1[%251, %c0_62, %c0_63] : memref<10x2x128xf32, #tpu.memory_space<vmem>>, vector<1x2x128xf32>
    %253 = vector.shape_cast %252 : vector<1x2x128xf32> to vector<2x128xf32>
    %254 = arith.truncf %246 : vector<2x32xf32> to vector<2x32xbf16>
    %cst_64 = arith.constant dense<0.000000e+00> : vector<2x128xf32>
    %255 = tpu.matmul %254, %3, %cst_64 {dimension_numbers = #tpu.dot_dimension_numbers<[1], [0], [0], [1], [0, 0, 1, 1], [], []>} : vector<2x32xbf16>, vector<32x128xbf16>, vector<2x128xf32> -> vector<2x128xf32>
    %256 = arith.addf %253, %255 : vector<2x128xf32>
    %257 = vector.extract_strided_slice %256 {offsets = [0, 0], sizes = [2, 32], strides = [1, 1]} : vector<2x128xf32> to vector<2x32xf32>
    %258 = arith.negf %257 : vector<2x32xf32>
    %259 = math.exp %258 : vector<2x32xf32>
    %cst_65 = arith.constant 1.000000e+00 : f32
    %260 = vector.broadcast %cst_65 : f32 to vector<2x32xf32>
    %261 = arith.addf %260, %259 : vector<2x32xf32>
    %262 = arith.divf %260, %261 : vector<2x32xf32>
    %263 = vector.extract_strided_slice %256 {offsets = [0, 32], sizes = [2, 32], strides = [1, 1]} : vector<2x128xf32> to vector<2x32xf32>
    %264 = arith.negf %263 : vector<2x32xf32>
    %265 = math.exp %264 : vector<2x32xf32>
    %cst_66 = arith.constant 1.000000e+00 : f32
    %266 = vector.broadcast %cst_66 : f32 to vector<2x32xf32>
    %267 = arith.addf %266, %265 : vector<2x32xf32>
    %268 = arith.divf %266, %267 : vector<2x32xf32>
    %269 = vector.extract_strided_slice %256 {offsets = [0, 64], sizes = [2, 32], strides = [1, 1]} : vector<2x128xf32> to vector<2x32xf32>
    %270 = math.tanh %269 : vector<2x32xf32>
    %271 = vector.extract_strided_slice %256 {offsets = [0, 96], sizes = [2, 32], strides = [1, 1]} : vector<2x128xf32> to vector<2x32xf32>
    %272 = arith.negf %271 : vector<2x32xf32>
    %273 = math.exp %272 : vector<2x32xf32>
    %cst_67 = arith.constant 1.000000e+00 : f32
    %274 = vector.broadcast %cst_67 : f32 to vector<2x32xf32>
    %275 = arith.addf %274, %273 : vector<2x32xf32>
    %276 = arith.divf %274, %275 : vector<2x32xf32>
    %277 = arith.mulf %268, %244 : vector<2x32xf32>
    %278 = arith.mulf %262, %270 : vector<2x32xf32>
    %279 = arith.addf %277, %278 : vector<2x32xf32>
    %280 = math.tanh %279 : vector<2x32xf32>
    %281 = arith.mulf %276, %280 : vector<2x32xf32>
    %282 = arith.index_cast %c7_i32 : i32 to index
    %c0_68 = arith.constant 0 : index
    %c0_69 = arith.constant 0 : index
    %283 = vector.load %arg5[%282, %c0_68, %c0_69] : memref<10x2x32xf32, #tpu.memory_space<vmem>>, vector<1x2x32xf32>
    %284 = vector.shape_cast %283 : vector<1x2x32xf32> to vector<2x32xf32>
    %285 = vector.shape_cast %281 : vector<2x32xf32> to vector<1x2x32xf32>
    tpu.vector_store %arg5[%282, %c0_68, %c0_69], %285 {strides = array<i32>} : memref<10x2x32xf32, #tpu.memory_space<vmem>>, vector<1x2x32xf32>,
    %c8_i32 = arith.constant 8 : i32
    %286 = arith.index_cast %c8_i32 : i32 to index
    %c0_70 = arith.constant 0 : index
    %c0_71 = arith.constant 0 : index
    %287 = vector.load %arg1[%286, %c0_70, %c0_71] : memref<10x2x128xf32, #tpu.memory_space<vmem>>, vector<1x2x128xf32>
    %288 = vector.shape_cast %287 : vector<1x2x128xf32> to vector<2x128xf32>
    %289 = arith.truncf %281 : vector<2x32xf32> to vector<2x32xbf16>
    %cst_72 = arith.constant dense<0.000000e+00> : vector<2x128xf32>
    %290 = tpu.matmul %289, %3, %cst_72 {dimension_numbers = #tpu.dot_dimension_numbers<[1], [0], [0], [1], [0, 0, 1, 1], [], []>} : vector<2x32xbf16>, vector<32x128xbf16>, vector<2x128xf32> -> vector<2x128xf32>
    %291 = arith.addf %288, %290 : vector<2x128xf32>
    %292 = vector.extract_strided_slice %291 {offsets = [0, 0], sizes = [2, 32], strides = [1, 1]} : vector<2x128xf32> to vector<2x32xf32>
    %293 = arith.negf %292 : vector<2x32xf32>
    %294 = math.exp %293 : vector<2x32xf32>
    %cst_73 = arith.constant 1.000000e+00 : f32
    %295 = vector.broadcast %cst_73 : f32 to vector<2x32xf32>
    %296 = arith.addf %295, %294 : vector<2x32xf32>
    %297 = arith.divf %295, %296 : vector<2x32xf32>
    %298 = vector.extract_strided_slice %291 {offsets = [0, 32], sizes = [2, 32], strides = [1, 1]} : vector<2x128xf32> to vector<2x32xf32>
    %299 = arith.negf %298 : vector<2x32xf32>
    %300 = math.exp %299 : vector<2x32xf32>
    %cst_74 = arith.constant 1.000000e+00 : f32
    %301 = vector.broadcast %cst_74 : f32 to vector<2x32xf32>
    %302 = arith.addf %301, %300 : vector<2x32xf32>
    %303 = arith.divf %301, %302 : vector<2x32xf32>
    %304 = vector.extract_strided_slice %291 {offsets = [0, 64], sizes = [2, 32], strides = [1, 1]} : vector<2x128xf32> to vector<2x32xf32>
    %305 = math.tanh %304 : vector<2x32xf32>
    %306 = vector.extract_strided_slice %291 {offsets = [0, 96], sizes = [2, 32], strides = [1, 1]} : vector<2x128xf32> to vector<2x32xf32>
    %307 = arith.negf %306 : vector<2x32xf32>
    %308 = math.exp %307 : vector<2x32xf32>
    %cst_75 = arith.constant 1.000000e+00 : f32
    %309 = vector.broadcast %cst_75 : f32 to vector<2x32xf32>
    %310 = arith.addf %309, %308 : vector<2x32xf32>
    %311 = arith.divf %309, %310 : vector<2x32xf32>
    %312 = arith.mulf %303, %279 : vector<2x32xf32>
    %313 = arith.mulf %297, %305 : vector<2x32xf32>
    %314 = arith.addf %312, %313 : vector<2x32xf32>
    %315 = math.tanh %314 : vector<2x32xf32>
    %316 = arith.mulf %311, %315 : vector<2x32xf32>
    %317 = arith.index_cast %c8_i32 : i32 to index
    %c0_76 = arith.constant 0 : index
    %c0_77 = arith.constant 0 : index
    %318 = vector.load %arg5[%317, %c0_76, %c0_77] : memref<10x2x32xf32, #tpu.memory_space<vmem>>, vector<1x2x32xf32>
    %319 = vector.shape_cast %318 : vector<1x2x32xf32> to vector<2x32xf32>
    %320 = vector.shape_cast %316 : vector<2x32xf32> to vector<1x2x32xf32>
    tpu.vector_store %arg5[%317, %c0_76, %c0_77], %320 {strides = array<i32>} : memref<10x2x32xf32, #tpu.memory_space<vmem>>, vector<1x2x32xf32>,
    %c9_i32 = arith.constant 9 : i32
    %321 = arith.index_cast %c9_i32 : i32 to index
    %c0_78 = arith.constant 0 : index
    %c0_79 = arith.constant 0 : index
    %322 = vector.load %arg1[%321, %c0_78, %c0_79] : memref<10x2x128xf32, #tpu.memory_space<vmem>>, vector<1x2x128xf32>
    %323 = vector.shape_cast %322 : vector<1x2x128xf32> to vector<2x128xf32>
    %324 = arith.truncf %316 : vector<2x32xf32> to vector<2x32xbf16>
    %cst_80 = arith.constant dense<0.000000e+00> : vector<2x128xf32>
    %325 = tpu.matmul %324, %3, %cst_80 {dimension_numbers = #tpu.dot_dimension_numbers<[1], [0], [0], [1], [0, 0, 1, 1], [], []>} : vector<2x32xbf16>, vector<32x128xbf16>, vector<2x128xf32> -> vector<2x128xf32>
    %326 = arith.addf %323, %325 : vector<2x128xf32>
    %327 = vector.extract_strided_slice %326 {offsets = [0, 0], sizes = [2, 32], strides = [1, 1]} : vector<2x128xf32> to vector<2x32xf32>
    %328 = arith.negf %327 : vector<2x32xf32>
    %329 = math.exp %328 : vector<2x32xf32>
    %cst_81 = arith.constant 1.000000e+00 : f32
    %330 = vector.broadcast %cst_81 : f32 to vector<2x32xf32>
    %331 = arith.addf %330, %329 : vector<2x32xf32>
    %332 = arith.divf %330, %331 : vector<2x32xf32>
    %333 = vector.extract_strided_slice %326 {offsets = [0, 32], sizes = [2, 32], strides = [1, 1]} : vector<2x128xf32> to vector<2x32xf32>
    %334 = arith.negf %333 : vector<2x32xf32>
    %335 = math.exp %334 : vector<2x32xf32>
    %cst_82 = arith.constant 1.000000e+00 : f32
    %336 = vector.broadcast %cst_82 : f32 to vector<2x32xf32>
    %337 = arith.addf %336, %335 : vector<2x32xf32>
    %338 = arith.divf %336, %337 : vector<2x32xf32>
    %339 = vector.extract_strided_slice %326 {offsets = [0, 64], sizes = [2, 32], strides = [1, 1]} : vector<2x128xf32> to vector<2x32xf32>
    %340 = math.tanh %339 : vector<2x32xf32>
    %341 = vector.extract_strided_slice %326 {offsets = [0, 96], sizes = [2, 32], strides = [1, 1]} : vector<2x128xf32> to vector<2x32xf32>
    %342 = arith.negf %341 : vector<2x32xf32>
    %343 = math.exp %342 : vector<2x32xf32>
    %cst_83 = arith.constant 1.000000e+00 : f32
    %344 = vector.broadcast %cst_83 : f32 to vector<2x32xf32>
    %345 = arith.addf %344, %343 : vector<2x32xf32>
    %346 = arith.divf %344, %345 : vector<2x32xf32>
    %347 = arith.mulf %338, %314 : vector<2x32xf32>
    %348 = arith.mulf %332, %340 : vector<2x32xf32>
    %349 = arith.addf %347, %348 : vector<2x32xf32>
    %350 = math.tanh %349 : vector<2x32xf32>
    %351 = arith.mulf %346, %350 : vector<2x32xf32>
    %352 = arith.index_cast %c9_i32 : i32 to index
    %c0_84 = arith.constant 0 : index
    %c0_85 = arith.constant 0 : index
    %353 = vector.load %arg5[%352, %c0_84, %c0_85] : memref<10x2x32xf32, #tpu.memory_space<vmem>>, vector<1x2x32xf32>
    %354 = vector.shape_cast %353 : vector<1x2x32xf32> to vector<2x32xf32>
    %355 = vector.shape_cast %351 : vector<2x32xf32> to vector<1x2x32xf32>
    tpu.vector_store %arg5[%352, %c0_84, %c0_85], %355 {strides = array<i32>} : memref<10x2x32xf32, #tpu.memory_space<vmem>>, vector<1x2x32xf32>,
    %c10_i32 = arith.constant 10 : i32
    %c0_86 = arith.constant 0 : index
    %c0_87 = arith.constant 0 : index
    %356 = vector.load %arg6[%c0_86, %c0_87] : memref<2x32xf32, #tpu.memory_space<vmem>>, vector<2x32xf32>
    tpu.vector_store %arg6[%c0_86, %c0_87], %351 {strides = array<i32>} : memref<2x32xf32, #tpu.memory_space<vmem>>, vector<2x32xf32>,
    %c0_88 = arith.constant 0 : index
    %c0_89 = arith.constant 0 : index
    %357 = vector.load %arg7[%c0_88, %c0_89] : memref<2x32xf32, #tpu.memory_space<vmem>>, vector<2x32xf32>
    tpu.vector_store %arg7[%c0_88, %c0_89], %349 {strides = array<i32>} : memref<2x32xf32, #tpu.memory_space<vmem>>, vector<2x32xf32>,
    return
  }
  func.func @transform_0(%arg0: i32) -> (i32, i32, i32) {
    %c0_i32 = arith.constant 0 : i32
    %c0_i32_0 = arith.constant 0 : i32
    %c0_i32_1 = arith.constant 0 : i32
    return %arg0, %c0_i32, %c0_i32_0 : i32, i32, i32
  }
  func.func @transform_1(%arg0: i32) -> (i32, i32) {
    %c0_i32 = arith.constant 0 : i32
    %c0_i32_0 = arith.constant 0 : i32
    %c0_i32_1 = arith.constant 0 : i32
    return %c0_i32, %c0_i32_0 : i32, i32
  }
  func.func @transform_2(%arg0: i32) -> (i32, i32) {
    %c0_i32 = arith.constant 0 : i32
    %c0_i32_0 = arith.constant 0 : i32
    %c0_i32_1 = arith.constant 0 : i32
    return %c0_i32, %c0_i32_0 : i32, i32
  }
  func.func @transform_3(%arg0: i32) -> (i32, i32) {
    %c0_i32 = arith.constant 0 : i32
    %c0_i32_0 = arith.constant 0 : i32
    %c0_i32_1 = arith.constant 0 : i32
    return %c0_i32, %c0_i32_0 : i32, i32
  }
  func.func @transform_4(%arg0: i32) -> (i32, i32, i32) {
    %c0_i32 = arith.constant 0 : i32
    %c0_i32_0 = arith.constant 0 : i32
    %c0_i32_1 = arith.constant 0 : i32
    return %arg0, %c0_i32, %c0_i32_0 : i32, i32, i32
  }
}

module attributes {stable_mosaic.version = 11 : i64} {
  func.func @_proj_head_kernel(%arg0: i32, %arg1: i32, %arg2: memref<24x32xf32, #tpu.memory_space<vmem>>, %arg3: memref<24x1xi32, #tpu.memory_space<vmem>>, %arg4: memref<32x16xbf16, #tpu.memory_space<vmem>>, %arg5: memref<1x16xf32, #tpu.memory_space<vmem>>, %arg6: memref<16x32xbf16, #tpu.memory_space<vmem>>, %arg7: memref<1x32xf32, #tpu.memory_space<vmem>>, %arg8: memref<24x1xi32, #tpu.memory_space<vmem>>, %arg9: memref<24x1xf32, #tpu.memory_space<vmem>>, %arg10: memref<24x16xf32, #tpu.memory_space<vmem>>, %arg11: memref<24x1xf32, #tpu.memory_space<vmem>>, %arg12: memref<24x1xf32, #tpu.memory_space<vmem>>, %arg13: memref<24x1xf32, #tpu.memory_space<vmem>>, %arg14: memref<24x1xi32, #tpu.memory_space<vmem>>, %arg15: memref<24x1xf32, #tpu.memory_space<vmem>>) attributes {dimension_semantics = [#tpu.dimension_semantics<parallel>, #tpu.dimension_semantics<arbitrary>], iteration_bounds = array<i64: 1, 1>, scalar_prefetch = 0 : i64, scratch_operands = 6 : i64, tpu.core_type = #tpu.core_type<tc>, window_params = [{transform_indices = @transform_0, window_bounds = array<i64: 24, 32>}, {transform_indices = @transform_1, window_bounds = array<i64: 24, 1>}, {pipeline_mode = #tpu.pipeline_mode<synchronous>, transform_indices = @transform_2, window_bounds = array<i64: 32, 16>}, {pipeline_mode = #tpu.pipeline_mode<synchronous>, transform_indices = @transform_3, window_bounds = array<i64: 1, 16>}, {transform_indices = @transform_4, window_bounds = array<i64: 16, 32>}, {transform_indices = @transform_5, window_bounds = array<i64: 1, 32>}, {transform_indices = @transform_6, window_bounds = array<i64: 24, 1>}, {transform_indices = @transform_7, window_bounds = array<i64: 24, 1>}]} {
    %c0_i32 = arith.constant 0 : i32
    %0 = arith.cmpi eq, %arg1, %c0_i32 : i32
    %1 = arith.extui %0 : i1 to i32
    %c0_i32_0 = arith.constant 0 : i32
    %2 = arith.cmpi ne, %1, %c0_i32_0 : i32
    scf.if %2 {
      %c0_39 = arith.constant 0 : index
      %c0_40 = arith.constant 0 : index
      %58 = vector.load %arg2[%c0_39, %c0_40] : memref<24x32xf32, #tpu.memory_space<vmem>>, vector<24x32xf32>
      %c0_41 = arith.constant 0 : index
      %c0_42 = arith.constant 0 : index
      %59 = vector.load %arg4[%c0_41, %c0_42] : memref<32x16xbf16, #tpu.memory_space<vmem>>, vector<32x16xbf16>
      %60 = arith.truncf %58 : vector<24x32xf32> to vector<24x32xbf16>
      %cst_43 = arith.constant dense<0.000000e+00> : vector<24x16xf32>
      %61 = tpu.matmul %60, %59, %cst_43 {dimension_numbers = #tpu.dot_dimension_numbers<[1], [0], [0], [1], [0, 0, 1, 1], [], []>} : vector<24x32xbf16>, vector<32x16xbf16>, vector<24x16xf32> -> vector<24x16xf32>
      %c0_44 = arith.constant 0 : index
      %c0_45 = arith.constant 0 : index
      %62 = vector.load %arg5[%c0_44, %c0_45] : memref<1x16xf32, #tpu.memory_space<vmem>>, vector<1x16xf32>
      %63 = vector.broadcast %62 : vector<1x16xf32> to vector<24x16xf32>
      %64 = arith.addf %61, %63 : vector<24x16xf32>
      %c0_46 = arith.constant 0 : index
      %c0_47 = arith.constant 0 : index
      %65 = vector.load %arg10[%c0_46, %c0_47] : memref<24x16xf32, #tpu.memory_space<vmem>>, vector<24x16xf32>
      tpu.vector_store %arg10[%c0_46, %c0_47], %64 {strides = array<i32>} : memref<24x16xf32, #tpu.memory_space<vmem>>, vector<24x16xf32>,
      %cst_48 = arith.constant 0xFF800000 : f32
      %66 = vector.broadcast %cst_48 : f32 to vector<24x1xf32>
      %c0_49 = arith.constant 0 : index
      %c0_50 = arith.constant 0 : index
      %67 = vector.load %arg11[%c0_49, %c0_50] : memref<24x1xf32, #tpu.memory_space<vmem>>, vector<24x1xf32>
      tpu.vector_store %arg11[%c0_49, %c0_50], %66 {strides = array<i32>} : memref<24x1xf32, #tpu.memory_space<vmem>>, vector<24x1xf32>,
      %cst_51 = arith.constant 0.000000e+00 : f32
      %68 = vector.broadcast %cst_51 : f32 to vector<24x1xf32>
      %c0_52 = arith.constant 0 : index
      %c0_53 = arith.constant 0 : index
      %69 = vector.load %arg12[%c0_52, %c0_53] : memref<24x1xf32, #tpu.memory_space<vmem>>, vector<24x1xf32>
      tpu.vector_store %arg12[%c0_52, %c0_53], %68 {strides = array<i32>} : memref<24x1xf32, #tpu.memory_space<vmem>>, vector<24x1xf32>,
      %cst_54 = arith.constant 0xFF800000 : f32
      %70 = vector.broadcast %cst_54 : f32 to vector<24x1xf32>
      %c0_55 = arith.constant 0 : index
      %c0_56 = arith.constant 0 : index
      %71 = vector.load %arg13[%c0_55, %c0_56] : memref<24x1xf32, #tpu.memory_space<vmem>>, vector<24x1xf32>
      tpu.vector_store %arg13[%c0_55, %c0_56], %70 {strides = array<i32>} : memref<24x1xf32, #tpu.memory_space<vmem>>, vector<24x1xf32>,
      %c0_i32_57 = arith.constant 0 : i32
      %72 = vector.broadcast %c0_i32_57 : i32 to vector<24x1xi32>
      %c0_58 = arith.constant 0 : index
      %c0_59 = arith.constant 0 : index
      %73 = vector.load %arg14[%c0_58, %c0_59] : memref<24x1xi32, #tpu.memory_space<vmem>>, vector<24x1xi32>
      tpu.vector_store %arg14[%c0_58, %c0_59], %72 {strides = array<i32>} : memref<24x1xi32, #tpu.memory_space<vmem>>, vector<24x1xi32>,
      %cst_60 = arith.constant 0.000000e+00 : f32
      %74 = vector.broadcast %cst_60 : f32 to vector<24x1xf32>
      %c0_61 = arith.constant 0 : index
      %c0_62 = arith.constant 0 : index
      %75 = vector.load %arg15[%c0_61, %c0_62] : memref<24x1xf32, #tpu.memory_space<vmem>>, vector<24x1xf32>
      tpu.vector_store %arg15[%c0_61, %c0_62], %74 {strides = array<i32>} : memref<24x1xf32, #tpu.memory_space<vmem>>, vector<24x1xf32>,
    } else {
    }
    %c0 = arith.constant 0 : index
    %c0_1 = arith.constant 0 : index
    %3 = vector.load %arg10[%c0, %c0_1] : memref<24x16xf32, #tpu.memory_space<vmem>>, vector<24x16xf32>
    %c0_2 = arith.constant 0 : index
    %c0_3 = arith.constant 0 : index
    %4 = vector.load %arg6[%c0_2, %c0_3] : memref<16x32xbf16, #tpu.memory_space<vmem>>, vector<16x32xbf16>
    %5 = arith.truncf %3 : vector<24x16xf32> to vector<24x16xbf16>
    %cst = arith.constant dense<0.000000e+00> : vector<24x32xf32>
    %6 = tpu.matmul %5, %4, %cst {dimension_numbers = #tpu.dot_dimension_numbers<[1], [0], [0], [1], [0, 0, 1, 1], [], []>} : vector<24x16xbf16>, vector<16x32xbf16>, vector<24x32xf32> -> vector<24x32xf32>
    %c0_4 = arith.constant 0 : index
    %c0_5 = arith.constant 0 : index
    %7 = vector.load %arg7[%c0_4, %c0_5] : memref<1x32xf32, #tpu.memory_space<vmem>>, vector<1x32xf32>
    %8 = vector.broadcast %7 : vector<1x32xf32> to vector<24x32xf32>
    %9 = arith.addf %6, %8 : vector<24x32xf32>
    %c32_i32 = arith.constant 32 : i32
    %10 = arith.muli %arg1, %c32_i32 : i32
    %11 = tpu.iota {dimensions = array<i32: 1>} : vector<24x32xi32>
    %12 = vector.broadcast %10 : i32 to vector<24x32xi32>
    %13 = arith.addi %12, %11 : vector<24x32xi32>
    %cst_6 = arith.constant dense<0xFF800000> : vector<24xf32>
    %14 = vector.multi_reduction <maximumf>, %9, %cst_6 [1] : vector<24x32xf32> to vector<24xf32>
    %15 = vector.shape_cast %14 : vector<24xf32> to vector<24x1xf32>
    %16 = vector.broadcast %15 : vector<24x1xf32> to vector<24x32xf32>
    %17 = arith.cmpf oeq, %9, %16 : vector<24x32xf32>
    %c1073741824_i32 = arith.constant 1073741824 : i32
    %18 = vector.broadcast %c1073741824_i32 : i32 to vector<24x32xi32>
    %19 = arith.select %17, %13, %18 : vector<24x32xi1>, vector<24x32xi32>
    %cst_7 = arith.constant dense<2147483647> : vector<24xi32>
    %20 = vector.multi_reduction <minsi>, %19, %cst_7 [1] : vector<24x32xi32> to vector<24xi32>
    %21 = vector.shape_cast %20 : vector<24xi32> to vector<24x1xi32>
    %c0_8 = arith.constant 0 : index
    %c0_9 = arith.constant 0 : index
    %22 = vector.load %arg13[%c0_8, %c0_9] : memref<24x1xf32, #tpu.memory_space<vmem>>, vector<24x1xf32>
    %23 = arith.cmpf ogt, %15, %22 : vector<24x1xf32>
    %c0_10 = arith.constant 0 : index
    %c0_11 = arith.constant 0 : index
    %24 = vector.load %arg14[%c0_10, %c0_11] : memref<24x1xi32, #tpu.memory_space<vmem>>, vector<24x1xi32>
    %25 = arith.select %23, %21, %24 : vector<24x1xi1>, vector<24x1xi32>
    %c0_12 = arith.constant 0 : index
    %c0_13 = arith.constant 0 : index
    %26 = vector.load %arg14[%c0_12, %c0_13] : memref<24x1xi32, #tpu.memory_space<vmem>>, vector<24x1xi32>
    tpu.vector_store %arg14[%c0_12, %c0_13], %25 {strides = array<i32>} : memref<24x1xi32, #tpu.memory_space<vmem>>, vector<24x1xi32>,
    %c0_14 = arith.constant 0 : index
    %c0_15 = arith.constant 0 : index
    %27 = vector.load %arg13[%c0_14, %c0_15] : memref<24x1xf32, #tpu.memory_space<vmem>>, vector<24x1xf32>
    %28 = arith.select %23, %15, %27 : vector<24x1xi1>, vector<24x1xf32>
    %c0_16 = arith.constant 0 : index
    %c0_17 = arith.constant 0 : index
    %29 = vector.load %arg13[%c0_16, %c0_17] : memref<24x1xf32, #tpu.memory_space<vmem>>, vector<24x1xf32>
    tpu.vector_store %arg13[%c0_16, %c0_17], %28 {strides = array<i32>} : memref<24x1xf32, #tpu.memory_space<vmem>>, vector<24x1xf32>,
    %c0_18 = arith.constant 0 : index
    %c0_19 = arith.constant 0 : index
    %30 = vector.load %arg11[%c0_18, %c0_19] : memref<24x1xf32, #tpu.memory_space<vmem>>, vector<24x1xf32>
    %31 = arith.maximumf %30, %15 : vector<24x1xf32>
    %c0_20 = arith.constant 0 : index
    %c0_21 = arith.constant 0 : index
    %32 = vector.load %arg12[%c0_20, %c0_21] : memref<24x1xf32, #tpu.memory_space<vmem>>, vector<24x1xf32>
    %c0_22 = arith.constant 0 : index
    %c0_23 = arith.constant 0 : index
    %33 = vector.load %arg11[%c0_22, %c0_23] : memref<24x1xf32, #tpu.memory_space<vmem>>, vector<24x1xf32>
    %34 = arith.subf %33, %31 : vector<24x1xf32>
    %35 = math.exp %34 : vector<24x1xf32>
    %36 = arith.mulf %32, %35 : vector<24x1xf32>
    %37 = vector.broadcast %31 : vector<24x1xf32> to vector<24x32xf32>
    %38 = arith.subf %9, %37 : vector<24x32xf32>
    %39 = math.exp %38 : vector<24x32xf32>
    %cst_24 = arith.constant dense<0.000000e+00> : vector<24xf32>
    %40 = vector.multi_reduction <add>, %39, %cst_24 [1] : vector<24x32xf32> to vector<24xf32>
    %41 = vector.shape_cast %40 : vector<24xf32> to vector<24x1xf32>
    %42 = arith.addf %36, %41 : vector<24x1xf32>
    %c0_25 = arith.constant 0 : index
    %c0_26 = arith.constant 0 : index
    %43 = vector.load %arg12[%c0_25, %c0_26] : memref<24x1xf32, #tpu.memory_space<vmem>>, vector<24x1xf32>
    tpu.vector_store %arg12[%c0_25, %c0_26], %42 {strides = array<i32>} : memref<24x1xf32, #tpu.memory_space<vmem>>, vector<24x1xf32>,
    %c0_27 = arith.constant 0 : index
    %c0_28 = arith.constant 0 : index
    %44 = vector.load %arg11[%c0_27, %c0_28] : memref<24x1xf32, #tpu.memory_space<vmem>>, vector<24x1xf32>
    tpu.vector_store %arg11[%c0_27, %c0_28], %31 {strides = array<i32>} : memref<24x1xf32, #tpu.memory_space<vmem>>, vector<24x1xf32>,
    %c0_29 = arith.constant 0 : index
    %c0_30 = arith.constant 0 : index
    %45 = vector.load %arg3[%c0_29, %c0_30] : memref<24x1xi32, #tpu.memory_space<vmem>>, vector<24x1xi32>
    %46 = vector.broadcast %45 : vector<24x1xi32> to vector<24x32xi32>
    %47 = arith.cmpi eq, %13, %46 : vector<24x32xi32>
    %c0_31 = arith.constant 0 : index
    %c0_32 = arith.constant 0 : index
    %48 = vector.load %arg15[%c0_31, %c0_32] : memref<24x1xf32, #tpu.memory_space<vmem>>, vector<24x1xf32>
    %cst_33 = arith.constant 0.000000e+00 : f32
    %49 = vector.broadcast %cst_33 : f32 to vector<24x32xf32>
    %50 = arith.select %47, %9, %49 : vector<24x32xi1>, vector<24x32xf32>
    %cst_34 = arith.constant dense<0.000000e+00> : vector<24xf32>
    %51 = vector.multi_reduction <add>, %50, %cst_34 [1] : vector<24x32xf32> to vector<24xf32>
    %52 = vector.shape_cast %51 : vector<24xf32> to vector<24x1xf32>
    %53 = arith.addf %48, %52 : vector<24x1xf32>
    %c0_35 = arith.constant 0 : index
    %c0_36 = arith.constant 0 : index
    %54 = vector.load %arg15[%c0_35, %c0_36] : memref<24x1xf32, #tpu.memory_space<vmem>>, vector<24x1xf32>
    tpu.vector_store %arg15[%c0_35, %c0_36], %53 {strides = array<i32>} : memref<24x1xf32, #tpu.memory_space<vmem>>, vector<24x1xf32>,
    %c0_i32_37 = arith.constant 0 : i32
    %55 = arith.cmpi eq, %arg1, %c0_i32_37 : i32
    %56 = arith.extui %55 : i1 to i32
    %c0_i32_38 = arith.constant 0 : i32
    %57 = arith.cmpi ne, %56, %c0_i32_38 : i32
    scf.if %57 {
      %c0_39 = arith.constant 0 : index
      %c0_40 = arith.constant 0 : index
      %58 = vector.load %arg14[%c0_39, %c0_40] : memref<24x1xi32, #tpu.memory_space<vmem>>, vector<24x1xi32>
      %c0_41 = arith.constant 0 : index
      %c0_42 = arith.constant 0 : index
      %59 = vector.load %arg8[%c0_41, %c0_42] : memref<24x1xi32, #tpu.memory_space<vmem>>, vector<24x1xi32>
      tpu.vector_store %arg8[%c0_41, %c0_42], %58 {strides = array<i32>} : memref<24x1xi32, #tpu.memory_space<vmem>>, vector<24x1xi32>,
      %c0_43 = arith.constant 0 : index
      %c0_44 = arith.constant 0 : index
      %60 = vector.load %arg15[%c0_43, %c0_44] : memref<24x1xf32, #tpu.memory_space<vmem>>, vector<24x1xf32>
      %c0_45 = arith.constant 0 : index
      %c0_46 = arith.constant 0 : index
      %61 = vector.load %arg11[%c0_45, %c0_46] : memref<24x1xf32, #tpu.memory_space<vmem>>, vector<24x1xf32>
      %62 = arith.subf %60, %61 : vector<24x1xf32>
      %63 = math.exp %62 : vector<24x1xf32>
      %c0_47 = arith.constant 0 : index
      %c0_48 = arith.constant 0 : index
      %64 = vector.load %arg12[%c0_47, %c0_48] : memref<24x1xf32, #tpu.memory_space<vmem>>, vector<24x1xf32>
      %65 = arith.divf %63, %64 : vector<24x1xf32>
      %c0_49 = arith.constant 0 : index
      %c0_50 = arith.constant 0 : index
      %66 = vector.load %arg9[%c0_49, %c0_50] : memref<24x1xf32, #tpu.memory_space<vmem>>, vector<24x1xf32>
      tpu.vector_store %arg9[%c0_49, %c0_50], %65 {strides = array<i32>} : memref<24x1xf32, #tpu.memory_space<vmem>>, vector<24x1xf32>,
    } else {
    }
    return
  }
  func.func @transform_0(%arg0: i32, %arg1: i32) -> (i32, i32) {
    %c0_i32 = arith.constant 0 : i32
    %c0_i32_0 = arith.constant 0 : i32
    return %arg0, %c0_i32 : i32, i32
  }
  func.func @transform_1(%arg0: i32, %arg1: i32) -> (i32, i32) {
    %c0_i32 = arith.constant 0 : i32
    %c0_i32_0 = arith.constant 0 : i32
    return %arg0, %c0_i32 : i32, i32
  }
  func.func @transform_2(%arg0: i32, %arg1: i32) -> (i32, i32) {
    %c0_i32 = arith.constant 0 : i32
    %c0_i32_0 = arith.constant 0 : i32
    %c0_i32_1 = arith.constant 0 : i32
    return %c0_i32, %c0_i32_0 : i32, i32
  }
  func.func @transform_3(%arg0: i32, %arg1: i32) -> (i32, i32) {
    %c0_i32 = arith.constant 0 : i32
    %c0_i32_0 = arith.constant 0 : i32
    %c0_i32_1 = arith.constant 0 : i32
    return %c0_i32, %c0_i32_0 : i32, i32
  }
  func.func @transform_4(%arg0: i32, %arg1: i32) -> (i32, i32) {
    %c0_i32 = arith.constant 0 : i32
    %c0_i32_0 = arith.constant 0 : i32
    return %c0_i32, %arg1 : i32, i32
  }
  func.func @transform_5(%arg0: i32, %arg1: i32) -> (i32, i32) {
    %c0_i32 = arith.constant 0 : i32
    %c0_i32_0 = arith.constant 0 : i32
    return %c0_i32, %arg1 : i32, i32
  }
  func.func @transform_6(%arg0: i32, %arg1: i32) -> (i32, i32) {
    %c0_i32 = arith.constant 0 : i32
    %c0_i32_0 = arith.constant 0 : i32
    return %arg0, %c0_i32 : i32, i32
  }
  func.func @transform_7(%arg0: i32, %arg1: i32) -> (i32, i32) {
    %c0_i32 = arith.constant 0 : i32
    %c0_i32_0 = arith.constant 0 : i32
    return %arg0, %c0_i32 : i32, i32
  }
}

</mosaic_0001>

<llo_original>
// kernel: rnn_forward.5
$region0: #{rnn_forward.5}
  #allocation0 [shape = 'u32[]', space=smem, size = 0x4, offset = 0x4, fixed_abs, tag = 'smem constant byte address 0x4 - core index']
  #allocation1 [shape = 'u32[144,128]{1,0:T(1,128)}', space=vmem, size = 0x12000, scoped, tag = 'internal scratch']
  %s0 = inlined_call_operand.vmem [shape: f32[16,16], index: 0, kind: input, shape index: {}]
  %s1 = inlined_call_operand.vmem [shape: bf16[16,128], index: 1, kind: input, shape index: {}]
  %s2 = inlined_call_operand.vmem [shape: f32[1,128], index: 2, kind: input, shape index: {}]
  %s3 = inlined_call_operand.vmem [shape: f32[16,128], index: 3, kind: output, shape index: {}]
  %s4 = sld [smem:[#allocation0]]
  $region22: #{rnn_forward.5} parent=0
    _
  %s6 = ssub.s32 1, %s4
  %s7 = scalar_select 0, %s6, %s4
  // Predicated region
  $region2: #{rnn_forward.5} parent=0 // pred_check
    _
  $region3: #{rnn_forward.5} parent=0 // pred_check_branch
    %9 = sbr.rel (0) target = $region5
  $region4: #{rnn_forward.5} parent=0 // pred_region
    _
  $region5: #{rnn_forward.5} parent=0 // pred_fallthru
    _
  // Predicated region
  $region6: #{rnn_forward.5} parent=0 // pred_check
    _
  $region7: #{rnn_forward.5} parent=0 // pred_check_branch
    %11 = sbr.rel (0) target = $region9
  $region8: #{rnn_forward.5} parent=0 // pred_region
    _
  $region9: #{rnn_forward.5} parent=0 // pred_fallthru
    _
  // Predicated region
  $region10: #{rnn_forward.5} parent=0 // pred_check
    _
  $region11: #{rnn_forward.5} parent=0 // pred_check_branch
    %13 = sbr.rel (0) target = $region13
  $region12: #{rnn_forward.5} parent=0 // pred_region
    _
  $region13: #{rnn_forward.5} parent=0 // pred_fallthru
    _
  %v15 = vld [vmem:[%s0] sm:$0xff]
  %v16 = vld [vmem:[%s0 + $0x8] sm:$0xff]
  %v17 = vld [vmem:[%s1] sm:$0xf]
  %v18 = vld [vmem:[%s1 + $0x4] sm:$0xf]
  %v19 = vpack.c.bf16 %v16, %v15
  %v20 = vld [vmem:[%s2] sm:$0x1]
  %v22 = vlaneseq
  %v23 = vshrl.u32 %v22, 7
  %v24 = vsub.s32 0, %v23
  %v25 = vrot.slane %v20, %v24
  %v29 = vunpack.c.l.b16 %v17
  %v30 = vunpack.c.l.b16 %v18
  %v31 = vpack.c.b16 %v30, %v29
  %vm33 = vcmask 130048
  %v35 = vsel %vm33, %v19, 0
  %37 = vmatprep.subr.bf16.mxu0 0
  %38 = vmatpush1.bf16.msra.mxu0 %v31
  %39 = vmatprep.subr.bf16.mxu0 0
  %40 = vmatpush1.bf16.msra.mxu0 0
  %41 = vmatprep.subr.bf16.mxu0 0
  %42 = vmatpush1.bf16.msra.mxu0 0
  %43 = vmatprep.subr.bf16.mxu0 0
  %44 = vmatpush1.bf16.msra.mxu0 0
  %45 = vmatprep.subr.bf16.mxu0 0
  %46 = vmatpush1.bf16.msra.mxu0 0
  %47 = vmatprep.subr.bf16.mxu0 0
  %48 = vmatpush1.bf16.msra.mxu0 0
  %49 = vmatprep.subr.bf16.mxu0 0
  %50 = vmatpush1.bf16.msra.mxu0 0
  %51 = vmatprep.subr.bf16.mxu0 0
  %52 = vmatpush1.bf16.msra.mxu0 0
  %53 = vmatprep.subr.bf16.mxu0 0
  %54 = vmatpush1.bf16.msra.mxu0 0
  %55 = vmatprep.subr.bf16.mxu0 0
  %56 = vmatpush1.bf16.msra.mxu0 0
  %57 = vmatprep.subr.bf16.mxu0 0
  %58 = vmatpush1.bf16.msra.mxu0 0
  %59 = vmatprep.subr.bf16.mxu0 0
  %60 = vmatpush1.bf16.msra.mxu0 0
  %61 = vmatprep.subr.bf16.mxu0 0
  %62 = vmatpush1.bf16.msra.mxu0 0
  %63 = vmatprep.subr.bf16.mxu0 0
  %64 = vmatpush1.bf16.msra.mxu0 0
  %65 = vmatprep.subr.bf16.mxu0 0
  %66 = vmatpush1.bf16.msra.mxu0 0
  %67 = vmatprep.subr.bf16.mxu0 0
  %68 = vmatpush1.bf16.msra.mxu0 0
  %69 = vmatprep.mubr.bf16.mxu0 0
  %70 = vmatmul.mubr.bf16.gmra.mrb[0].mxu0 %v35
  %v71 = vpop.f32.mrb[0].mxu0
  %v72 = vadd.f32 %v25, %v71
  %v73 = vpop.f32.mrb[0].mxu0
  %v74 = vpop.f32.mrb[0].mxu0
  %v75 = vadd.f32 %v25, %v74
  %v76 = vpop.f32.mrb[0].mxu0
  %77 = vdwg.mxu0
  %78 = vst [vmem:[%s3] sm:$0xff] %v72
  %79 = vst [vmem:[%s3 + $0x8] sm:$0xff] %v75
  // Predicated region
  $region14: #{rnn_forward.5} parent=0 // pred_check
    _
  $region15: #{rnn_forward.5} parent=0 // pred_check_branch
    %81 = sbr.rel (0) target = $region17
  $region16: #{rnn_forward.5} parent=0 // pred_region
    _
  $region17: #{rnn_forward.5} parent=0 // pred_fallthru
    _
  // Predicated region
  $region18: #{rnn_forward.5} parent=0 // pred_check
    _
  $region19: #{rnn_forward.5} parent=0 // pred_check_branch
    %83 = sbr.rel (0) target = $region21
  $region20: #{rnn_forward.5} parent=0 // pred_region
    _
  $region21: #{rnn_forward.5} parent=0 // pred_fallthru
    _

// kernel: rnn_forward.6
$region0: #{rnn_forward.6}
  #allocation0 [shape = 'u32[]', space=smem, size = 0x4, offset = 0x4, fixed_abs, tag = 'smem constant byte address 0x4 - core index']
  #allocation1 [shape = 'u32[144,128]{1,0:T(1,128)}', space=vmem, size = 0x12000, scoped, tag = 'internal scratch']
  %s0 = inlined_call_operand.vmem [shape: f32[24,16], index: 0, kind: input, shape index: {}]
  %s1 = inlined_call_operand.vmem [shape: bf16[16,128], index: 1, kind: input, shape index: {}]
  %s2 = inlined_call_operand.vmem [shape: f32[1,128], index: 2, kind: input, shape index: {}]
  %s3 = inlined_call_operand.vmem [shape: f32[24,128], index: 3, kind: output, shape index: {}]
  %s4 = sld [smem:[#allocation0]]
  $region22: #{rnn_forward.6} parent=0
    _
  %s6 = ssub.s32 1, %s4
  %s7 = scalar_select 0, %s6, %s4
  // Predicated region
  $region2: #{rnn_forward.6} parent=0 // pred_check
    _
  $region3: #{rnn_forward.6} parent=0 // pred_check_branch
    %9 = sbr.rel (0) target = $region5
  $region4: #{rnn_forward.6} parent=0 // pred_region
    _
  $region5: #{rnn_forward.6} parent=0 // pred_fallthru
    _
  // Predicated region
  $region6: #{rnn_forward.6} parent=0 // pred_check
    _
  $region7: #{rnn_forward.6} parent=0 // pred_check_branch
    %11 = sbr.rel (0) target = $region9
  $region8: #{rnn_forward.6} parent=0 // pred_region
    _
  $region9: #{rnn_forward.6} parent=0 // pred_fallthru
    _
  // Predicated region
  $region10: #{rnn_forward.6} parent=0 // pred_check
    _
  $region11: #{rnn_forward.6} parent=0 // pred_check_branch
    %13 = sbr.rel (0) target = $region13
  $region12: #{rnn_forward.6} parent=0 // pred_region
    _
  $region13: #{rnn_forward.6} parent=0 // pred_fallthru
    _
  %v15 = vld [vmem:[%s0] sm:$0xff]
  %v16 = vld [vmem:[%s0 + $0x8] sm:$0xff]
  %v17 = vld [vmem:[%s0 + $0x10] sm:$0xff]
  %v18 = vld [vmem:[%s1] sm:$0xf]
  %v19 = vld [vmem:[%s1 + $0x4] sm:$0xf]
  %v20 = vpack.c.bf16 %v16, %v15
  %v21 = vpack.c.bf16 %v17, %v17
  %v22 = vld [vmem:[%s2] sm:$0x1]
  %v24 = vlaneseq
  %v25 = vshrl.u32 %v24, 7
  %v26 = vsub.s32 0, %v25
  %v27 = vrot.slane %v22, %v26
  %v31 = vunpack.c.l.b16 %v18
  %v32 = vunpack.c.l.b16 %v19
  %v33 = vpack.c.b16 %v32, %v31
  %vm35 = vcmask 130048
  %v37 = vsel %vm35, %v20, 0
  %v40 = vsel %vm35, %v21, 0
  %42 = vmatprep.subr.bf16.mxu0 0
  %43 = vmatpush1.bf16.msra.mxu0 %v33
  %44 = vmatprep.subr.bf16.mxu0 0
  %45 = vmatpush1.bf16.msra.mxu0 0
  %46 = vmatprep.subr.bf16.mxu0 0
  %47 = vmatpush1.bf16.msra.mxu0 0
  %48 = vmatprep.subr.bf16.mxu0 0
  %49 = vmatpush1.bf16.msra.mxu0 0
  %50 = vmatprep.subr.bf16.mxu0 0
  %51 = vmatpush1.bf16.msra.mxu0 0
  %52 = vmatprep.subr.bf16.mxu0 0
  %53 = vmatpush1.bf16.msra.mxu0 0
  %54 = vmatprep.subr.bf16.mxu0 0
  %55 = vmatpush1.bf16.msra.mxu0 0
  %56 = vmatprep.subr.bf16.mxu0 0
  %57 = vmatpush1.bf16.msra.mxu0 0
  %58 = vmatprep.subr.bf16.mxu0 0
  %59 = vmatpush1.bf16.msra.mxu0 0
  %60 = vmatprep.subr.bf16.mxu0 0
  %61 = vmatpush1.bf16.msra.mxu0 0
  %62 = vmatprep.subr.bf16.mxu0 0
  %63 = vmatpush1.bf16.msra.mxu0 0
  %64 = vmatprep.subr.bf16.mxu0 0
  %65 = vmatpush1.bf16.msra.mxu0 0
  %66 = vmatprep.subr.bf16.mxu0 0
  %67 = vmatpush1.bf16.msra.mxu0 0
  %68 = vmatprep.subr.bf16.mxu0 0
  %69 = vmatpush1.bf16.msra.mxu0 0
  %70 = vmatprep.subr.bf16.mxu0 0
  %71 = vmatpush1.bf16.msra.mxu0 0
  %72 = vmatprep.subr.bf16.mxu0 0
  %73 = vmatpush1.bf16.msra.mxu0 0
  %74 = vmatprep.mubr.bf16.mxu0 0
  %75 = vmatmul.mubr.bf16.gmra.mrb[0].mxu0 %v37
  %v76 = vpop.f32.mrb[0].mxu0
  %v77 = vadd.f32 %v27, %v76
  %v78 = vpop.f32.mrb[0].mxu0
  %v79 = vpop.f32.mrb[0].mxu0
  %v80 = vadd.f32 %v27, %v79
  %v81 = vpop.f32.mrb[0].mxu0
  %82 = vmatprep.mubr.bf16.mxu0 0
  %83 = vmatmul.mubr.bf16.gmra.mrb[0].mxu0 %v40
  %v84 = vpop.f32.mrb[0].mxu0
  %v85 = vadd.f32 %v27, %v84
  %v86 = vpop.f32.mrb[0].mxu0
  %v87 = vpop.f32.mrb[0].mxu0
  %v88 = vpop.f32.mrb[0].mxu0
  %89 = vdwg.mxu0
  %90 = vst [vmem:[%s3] sm:$0xff] %v77
  %91 = vst [vmem:[%s3 + $0x8] sm:$0xff] %v80
  %92 = vst [vmem:[%s3 + $0x10] sm:$0xff] %v85
  // Predicated region
  $region14: #{rnn_forward.6} parent=0 // pred_check
    _
  $region15: #{rnn_forward.6} parent=0 // pred_check_branch
    %94 = sbr.rel (0) target = $region17
  $region16: #{rnn_forward.6} parent=0 // pred_region
    _
  $region17: #{rnn_forward.6} parent=0 // pred_fallthru
    _
  // Predicated region
  $region18: #{rnn_forward.6} parent=0 // pred_check
    _
  $region19: #{rnn_forward.6} parent=0 // pred_check_branch
    %96 = sbr.rel (0) target = $region21
  $region20: #{rnn_forward.6} parent=0 // pred_region
    _
  $region21: #{rnn_forward.6} parent=0 // pred_fallthru
    _

// kernel: rnn_forward.8
$region0: #{rnn_forward.8}
  #allocation0 [shape = 'u32[]', space=smem, size = 0x4, offset = 0x4, fixed_abs, tag = 'smem constant byte address 0x4 - core index']
  #allocation1 [shape = 'u32[144,128]{1,0:T(1,128)}', space=vmem, size = 0x12000, scoped, tag = 'internal scratch']
  #allocation2 [shape = 'f32[2,32]{1,0:T(2,128)}', space=vmem, size = 0x400, scoped, tag = 'scratch operand']
  #allocation3 [shape = 'f32[2,32]{1,0:T(2,128)}', space=vmem, size = 0x400, scoped, tag = 'scratch operand']
  %s0 = inlined_call_operand.vmem [shape: f32[10,2,128], index: 0, kind: input, shape index: {}]
  %s1 = inlined_call_operand.vmem [shape: bf16[32,128], index: 1, kind: input, shape index: {}]
  %s2 = inlined_call_operand.vmem [shape: f32[2,32], index: 2, kind: input, shape index: {}]
  %s3 = inlined_call_operand.vmem [shape: f32[2,32], index: 3, kind: input, shape index: {}]
  %s4 = inlined_call_operand.vmem [shape: f32[10,2,32], index: 4, kind: output, shape index: {}]
  %s5 = sld [smem:[#allocation0]]
  $region30: #{rnn_forward.8} parent=0
    _
  %s7 = ssub.s32 1, %s5
  %s8 = scalar_select 0, %s7, %s5
  // Predicated region
  $region2: #{rnn_forward.8} parent=0 // pred_check
    _
  $region3: #{rnn_forward.8} parent=0 // pred_check_branch
    %10 = sbr.rel (0) target = $region5
  $region4: #{rnn_forward.8} parent=0 // pred_region
    _
  $region5: #{rnn_forward.8} parent=0 // pred_fallthru
    _
  // Predicated region
  $region6: #{rnn_forward.8} parent=0 // pred_check
    _
  $region7: #{rnn_forward.8} parent=0 // pred_check_branch
    %12 = sbr.rel (0) target = $region9
  $region8: #{rnn_forward.8} parent=0 // pred_region
    _
  $region9: #{rnn_forward.8} parent=0 // pred_fallthru
    _
  // Predicated region
  $region10: #{rnn_forward.8} parent=0 // pred_check
    _
  $region11: #{rnn_forward.8} parent=0 // pred_check_branch
    %14 = sbr.rel (0) target = $region13
  $region12: #{rnn_forward.8} parent=0 // pred_region
    _
  $region13: #{rnn_forward.8} parent=0 // pred_fallthru
    _
  // Predicated region
  $region14: #{rnn_forward.8} parent=0 // pred_check
    _
  $region15: #{rnn_forward.8} parent=0 // pred_check_branch
    %16 = sbr.rel (0) target = $region17
  $region16: #{rnn_forward.8} parent=0 // pred_region
    _
  $region17: #{rnn_forward.8} parent=0 // pred_fallthru
    _
  %p18 = scmp.eq.s32.totalorder 0, 0
  // Predicated region
  $region18: #{rnn_forward.8} parent=0 // pred_check
    %p19 = pneg %p18
  $region19: #{rnn_forward.8} parent=0 // pred_check_branch
    %21 = sbr.rel (%p19) target = $region21
  $region20: #{rnn_forward.8} parent=0 // pred_region
    %v22 = vld [vmem:[%s2] sm:$0x3]
    %vm23 = vcmask 254976
    %24 = vst.msk [vmem:[#allocation2] sm:$0x3] %vm23, %v22
    %v25 = vld [vmem:[%s3] sm:$0x3]
    %26 = vst.msk [vmem:[#allocation3] sm:$0x3] %vm23, %v25
  $region21: #{rnn_forward.8} parent=0 // pred_fallthru
    _
  %v27 = vld [vmem:[%s1] sm:$0xf]
  %v28 = vld [vmem:[%s1 + $0x4] sm:$0xf]
  %v29 = vld [vmem:[%s1 + $0x8] sm:$0xf]
  %v30 = vld [vmem:[%s1 + $0xc] sm:$0xf]
  %v31 = vld [vmem:[#allocation2] sm:$0x3]
  %v32 = vld [vmem:[#allocation3] sm:$0x3]
  %v33 = vld [vmem:[%s0] sm:$0x3]
  %v34 = vpack.c.bf16 %v31, %v31
  %v39 = vunpack.c.l.b16 %v27
  %v40 = vunpack.c.l.b16 %v28
  %v41 = vunpack.c.l.b16 %v29
  %v42 = vunpack.c.l.b16 %v30
  %v43 = vpack.c.b16 %v40, %v39
  %v44 = vpack.c.b16 %v42, %v41
  %vm47 = vcmask 261120
  %v49 = vsel %vm47, %v34, 0
  %51 = vmatprep.subr.bf16.mxu0 0
  %52 = vmatpush1.bf16.msra.mxu0 %v43
  %53 = vmatprep.subr.bf16.mxu0 0
  %54 = vmatpush1.bf16.msra.mxu0 %v44
  %55 = vmatprep.subr.bf16.mxu0 0
  %56 = vmatpush1.bf16.msra.mxu0 0
  %57 = vmatprep.subr.bf16.mxu0 0
  %58 = vmatpush1.bf16.msra.mxu0 0
  %59 = vmatprep.subr.bf16.mxu0 0
  %60 = vmatpush1.bf16.msra.mxu0 0
  %61 = vmatprep.subr.bf16.mxu0 0
  %62 = vmatpush1.bf16.msra.mxu0 0
  %63 = vmatprep.subr.bf16.mxu0 0
  %64 = vmatpush1.bf16.msra.mxu0 0
  %65 = vmatprep.subr.bf16.mxu0 0
  %66 = vmatpush1.bf16.msra.mxu0 0
  %67 = vmatprep.subr.bf16.mxu0 0
  %68 = vmatpush1.bf16.msra.mxu0 0
  %69 = vmatprep.subr.bf16.mxu0 0
  %70 = vmatpush1.bf16.msra.mxu0 0
  %71 = vmatprep.subr.bf16.mxu0 0
  %72 = vmatpush1.bf16.msra.mxu0 0
  %73 = vmatprep.subr.bf16.mxu0 0
  %74 = vmatpush1.bf16.msra.mxu0 0
  %75 = vmatprep.subr.bf16.mxu0 0
  %76 = vmatpush1.bf16.msra.mxu0 0
  %77 = vmatprep.subr.bf16.mxu0 0
  %78 = vmatpush1.bf16.msra.mxu0 0
  %79 = vmatprep.subr.bf16.mxu0 0
  %80 = vmatpush1.bf16.msra.mxu0 0
  %81 = vmatprep.subr.bf16.mxu0 0
  %82 = vmatpush1.bf16.msra.mxu0 0
  %83 = vmatprep.mubr.bf16.mxu0 0
  %84 = vmatmul.mubr.bf16.gmra.mrb[0].mxu0 %v49
  %v85 = vpop.f32.mrb[0].mxu0
  %v86 = vadd.f32 0.0, %v85
  %v87 = vpop.f32.mrb[0].mxu0
  %v88 = vpop.f32.mrb[0].mxu0
  %v89 = vpop.f32.mrb[0].mxu0
  %90 = vdwg.mxu0
  %v91 = vadd.f32 %v33, %v86
  %v92 = vxor.u32 %v91, 2147483648
  %v93 = vmul.f32 %v92, 1.442695
  %v94 = vpow.pop %v93
  %v95 = vadd.f32 %v94, 1.0
  %v96 = vrcp.pop %v95
  %v97 = vmul.f32 1.0, %v96
  %v98 = vtanh.pop %v91
  %100 = vrot.lane.b32.xlu0 %v32, 32
  %v101 = vpop.permute.xlu0 %100
  %v103 = vmul.f32 %v97, %v101
  %105 = vrot.lane.b32.xlu0 %v98, 64
  %v106 = vpop.permute.xlu0 %105
  %v108 = vmul.f32 %v97, %v106
  %110 = vrot.lane.b32.xlu0 %v108, 32
  %v111 = vpop.permute.xlu0 %110
  %v113 = vadd.f32 %v103, %v111
  %v114 = vtanh.pop %v113
  %116 = vrot.lane.b32.xlu0 %v114, 64
  %v117 = vpop.permute.xlu0 %116
  %v119 = vmul.f32 %v97, %v117
  %121 = vrot.lane.b32.xlu0 %v119, 32
  %v122 = vpop.permute.xlu0 %121
  %vm124 = vcmask 254976
  %125 = vst.msk [vmem:[%s4] sm:$0x3] %vm124, %v122
  %s126 = scalar_lea.vmem %s0, 2
  %v127 = vld [vmem:[%s126] sm:$0x3]
  %v128 = vpack.c.bf16 %v119, %v119
  %130 = vrot.lane.b32.xlu0 %v128, 32
  %v131 = vpop.permute.xlu0 %130
  %v133 = vsel %vm47, %v131, 0
  %135 = vmatprep.subr.bf16.mxu0 0
  %136 = vmatpush1.bf16.msra.mxu0 %v43
  %137 = vmatprep.subr.bf16.mxu0 0
  %138 = vmatpush1.bf16.msra.mxu0 %v44
  %139 = vmatprep.subr.bf16.mxu0 0
  %140 = vmatpush1.bf16.msra.mxu0 0
  %141 = vmatprep.subr.bf16.mxu0 0
  %142 = vmatpush1.bf16.msra.mxu0 0
  %143 = vmatprep.subr.bf16.mxu0 0
  %144 = vmatpush1.bf16.msra.mxu0 0
  %145 = vmatprep.subr.bf16.mxu0 0
  %146 = vmatpush1.bf16.msra.mxu0 0
  %147 = vmatprep.subr.bf16.mxu0 0
  %148 = vmatpush1.bf16.msra.mxu0 0
  %149 = vmatprep.subr.bf16.mxu0 0
  %150 = vmatpush1.bf16.msra.mxu0 0
  %151 = vmatprep.subr.bf16.mxu0 0
  %152 = vmatpush1.bf16.msra.mxu0 0
  %153 = vmatprep.subr.bf16.mxu0 0
  %154 = vmatpush1.bf16.msra.mxu0 0
  %155 = vmatprep.subr.bf16.mxu0 0
  %156 = vmatpush1.bf16.msra.mxu0 0
  %157 = vmatprep.subr.bf16.mxu0 0
  %158 = vmatpush1.bf16.msra.mxu0 0
  %159 = vmatprep.subr.bf16.mxu0 0
  %160 = vmatpush1.bf16.msra.mxu0 0
  %161 = vmatprep.subr.bf16.mxu0 0
  %162 = vmatpush1.bf16.msra.mxu0 0
  %163 = vmatprep.subr.bf16.mxu0 0
  %164 = vmatpush1.bf16.msra.mxu0 0
  %165 = vmatprep.subr.bf16.mxu0 0
  %166 = vmatpush1.bf16.msra.mxu0 0
  %167 = vmatprep.mubr.bf16.mxu0 0
  %168 = vmatmul.mubr.bf16.gmra.mrb[0].mxu0 %v133
  %v169 = vpop.f32.mrb[0].mxu0
  %v170 = vadd.f32 0.0, %v169
  %v171 = vpop.f32.mrb[0].mxu0
  %v172 = vpop.f32.mrb[0].mxu0
  %v173 = vpop.f32.mrb[0].mxu0
  %174 = vdwg.mxu0
  %v175 = vadd.f32 %v127, %v170
  %v176 = vxor.u32 %v175, 2147483648
  %v177 = vmul.f32 %v176, 1.442695
  %v178 = vpow.pop %v177
  %v179 = vadd.f32 %v178, 1.0
  %v180 = vrcp.pop %v179
  %v181 = vmul.f32 1.0, %v180
  %v182 = vtanh.pop %v175
  %v183 = vmul.f32 %v181, %v113
  %185 = vrot.lane.b32.xlu0 %v182, 64
  %v186 = vpop.permute.xlu0 %185
  %v188 = vmul.f32 %v181, %v186
  %190 = vrot.lane.b32.xlu0 %v188, 32
  %v191 = vpop.permute.xlu0 %190
  %v193 = vadd.f32 %v183, %v191
  %v194 = vtanh.pop %v193
  %196 = vrot.lane.b32.xlu0 %v194, 64
  %v197 = vpop.permute.xlu0 %196
  %v199 = vmul.f32 %v181, %v197
  %201 = vrot.lane.b32.xlu0 %v199, 32
  %v202 = vpop.permute.xlu0 %201
  %s204 = scalar_lea.vmem %s4, 2
  %205 = vst.msk [vmem:[%s204] sm:$0x3] %vm124, %v202
  %s206 = scalar_lea.vmem %s0, 4
  %v207 = vld [vmem:[%s206] sm:$0x3]
  %v208 = vpack.c.bf16 %v199, %v199
  %210 = vrot.lane.b32.xlu0 %v208, 32
  %v211 = vpop.permute.xlu0 %210
  %v213 = vsel %vm47, %v211, 0
  %215 = vmatprep.subr.bf16.mxu0 0
  %216 = vmatpush1.bf16.msra.mxu0 %v43
  %217 = vmatprep.subr.bf16.mxu0 0
  %218 = vmatpush1.bf16.msra.mxu0 %v44
  %219 = vmatprep.subr.bf16.mxu0 0
  %220 = vmatpush1.bf16.msra.mxu0 0
  %221 = vmatprep.subr.bf16.mxu0 0
  %222 = vmatpush1.bf16.msra.mxu0 0
  %223 = vmatprep.subr.bf16.mxu0 0
  %224 = vmatpush1.bf16.msra.mxu0 0
  %225 = vmatprep.subr.bf16.mxu0 0
  %226 = vmatpush1.bf16.msra.mxu0 0
  %227 = vmatprep.subr.bf16.mxu0 0
  %228 = vmatpush1.bf16.msra.mxu0 0
  %229 = vmatprep.subr.bf16.mxu0 0
  %230 = vmatpush1.bf16.msra.mxu0 0
  %231 = vmatprep.subr.bf16.mxu0 0
  %232 = vmatpush1.bf16.msra.mxu0 0
  %233 = vmatprep.subr.bf16.mxu0 0
  %234 = vmatpush1.bf16.msra.mxu0 0
  %235 = vmatprep.subr.bf16.mxu0 0
  %236 = vmatpush1.bf16.msra.mxu0 0
  %237 = vmatprep.subr.bf16.mxu0 0
  %238 = vmatpush1.bf16.msra.mxu0 0
  %239 = vmatprep.subr.bf16.mxu0 0
  %240 = vmatpush1.bf16.msra.mxu0 0
  %241 = vmatprep.subr.bf16.mxu0 0
  %242 = vmatpush1.bf16.msra.mxu0 0
  %243 = vmatprep.subr.bf16.mxu0 0
  %244 = vmatpush1.bf16.msra.mxu0 0
  %245 = vmatprep.subr.bf16.mxu0 0
  %246 = vmatpush1.bf16.msra.mxu0 0
  %247 = vmatprep.mubr.bf16.mxu0 0
  %248 = vmatmul.mubr.bf16.gmra.mrb[0].mxu0 %v213
  %v249 = vpop.f32.mrb[0].mxu0
  %v250 = vadd.f32 0.0, %v249
  %v251 = vpop.f32.mrb[0].mxu0
  %v252 = vpop.f32.mrb[0].mxu0
  %v253 = vpop.f32.mrb[0].mxu0
  %254 = vdwg.mxu0
  %v255 = vadd.f32 %v207, %v250
  %v256 = vxor.u32 %v255, 2147483648
  %v257 = vmul.f32 %v256, 1.442695
  %v258 = vpow.pop %v257
  %v259 = vadd.f32 %v258, 1.0
  %v260 = vrcp.pop %v259
  %v261 = vmul.f32 1.0, %v260
  %v262 = vtanh.pop %v255
  %v263 = vmul.f32 %v261, %v193
  %265 = vrot.lane.b32.xlu0 %v262, 64
  %v266 = vpop.permute.xlu0 %265
  %v268 = vmul.f32 %v261, %v266
  %270 = vrot.lane.b32.xlu0 %v268, 32
  %v271 = vpop.permute.xlu0 %270
  %v273 = vadd.f32 %v263, %v271
  %v274 = vtanh.pop %v273
  %276 = vrot.lane.b32.xlu0 %v274, 64
  %v277 = vpop.permute.xlu0 %276
  %v279 = vmul.f32 %v261, %v277
  %281 = vrot.lane.b32.xlu0 %v279, 32
  %v282 = vpop.permute.xlu0 %281
  %s284 = scalar_lea.vmem %s4, 4
  %285 = vst.msk [vmem:[%s284] sm:$0x3] %vm124, %v282
  %s286 = scalar_lea.vmem %s0, 6
  %v287 = vld [vmem:[%s286] sm:$0x3]
  %v288 = vpack.c.bf16 %v279, %v279
  %290 = vrot.lane.b32.xlu0 %v288, 32
  %v291 = vpop.permute.xlu0 %290
  %v293 = vsel %vm47, %v291, 0
  %295 = vmatprep.subr.bf16.mxu0 0
  %296 = vmatpush1.bf16.msra.mxu0 %v43
  %297 = vmatprep.subr.bf16.mxu0 0
  %298 = vmatpush1.bf16.msra.mxu0 %v44
  %299 = vmatprep.subr.bf16.mxu0 0
  %300 = vmatpush1.bf16.msra.mxu0 0
  %301 = vmatprep.subr.bf16.mxu0 0
  %302 = vmatpush1.bf16.msra.mxu0 0
  %303 = vmatprep.subr.bf16.mxu0 0
  %304 = vmatpush1.bf16.msra.mxu0 0
  %305 = vmatprep.subr.bf16.mxu0 0
  %306 = vmatpush1.bf16.msra.mxu0 0
  %307 = vmatprep.subr.bf16.mxu0 0
  %308 = vmatpush1.bf16.msra.mxu0 0
  %309 = vmatprep.subr.bf16.mxu0 0
  %310 = vmatpush1.bf16.msra.mxu0 0
  %311 = vmatprep.subr.bf16.mxu0 0
  %312 = vmatpush1.bf16.msra.mxu0 0
  %313 = vmatprep.subr.bf16.mxu0 0
  %314 = vmatpush1.bf16.msra.mxu0 0
  %315 = vmatprep.subr.bf16.mxu0 0
  %316 = vmatpush1.bf16.msra.mxu0 0
  %317 = vmatprep.subr.bf16.mxu0 0
  %318 = vmatpush1.bf16.msra.mxu0 0
  %319 = vmatprep.subr.bf16.mxu0 0
  %320 = vmatpush1.bf16.msra.mxu0 0
  %321 = vmatprep.subr.bf16.mxu0 0
  %322 = vmatpush1.bf16.msra.mxu0 0
  %323 = vmatprep.subr.bf16.mxu0 0
  %324 = vmatpush1.bf16.msra.mxu0 0
  %325 = vmatprep.subr.bf16.mxu0 0
  %326 = vmatpush1.bf16.msra.mxu0 0
  %327 = vmatprep.mubr.bf16.mxu0 0
  %328 = vmatmul.mubr.bf16.gmra.mrb[0].mxu0 %v293
  %v329 = vpop.f32.mrb[0].mxu0
  %v330 = vadd.f32 0.0, %v329
  %v331 = vpop.f32.mrb[0].mxu0
  %v332 = vpop.f32.mrb[0].mxu0
  %v333 = vpop.f32.mrb[0].mxu0
  %334 = vdwg.mxu0
  %v335 = vadd.f32 %v287, %v330
  %v336 = vxor.u32 %v335, 2147483648
  %v337 = vmul.f32 %v336, 1.442695
  %v338 = vpow.pop %v337
  %v339 = vadd.f32 %v338, 1.0
  %v340 = vrcp.pop %v339
  %v341 = vmul.f32 1.0, %v340
  %v342 = vtanh.pop %v335
  %v343 = vmul.f32 %v341, %v273
  %345 = vrot.lane.b32.xlu0 %v342, 64
  %v346 = vpop.permute.xlu0 %345
  %v348 = vmul.f32 %v341, %v346
  %350 = vrot.lane.b32.xlu0 %v348, 32
  %v351 = vpop.permute.xlu0 %350
  %v353 = vadd.f32 %v343, %v351
  %v354 = vtanh.pop %v353
  %356 = vrot.lane.b32.xlu0 %v354, 64
  %v357 = vpop.permute.xlu0 %356
  %v359 = vmul.f32 %v341, %v357
  %361 = vrot.lane.b32.xlu0 %v359, 32
  %v362 = vpop.permute.xlu0 %361
  %s364 = scalar_lea.vmem %s4, 6
  %365 = vst.msk [vmem:[%s364] sm:$0x3] %vm124, %v362
  %s366 = scalar_lea.vmem %s0, 8
  %v367 = vld [vmem:[%s366] sm:$0x3]
  %v368 = vpack.c.bf16 %v359, %v359
  %370 = vrot.lane.b32.xlu0 %v368, 32
  %v371 = vpop.permute.xlu0 %370
  %v373 = vsel %vm47, %v371, 0
  %375 = vmatprep.subr.bf16.mxu0 0
  %376 = vmatpush1.bf16.msra.mxu0 %v43
  %377 = vmatprep.subr.bf16.mxu0 0
  %378 = vmatpush1.bf16.msra.mxu0 %v44
  %379 = vmatprep.subr.bf16.mxu0 0
  %380 = vmatpush1.bf16.msra.mxu0 0
  %381 = vmatprep.subr.bf16.mxu0 0
  %382 = vmatpush1.bf16.msra.mxu0 0
  %383 = vmatprep.subr.bf16.mxu0 0
  %384 = vmatpush1.bf16.msra.mxu0 0
  %385 = vmatprep.subr.bf16.mxu0 0
  %386 = vmatpush1.bf16.msra.mxu0 0
  %387 = vmatprep.subr.bf16.mxu0 0
  %388 = vmatpush1.bf16.msra.mxu0 0
  %389 = vmatprep.subr.bf16.mxu0 0
  %390 = vmatpush1.bf16.msra.mxu0 0
  %391 = vmatprep.subr.bf16.mxu0 0
  %392 = vmatpush1.bf16.msra.mxu0 0
  %393 = vmatprep.subr.bf16.mxu0 0
  %394 = vmatpush1.bf16.msra.mxu0 0
  %395 = vmatprep.subr.bf16.mxu0 0
  %396 = vmatpush1.bf16.msra.mxu0 0
  %397 = vmatprep.subr.bf16.mxu0 0
  %398 = vmatpush1.bf16.msra.mxu0 0
  %399 = vmatprep.subr.bf16.mxu0 0
  %400 = vmatpush1.bf16.msra.mxu0 0
  %401 = vmatprep.subr.bf16.mxu0 0
  %402 = vmatpush1.bf16.msra.mxu0 0
  %403 = vmatprep.subr.bf16.mxu0 0
  %404 = vmatpush1.bf16.msra.mxu0 0
  %405 = vmatprep.subr.bf16.mxu0 0
  %406 = vmatpush1.bf16.msra.mxu0 0
  %407 = vmatprep.mubr.bf16.mxu0 0
  %408 = vmatmul.mubr.bf16.gmra.mrb[0].mxu0 %v373
  %v409 = vpop.f32.mrb[0].mxu0
  %v410 = vadd.f32 0.0, %v409
  %v411 = vpop.f32.mrb[0].mxu0
  %v412 = vpop.f32.mrb[0].mxu0
  %v413 = vpop.f32.mrb[0].mxu0
  %414 = vdwg.mxu0
  %v415 = vadd.f32 %v367, %v410
  %v416 = vxor.u32 %v415, 2147483648
  %v417 = vmul.f32 %v416, 1.442695
  %v418 = vpow.pop %v417
  %v419 = vadd.f32 %v418, 1.0
  %v420 = vrcp.pop %v419
  %v421 = vmul.f32 1.0, %v420
  %v422 = vtanh.pop %v415
  %v423 = vmul.f32 %v421, %v353
  %425 = vrot.lane.b32.xlu0 %v422, 64
  %v426 = vpop.permute.xlu0 %425
  %v428 = vmul.f32 %v421, %v426
  %430 = vrot.lane.b32.xlu0 %v428, 32
  %v431 = vpop.permute.xlu0 %430
  %v433 = vadd.f32 %v423, %v431
  %v434 = vtanh.pop %v433
  %436 = vrot.lane.b32.xlu0 %v434, 64
  %v437 = vpop.permute.xlu0 %436
  %v439 = vmul.f32 %v421, %v437
  %441 = vrot.lane.b32.xlu0 %v439, 32
  %v442 = vpop.permute.xlu0 %441
  %s444 = scalar_lea.vmem %s4, 8
  %445 = vst.msk [vmem:[%s444] sm:$0x3] %vm124, %v442
  %s446 = scalar_lea.vmem %s0, 10
  %v447 = vld [vmem:[%s446] sm:$0x3]
  %v448 = vpack.c.bf16 %v439, %v439
  %450 = vrot.lane.b32.xlu0 %v448, 32
  %v451 = vpop.permute.xlu0 %450
  %v453 = vsel %vm47, %v451, 0
  %455 = vmatprep.subr.bf16.mxu0 0
  %456 = vmatpush1.bf16.msra.mxu0 %v43
  %457 = vmatprep.subr.bf16.mxu0 0
  %458 = vmatpush1.bf16.msra.mxu0 %v44
  %459 = vmatprep.subr.bf16.mxu0 0
  %460 = vmatpush1.bf16.msra.mxu0 0
  %461 = vmatprep.subr.bf16.mxu0 0
  %462 = vmatpush1.bf16.msra.mxu0 0
  %463 = vmatprep.subr.bf16.mxu0 0
  %464 = vmatpush1.bf16.msra.mxu0 0
  %465 = vmatprep.subr.bf16.mxu0 0
  %466 = vmatpush1.bf16.msra.mxu0 0
  %467 = vmatprep.subr.bf16.mxu0 0
  %468 = vmatpush1.bf16.msra.mxu0 0
  %469 = vmatprep.subr.bf16.mxu0 0
  %470 = vmatpush1.bf16.msra.mxu0 0
  %471 = vmatprep.subr.bf16.mxu0 0
  %472 = vmatpush1.bf16.msra.mxu0 0
  %473 = vmatprep.subr.bf16.mxu0 0
  %474 = vmatpush1.bf16.msra.mxu0 0
  %475 = vmatprep.subr.bf16.mxu0 0
  %476 = vmatpush1.bf16.msra.mxu0 0
  %477 = vmatprep.subr.bf16.mxu0 0
  %478 = vmatpush1.bf16.msra.mxu0 0
  %479 = vmatprep.subr.bf16.mxu0 0
  %480 = vmatpush1.bf16.msra.mxu0 0
  %481 = vmatprep.subr.bf16.mxu0 0
  %482 = vmatpush1.bf16.msra.mxu0 0
  %483 = vmatprep.subr.bf16.mxu0 0
  %484 = vmatpush1.bf16.msra.mxu0 0
  %485 = vmatprep.subr.bf16.mxu0 0
  %486 = vmatpush1.bf16.msra.mxu0 0
  %487 = vmatprep.mubr.bf16.mxu0 0
  %488 = vmatmul.mubr.bf16.gmra.mrb[0].mxu0 %v453
  %v489 = vpop.f32.mrb[0].mxu0
  %v490 = vadd.f32 0.0, %v489
  %v491 = vpop.f32.mrb[0].mxu0
  %v492 = vpop.f32.mrb[0].mxu0
  %v493 = vpop.f32.mrb[0].mxu0
  %494 = vdwg.mxu0
  %v495 = vadd.f32 %v447, %v490
  %v496 = vxor.u32 %v495, 2147483648
  %v497 = vmul.f32 %v496, 1.442695
  %v498 = vpow.pop %v497
  %v499 = vadd.f32 %v498, 1.0
  %v500 = vrcp.pop %v499
  %v501 = vmul.f32 1.0, %v500
  %v502 = vtanh.pop %v495
  %v503 = vmul.f32 %v501, %v433
  %505 = vrot.lane.b32.xlu0 %v502, 64
  %v506 = vpop.permute.xlu0 %505
  %v508 = vmul.f32 %v501, %v506
  %510 = vrot.lane.b32.xlu0 %v508, 32
  %v511 = vpop.permute.xlu0 %510
  %v513 = vadd.f32 %v503, %v511
  %v514 = vtanh.pop %v513
  %516 = vrot.lane.b32.xlu0 %v514, 64
  %v517 = vpop.permute.xlu0 %516
  %v519 = vmul.f32 %v501, %v517
  %521 = vrot.lane.b32.xlu0 %v519, 32
  %v522 = vpop.permute.xlu0 %521
  %s524 = scalar_lea.vmem %s4, 10
  %525 = vst.msk [vmem:[%s524] sm:$0x3] %vm124, %v522
  %s526 = scalar_lea.vmem %s0, 12
  %v527 = vld [vmem:[%s526] sm:$0x3]
  %v528 = vpack.c.bf16 %v519, %v519
  %530 = vrot.lane.b32.xlu0 %v528, 32
  %v531 = vpop.permute.xlu0 %530
  %v533 = vsel %vm47, %v531, 0
  %535 = vmatprep.subr.bf16.mxu0 0
  %536 = vmatpush1.bf16.msra.mxu0 %v43
  %537 = vmatprep.subr.bf16.mxu0 0
  %538 = vmatpush1.bf16.msra.mxu0 %v44
  %539 = vmatprep.subr.bf16.mxu0 0
  %540 = vmatpush1.bf16.msra.mxu0 0
  %541 = vmatprep.subr.bf16.mxu0 0
  %542 = vmatpush1.bf16.msra.mxu0 0
  %543 = vmatprep.subr.bf16.mxu0 0
  %544 = vmatpush1.bf16.msra.mxu0 0
  %545 = vmatprep.subr.bf16.mxu0 0
  %546 = vmatpush1.bf16.msra.mxu0 0
  %547 = vmatprep.subr.bf16.mxu0 0
  %548 = vmatpush1.bf16.msra.mxu0 0
  %549 = vmatprep.subr.bf16.mxu0 0
  %550 = vmatpush1.bf16.msra.mxu0 0
  %551 = vmatprep.subr.bf16.mxu0 0
  %552 = vmatpush1.bf16.msra.mxu0 0
  %553 = vmatprep.subr.bf16.mxu0 0
  %554 = vmatpush1.bf16.msra.mxu0 0
  %555 = vmatprep.subr.bf16.mxu0 0
  %556 = vmatpush1.bf16.msra.mxu0 0
  %557 = vmatprep.subr.bf16.mxu0 0
  %558 = vmatpush1.bf16.msra.mxu0 0
  %559 = vmatprep.subr.bf16.mxu0 0
  %560 = vmatpush1.bf16.msra.mxu0 0
  %561 = vmatprep.subr.bf16.mxu0 0
  %562 = vmatpush1.bf16.msra.mxu0 0
  %563 = vmatprep.subr.bf16.mxu0 0
  %564 = vmatpush1.bf16.msra.mxu0 0
  %565 = vmatprep.subr.bf16.mxu0 0
  %566 = vmatpush1.bf16.msra.mxu0 0
  %567 = vmatprep.mubr.bf16.mxu0 0
  %568 = vmatmul.mubr.bf16.gmra.mrb[0].mxu0 %v533
  %v569 = vpop.f32.mrb[0].mxu0
  %v570 = vadd.f32 0.0, %v569
  %v571 = vpop.f32.mrb[0].mxu0
  %v572 = vpop.f32.mrb[0].mxu0
  %v573 = vpop.f32.mrb[0].mxu0
  %574 = vdwg.mxu0
  %v575 = vadd.f32 %v527, %v570
  %v576 = vxor.u32 %v575, 2147483648
  %v577 = vmul.f32 %v576, 1.442695
  %v578 = vpow.pop %v577
  %v579 = vadd.f32 %v578, 1.0
  %v580 = vrcp.pop %v579
  %v581 = vmul.f32 1.0, %v580
  %v582 = vtanh.pop %v575
  %v583 = vmul.f32 %v581, %v513
  %585 = vrot.lane.b32.xlu0 %v582, 64
  %v586 = vpop.permute.xlu0 %585
  %v588 = vmul.f32 %v581, %v586
  %590 = vrot.lane.b32.xlu0 %v588, 32
  %v591 = vpop.permute.xlu0 %590
  %v593 = vadd.f32 %v583, %v591
  %v594 = vtanh.pop %v593
  %596 = vrot.lane.b32.xlu0 %v594, 64
  %v597 = vpop.permute.xlu0 %596
  %v599 = vmul.f32 %v581, %v597
  %601 = vrot.lane.b32.xlu0 %v599, 32
  %v602 = vpop.permute.xlu0 %601
  %s604 = scalar_lea.vmem %s4, 12
  %605 = vst.msk [vmem:[%s604] sm:$0x3] %vm124, %v602
  %s606 = scalar_lea.vmem %s0, 14
  %v607 = vld [vmem:[%s606] sm:$0x3]
  %v608 = vpack.c.bf16 %v599, %v599
  %610 = vrot.lane.b32.xlu0 %v608, 32
  %v611 = vpop.permute.xlu0 %610
  %v613 = vsel %vm47, %v611, 0
  %615 = vmatprep.subr.bf16.mxu0 0
  %616 = vmatpush1.bf16.msra.mxu0 %v43
  %617 = vmatprep.subr.bf16.mxu0 0
  %618 = vmatpush1.bf16.msra.mxu0 %v44
  %619 = vmatprep.subr.bf16.mxu0 0
  %620 = vmatpush1.bf16.msra.mxu0 0
  %621 = vmatprep.subr.bf16.mxu0 0
  %622 = vmatpush1.bf16.msra.mxu0 0
  %623 = vmatprep.subr.bf16.mxu0 0
  %624 = vmatpush1.bf16.msra.mxu0 0
  %625 = vmatprep.subr.bf16.mxu0 0
  %626 = vmatpush1.bf16.msra.mxu0 0
  %627 = vmatprep.subr.bf16.mxu0 0
  %628 = vmatpush1.bf16.msra.mxu0 0
  %629 = vmatprep.subr.bf16.mxu0 0
  %630 = vmatpush1.bf16.msra.mxu0 0
  %631 = vmatprep.subr.bf16.mxu0 0
  %632 = vmatpush1.bf16.msra.mxu0 0
  %633 = vmatprep.subr.bf16.mxu0 0
  %634 = vmatpush1.bf16.msra.mxu0 0
  %635 = vmatprep.subr.bf16.mxu0 0
  %636 = vmatpush1.bf16.msra.mxu0 0
  %637 = vmatprep.subr.bf16.mxu0 0
  %638 = vmatpush1.bf16.msra.mxu0 0
  %639 = vmatprep.subr.bf16.mxu0 0
  %640 = vmatpush1.bf16.msra.mxu0 0
  %641 = vmatprep.subr.bf16.mxu0 0
  %642 = vmatpush1.bf16.msra.mxu0 0
  %643 = vmatprep.subr.bf16.mxu0 0
  %644 = vmatpush1.bf16.msra.mxu0 0
  %645 = vmatprep.subr.bf16.mxu0 0
  %646 = vmatpush1.bf16.msra.mxu0 0
  %647 = vmatprep.mubr.bf16.mxu0 0
  %648 = vmatmul.mubr.bf16.gmra.mrb[0].mxu0 %v613
  %v649 = vpop.f32.mrb[0].mxu0
  %v650 = vadd.f32 0.0, %v649
  %v651 = vpop.f32.mrb[0].mxu0
  %v652 = vpop.f32.mrb[0].mxu0
  %v653 = vpop.f32.mrb[0].mxu0
  %654 = vdwg.mxu0
  %v655 = vadd.f32 %v607, %v650
  %v656 = vxor.u32 %v655, 2147483648
  %v657 = vmul.f32 %v656, 1.442695
  %v658 = vpow.pop %v657
  %v659 = vadd.f32 %v658, 1.0
  %v660 = vrcp.pop %v659
  %v661 = vmul.f32 1.0, %v660
  %v662 = vtanh.pop %v655
  %v663 = vmul.f32 %v661, %v593
  %665 = vrot.lane.b32.xlu0 %v662, 64
  %v666 = vpop.permute.xlu0 %665
  %v668 = vmul.f32 %v661, %v666
  %670 = vrot.lane.b32.xlu0 %v668, 32
  %v671 = vpop.permute.xlu0 %670
  %v673 = vadd.f32 %v663, %v671
  %v674 = vtanh.pop %v673
  %676 = vrot.lane.b32.xlu0 %v674, 64
  %v677 = vpop.permute.xlu0 %676
  %v679 = vmul.f32 %v661, %v677
  %681 = vrot.lane.b32.xlu0 %v679, 32
  %v682 = vpop.permute.xlu0 %681
  %s684 = scalar_lea.vmem %s4, 14
  %685 = vst.msk [vmem:[%s684] sm:$0x3] %vm124, %v682
  %s686 = scalar_lea.vmem %s0, 16
  %v687 = vld [vmem:[%s686] sm:$0x3]
  %v688 = vpack.c.bf16 %v679, %v679
  %690 = vrot.lane.b32.xlu0 %v688, 32
  %v691 = vpop.permute.xlu0 %690
  %v693 = vsel %vm47, %v691, 0
  %695 = vmatprep.subr.bf16.mxu0 0
  %696 = vmatpush1.bf16.msra.mxu0 %v43
  %697 = vmatprep.subr.bf16.mxu0 0
  %698 = vmatpush1.bf16.msra.mxu0 %v44
  %699 = vmatprep.subr.bf16.mxu0 0
  %700 = vmatpush1.bf16.msra.mxu0 0
  %701 = vmatprep.subr.bf16.mxu0 0
  %702 = vmatpush1.bf16.msra.mxu0 0
  %703 = vmatprep.subr.bf16.mxu0 0
  %704 = vmatpush1.bf16.msra.mxu0 0
  %705 = vmatprep.subr.bf16.mxu0 0
  %706 = vmatpush1.bf16.msra.mxu0 0
  %707 = vmatprep.subr.bf16.mxu0 0
  %708 = vmatpush1.bf16.msra.mxu0 0
  %709 = vmatprep.subr.bf16.mxu0 0
  %710 = vmatpush1.bf16.msra.mxu0 0
  %711 = vmatprep.subr.bf16.mxu0 0
  %712 = vmatpush1.bf16.msra.mxu0 0
  %713 = vmatprep.subr.bf16.mxu0 0
  %714 = vmatpush1.bf16.msra.mxu0 0
  %715 = vmatprep.subr.bf16.mxu0 0
  %716 = vmatpush1.bf16.msra.mxu0 0
  %717 = vmatprep.subr.bf16.mxu0 0
  %718 = vmatpush1.bf16.msra.mxu0 0
  %719 = vmatprep.subr.bf16.mxu0 0
  %720 = vmatpush1.bf16.msra.mxu0 0
  %721 = vmatprep.subr.bf16.mxu0 0
  %722 = vmatpush1.bf16.msra.mxu0 0
  %723 = vmatprep.subr.bf16.mxu0 0
  %724 = vmatpush1.bf16.msra.mxu0 0
  %725 = vmatprep.subr.bf16.mxu0 0
  %726 = vmatpush1.bf16.msra.mxu0 0
  %727 = vmatprep.mubr.bf16.mxu0 0
  %728 = vmatmul.mubr.bf16.gmra.mrb[0].mxu0 %v693
  %v729 = vpop.f32.mrb[0].mxu0
  %v730 = vadd.f32 0.0, %v729
  %v731 = vpop.f32.mrb[0].mxu0
  %v732 = vpop.f32.mrb[0].mxu0
  %v733 = vpop.f32.mrb[0].mxu0
  %734 = vdwg.mxu0
  %v735 = vadd.f32 %v687, %v730
  %v736 = vxor.u32 %v735, 2147483648
  %v737 = vmul.f32 %v736, 1.442695
  %v738 = vpow.pop %v737
  %v739 = vadd.f32 %v738, 1.0
  %v740 = vrcp.pop %v739
  %v741 = vmul.f32 1.0, %v740
  %v742 = vtanh.pop %v735
  %v743 = vmul.f32 %v741, %v673
  %745 = vrot.lane.b32.xlu0 %v742, 64
  %v746 = vpop.permute.xlu0 %745
  %v748 = vmul.f32 %v741, %v746
  %750 = vrot.lane.b32.xlu0 %v748, 32
  %v751 = vpop.permute.xlu0 %750
  %v753 = vadd.f32 %v743, %v751
  %v754 = vtanh.pop %v753
  %756 = vrot.lane.b32.xlu0 %v754, 64
  %v757 = vpop.permute.xlu0 %756
  %v759 = vmul.f32 %v741, %v757
  %761 = vrot.lane.b32.xlu0 %v759, 32
  %v762 = vpop.permute.xlu0 %761
  %s764 = scalar_lea.vmem %s4, 16
  %765 = vst.msk [vmem:[%s764] sm:$0x3] %vm124, %v762
  %s766 = scalar_lea.vmem %s0, 18
  %v767 = vld [vmem:[%s766] sm:$0x3]
  %v768 = vpack.c.bf16 %v759, %v759
  %770 = vrot.lane.b32.xlu0 %v768, 32
  %v771 = vpop.permute.xlu0 %770
  %v773 = vsel %vm47, %v771, 0
  %775 = vmatprep.subr.bf16.mxu0 0
  %776 = vmatpush1.bf16.msra.mxu0 %v43
  %777 = vmatprep.subr.bf16.mxu0 0
  %778 = vmatpush1.bf16.msra.mxu0 %v44
  %779 = vmatprep.subr.bf16.mxu0 0
  %780 = vmatpush1.bf16.msra.mxu0 0
  %781 = vmatprep.subr.bf16.mxu0 0
  %782 = vmatpush1.bf16.msra.mxu0 0
  %783 = vmatprep.subr.bf16.mxu0 0
  %784 = vmatpush1.bf16.msra.mxu0 0
  %785 = vmatprep.subr.bf16.mxu0 0
  %786 = vmatpush1.bf16.msra.mxu0 0
  %787 = vmatprep.subr.bf16.mxu0 0
  %788 = vmatpush1.bf16.msra.mxu0 0
  %789 = vmatprep.subr.bf16.mxu0 0
  %790 = vmatpush1.bf16.msra.mxu0 0
  %791 = vmatprep.subr.bf16.mxu0 0
  %792 = vmatpush1.bf16.msra.mxu0 0
  %793 = vmatprep.subr.bf16.mxu0 0
  %794 = vmatpush1.bf16.msra.mxu0 0
  %795 = vmatprep.subr.bf16.mxu0 0
  %796 = vmatpush1.bf16.msra.mxu0 0
  %797 = vmatprep.subr.bf16.mxu0 0
  %798 = vmatpush1.bf16.msra.mxu0 0
  %799 = vmatprep.subr.bf16.mxu0 0
  %800 = vmatpush1.bf16.msra.mxu0 0
  %801 = vmatprep.subr.bf16.mxu0 0
  %802 = vmatpush1.bf16.msra.mxu0 0
  %803 = vmatprep.subr.bf16.mxu0 0
  %804 = vmatpush1.bf16.msra.mxu0 0
  %805 = vmatprep.subr.bf16.mxu0 0
  %806 = vmatpush1.bf16.msra.mxu0 0
  %807 = vmatprep.mubr.bf16.mxu0 0
  %808 = vmatmul.mubr.bf16.gmra.mrb[0].mxu0 %v773
  %v809 = vpop.f32.mrb[0].mxu0
  %v810 = vadd.f32 0.0, %v809
  %v811 = vpop.f32.mrb[0].mxu0
  %v812 = vpop.f32.mrb[0].mxu0
  %v813 = vpop.f32.mrb[0].mxu0
  %814 = vdwg.mxu0
  %v815 = vadd.f32 %v767, %v810
  %v816 = vxor.u32 %v815, 2147483648
  %v817 = vmul.f32 %v816, 1.442695
  %v818 = vpow.pop %v817
  %v819 = vadd.f32 %v818, 1.0
  %v820 = vrcp.pop %v819
  %v821 = vmul.f32 1.0, %v820
  %v822 = vtanh.pop %v815
  %v823 = vmul.f32 %v821, %v753
  %825 = vrot.lane.b32.xlu0 %v822, 64
  %v826 = vpop.permute.xlu0 %825
  %v828 = vmul.f32 %v821, %v826
  %830 = vrot.lane.b32.xlu0 %v828, 32
  %v831 = vpop.permute.xlu0 %830
  %v833 = vadd.f32 %v823, %v831
  %v834 = vtanh.pop %v833
  %836 = vrot.lane.b32.xlu0 %v834, 64
  %v837 = vpop.permute.xlu0 %836
  %v839 = vmul.f32 %v821, %v837
  %841 = vrot.lane.b32.xlu0 %v839, 32
  %v842 = vpop.permute.xlu0 %841
  %s844 = scalar_lea.vmem %s4, 18
  %845 = vst.msk [vmem:[%s844] sm:$0x3] %vm124, %v842
  %846 = vst.msk [vmem:[#allocation2] sm:$0x3] %vm124, %v842
  %848 = vrot.lane.b32.xlu0 %v833, 96
  %v849 = vpop.permute.xlu0 %848
  %851 = vst.msk [vmem:[#allocation3] sm:$0x3] %vm124, %v849
  // Predicated region
  $region22: #{rnn_forward.8} parent=0 // pred_check
    _
  $region23: #{rnn_forward.8} parent=0 // pred_check_branch
    %853 = sbr.rel (0) target = $region25
  $region24: #{rnn_forward.8} parent=0 // pred_region
    _
  $region25: #{rnn_forward.8} parent=0 // pred_fallthru
    _
  // Predicated region
  $region26: #{rnn_forward.8} parent=0 // pred_check
    _
  $region27: #{rnn_forward.8} parent=0 // pred_check_branch
    %855 = sbr.rel (0) target = $region29
  $region28: #{rnn_forward.8} parent=0 // pred_region
    _
  $region29: #{rnn_forward.8} parent=0 // pred_fallthru
    _

// kernel: rnn_forward.7
$region0: #{rnn_forward.7}
  #allocation0 [shape = 'u32[]', space=smem, size = 0x4, offset = 0x4, fixed_abs, tag = 'smem constant byte address 0x4 - core index']
  #allocation1 [shape = 'u32[144,128]{1,0:T(1,128)}', space=vmem, size = 0x12000, scoped, tag = 'internal scratch']
  #allocation2 [shape = 'f32[2,32]{1,0:T(2,128)}', space=vmem, size = 0x400, scoped, tag = 'scratch operand']
  #allocation3 [shape = 'f32[2,32]{1,0:T(2,128)}', space=vmem, size = 0x400, scoped, tag = 'scratch operand']
  #allocation4 [shape = 's32[1]{0}', space=sflag, size = 0x4, scoped, tag = 'scoped memory for rnn_forward.7']
  #allocation5 [shape = 'u8[512]{0}', space=smem, size = 0x200, scoped, tag = 'prefetched SMEM operand 0']
  %s0 = inlined_call_operand.vmem [shape: s32[2], index: 0, kind: input, shape index: {}]
  %s1 = inlined_call_operand.vmem [shape: f32[8,2,128], index: 1, kind: input, shape index: {}]
  %s2 = inlined_call_operand.vmem [shape: bf16[32,128], index: 2, kind: input, shape index: {}]
  %s3 = inlined_call_operand.vmem [shape: f32[2,32], index: 3, kind: input, shape index: {}]
  %s4 = inlined_call_operand.vmem [shape: f32[2,32], index: 4, kind: input, shape index: {}]
  %s5 = inlined_call_operand.vmem [shape: s32[2,1], index: 5, kind: input, shape index: {}]
  %s6 = inlined_call_operand.vmem [shape: f32[2,32], index: 6, kind: output, shape index: {}]
  %s7 = sld [smem:[#allocation0]]
  $region42: #{rnn_forward.7} parent=0
    _
  %s9 = ssub.s32 1, %s7
  %s10 = scalar_select 0, %s9, %s7
  %s11 = sshll.u32 %s0, 4
  %s12 = int_to_ptr.vmem [resolvable:$true] %s11
  %14 = dma.vmem_to_smem %s12, 16, [#allocation5], [#allocation4]
  %15 = dma.done [#allocation4], 16
  %16 = sfence
  // Predicated region
  $region2: #{rnn_forward.7} parent=0 // pred_check
    _
  $region3: #{rnn_forward.7} parent=0 // pred_check_branch
    %18 = sbr.rel (0) target = $region5
  $region4: #{rnn_forward.7} parent=0 // pred_region
    _
  $region5: #{rnn_forward.7} parent=0 // pred_fallthru
    _
  // Predicated region
  $region6: #{rnn_forward.7} parent=0 // pred_check
    _
  $region7: #{rnn_forward.7} parent=0 // pred_check_branch
    %20 = sbr.rel (0) target = $region9
  $region8: #{rnn_forward.7} parent=0 // pred_region
    _
  $region9: #{rnn_forward.7} parent=0 // pred_fallthru
    _
  // Predicated region
  $region10: #{rnn_forward.7} parent=0 // pred_check
    _
  $region11: #{rnn_forward.7} parent=0 // pred_check_branch
    %22 = sbr.rel (0) target = $region13
  $region12: #{rnn_forward.7} parent=0 // pred_region
    _
  $region13: #{rnn_forward.7} parent=0 // pred_fallthru
    _
  // Predicated region
  $region14: #{rnn_forward.7} parent=0 // pred_check
    _
  $region15: #{rnn_forward.7} parent=0 // pred_check_branch
    %24 = sbr.rel (0) target = $region17
  $region16: #{rnn_forward.7} parent=0 // pred_region
    _
  $region17: #{rnn_forward.7} parent=0 // pred_fallthru
    _
  // Predicated region
  $region18: #{rnn_forward.7} parent=0 // pred_check
    _
  $region19: #{rnn_forward.7} parent=0 // pred_check_branch
    %26 = sbr.rel (0) target = $region21
  $region20: #{rnn_forward.7} parent=0 // pred_region
    _
  $region21: #{rnn_forward.7} parent=0 // pred_fallthru
    _
  %p28 = scmp.eq.s32.totalorder 0, 0
  // Predicated region
  $region22: #{rnn_forward.7} parent=0 // pred_check
    %p29 = pneg %p28
  $region23: #{rnn_forward.7} parent=0 // pred_check_branch
    %31 = sbr.rel (%p29) target = $region25
  $region24: #{rnn_forward.7} parent=0 // pred_region
    %v32 = vld [vmem:[%s3] sm:$0x3]
    %vm33 = vcmask 254976
    %34 = vst.msk [vmem:[#allocation2] sm:$0x3] %vm33, %v32
    %v35 = vld [vmem:[%s4] sm:$0x3]
    %36 = vst.msk [vmem:[#allocation3] sm:$0x3] %vm33, %v35
    %37 = vst.msk [vmem:[%s6] sm:$0x3] %vm33, 0.0
  $region25: #{rnn_forward.7} parent=0 // pred_fallthru
    _
  %s38 = smul.u32 0, 8
  %v39 = vld [vmem:[%s2] sm:$0xf]
  %v40 = vld [vmem:[%s2 + $0x4] sm:$0xf]
  %v41 = vld [vmem:[%s2 + $0x8] sm:$0xf]
  %v42 = vld [vmem:[%s2 + $0xc] sm:$0xf]
  %v43 = vld [vmem:[%s5] sm:$0x3]
  %s44 = sld [smem:[#allocation5 + $0x1]]
  %p45 = scmp.ge.s32.totalorder %s44, %s38
  %s46 = sld [smem:[#allocation5]]
  %s47 = sadd.s32 %s38, 8
  %p48 = scmp.lt.s32.totalorder %s46, %s47
  %p49 = pnand %p45, %p48
  %p50 = pneg %p49
  // Predicated region
  $region26: #{rnn_forward.7} parent=0 // pred_check
    _
  $region27: #{rnn_forward.7} parent=0 // pred_check_branch
    %52 = sbr.rel (%p49) target = $region29
  $region28: #{rnn_forward.7} parent=0 // pred_region
    %v53 = vld [vmem:[#allocation2] sm:$0x3]
    %v54 = vld [vmem:[#allocation3] sm:$0x3]
    %v55 = vld [vmem:[%s6] sm:$0x3]
    %v56 = vld [vmem:[%s1] sm:$0x3]
    %v57 = vpack.c.bf16 %v53, %v53
    %v62 = vunpack.c.l.b16 %v39
    %v63 = vunpack.c.l.b16 %v40
    %v64 = vunpack.c.l.b16 %v41
    %v65 = vunpack.c.l.b16 %v42
    %v66 = vpack.c.b16 %v63, %v62
    %v67 = vpack.c.b16 %v65, %v64
    %vm70 = vcmask 261120
    %v72 = vsel %vm70, %v57, 0
    %74 = vmatprep.subr.bf16.mxu0 0
    %75 = vmatpush1.bf16.msra.mxu0 %v66
    %76 = vmatprep.subr.bf16.mxu0 0
    %77 = vmatpush1.bf16.msra.mxu0 %v67
    %78 = vmatprep.subr.bf16.mxu0 0
    %79 = vmatpush1.bf16.msra.mxu0 0
    %80 = vmatprep.subr.bf16.mxu0 0
    %81 = vmatpush1.bf16.msra.mxu0 0
    %82 = vmatprep.subr.bf16.mxu0 0
    %83 = vmatpush1.bf16.msra.mxu0 0
    %84 = vmatprep.subr.bf16.mxu0 0
    %85 = vmatpush1.bf16.msra.mxu0 0
    %86 = vmatprep.subr.bf16.mxu0 0
    %87 = vmatpush1.bf16.msra.mxu0 0
    %88 = vmatprep.subr.bf16.mxu0 0
    %89 = vmatpush1.bf16.msra.mxu0 0
    %90 = vmatprep.subr.bf16.mxu0 0
    %91 = vmatpush1.bf16.msra.mxu0 0
    %92 = vmatprep.subr.bf16.mxu0 0
    %93 = vmatpush1.bf16.msra.mxu0 0
    %94 = vmatprep.subr.bf16.mxu0 0
    %95 = vmatpush1.bf16.msra.mxu0 0
    %96 = vmatprep.subr.bf16.mxu0 0
    %97 = vmatpush1.bf16.msra.mxu0 0
    %98 = vmatprep.subr.bf16.mxu0 0
    %99 = vmatpush1.bf16.msra.mxu0 0
    %100 = vmatprep.subr.bf16.mxu0 0
    %101 = vmatpush1.bf16.msra.mxu0 0
    %102 = vmatprep.subr.bf16.mxu0 0
    %103 = vmatpush1.bf16.msra.mxu0 0
    %104 = vmatprep.subr.bf16.mxu0 0
    %105 = vmatpush1.bf16.msra.mxu0 0
    %106 = vmatprep.mubr.bf16.mxu0 0
    %107 = vmatmul.mubr.bf16.gmra.mrb[0].mxu0 %v72
    %v108 = vpop.f32.mrb[0].mxu0
    %v109 = vadd.f32 0.0, %v108
    %v110 = vpop.f32.mrb[0].mxu0
    %v111 = vpop.f32.mrb[0].mxu0
    %v112 = vpop.f32.mrb[0].mxu0
    %113 = vdwg.mxu0
    %v114 = vadd.f32 %v56, %v109
    %v115 = vxor.u32 %v114, 2147483648
    %v116 = vmul.f32 %v115, 1.442695
    %v117 = vpow.pop %v116
    %v118 = vadd.f32 %v117, 1.0
    %v119 = vrcp.pop %v118
    %v120 = vmul.f32 1.0, %v119
    %v121 = vtanh.pop %v114
    %123 = vrot.lane.b32.xlu0 %v54, 32
    %v124 = vpop.permute.xlu0 %123
    %v126 = vmul.f32 %v120, %v124
    %128 = vrot.lane.b32.xlu0 %v121, 64
    %v129 = vpop.permute.xlu0 %128
    %v131 = vmul.f32 %v120, %v129
    %133 = vrot.lane.b32.xlu0 %v131, 32
    %v134 = vpop.permute.xlu0 %133
    %v136 = vadd.f32 %v126, %v134
    %v137 = vtanh.pop %v136
    %139 = vrot.lane.b32.xlu0 %v137, 64
    %v140 = vpop.permute.xlu0 %139
    %v142 = vmul.f32 %v120, %v140
    %v143 = vstv %s38
    %vm144 = vcmp.eq.s32.totalorder %v43, %v143
    %v145 = vsel %vm144, 1, 0
    %146 = vset.pattern.permute.xlu0 0
    %147 = vperm.xlu0 %146, %v145
    %v148 = vpop.permute.xlu0 %147
    %vm149 = vcmp.eq.s32.totalorder %v148, 1
    %151 = vrot.lane.b32.xlu0 %v55, 96
    %v152 = vpop.permute.xlu0 %151
    %v154 = vsel %vm149, %v142, %v152
    %s155 = scalar_lea.vmem %s1, 2
    %v156 = vld [vmem:[%s155] sm:$0x3]
    %v157 = vpack.c.bf16 %v142, %v142
    %159 = vrot.lane.b32.xlu0 %v157, 32
    %v160 = vpop.permute.xlu0 %159
    %v162 = vsel %vm70, %v160, 0
    %164 = vmatprep.subr.bf16.mxu0 0
    %165 = vmatpush1.bf16.msra.mxu0 %v66
    %166 = vmatprep.subr.bf16.mxu0 0
    %167 = vmatpush1.bf16.msra.mxu0 %v67
    %168 = vmatprep.subr.bf16.mxu0 0
    %169 = vmatpush1.bf16.msra.mxu0 0
    %170 = vmatprep.subr.bf16.mxu0 0
    %171 = vmatpush1.bf16.msra.mxu0 0
    %172 = vmatprep.subr.bf16.mxu0 0
    %173 = vmatpush1.bf16.msra.mxu0 0
    %174 = vmatprep.subr.bf16.mxu0 0
    %175 = vmatpush1.bf16.msra.mxu0 0
    %176 = vmatprep.subr.bf16.mxu0 0
    %177 = vmatpush1.bf16.msra.mxu0 0
    %178 = vmatprep.subr.bf16.mxu0 0
    %179 = vmatpush1.bf16.msra.mxu0 0
    %180 = vmatprep.subr.bf16.mxu0 0
    %181 = vmatpush1.bf16.msra.mxu0 0
    %182 = vmatprep.subr.bf16.mxu0 0
    %183 = vmatpush1.bf16.msra.mxu0 0
    %184 = vmatprep.subr.bf16.mxu0 0
    %185 = vmatpush1.bf16.msra.mxu0 0
    %186 = vmatprep.subr.bf16.mxu0 0
    %187 = vmatpush1.bf16.msra.mxu0 0
    %188 = vmatprep.subr.bf16.mxu0 0
    %189 = vmatpush1.bf16.msra.mxu0 0
    %190 = vmatprep.subr.bf16.mxu0 0
    %191 = vmatpush1.bf16.msra.mxu0 0
    %192 = vmatprep.subr.bf16.mxu0 0
    %193 = vmatpush1.bf16.msra.mxu0 0
    %194 = vmatprep.subr.bf16.mxu0 0
    %195 = vmatpush1.bf16.msra.mxu0 0
    %196 = vmatprep.mubr.bf16.mxu0 0
    %197 = vmatmul.mubr.bf16.gmra.mrb[0].mxu0 %v162
    %v198 = vpop.f32.mrb[0].mxu0
    %v199 = vadd.f32 0.0, %v198
    %v200 = vpop.f32.mrb[0].mxu0
    %v201 = vpop.f32.mrb[0].mxu0
    %v202 = vpop.f32.mrb[0].mxu0
    %203 = vdwg.mxu0
    %v204 = vadd.f32 %v156, %v199
    %v205 = vxor.u32 %v204, 2147483648
    %v206 = vmul.f32 %v205, 1.442695
    %v207 = vpow.pop %v206
    %v208 = vadd.f32 %v207, 1.0
    %v209 = vrcp.pop %v208
    %v210 = vmul.f32 1.0, %v209
    %v211 = vtanh.pop %v204
    %v212 = vmul.f32 %v210, %v136
    %214 = vrot.lane.b32.xlu0 %v211, 64
    %v215 = vpop.permute.xlu0 %214
    %v217 = vmul.f32 %v210, %v215
    %219 = vrot.lane.b32.xlu0 %v217, 32
    %v220 = vpop.permute.xlu0 %219
    %v222 = vadd.f32 %v212, %v220
    %v223 = vtanh.pop %v222
    %225 = vrot.lane.b32.xlu0 %v223, 64
    %v226 = vpop.permute.xlu0 %225
    %v228 = vmul.f32 %v210, %v226
    %s229 = sadd.s32 %s38, 1
    %v230 = vstv %s229
    %vm231 = vcmp.eq.s32.totalorder %v43, %v230
    %v232 = vsel %vm231, 1, 0
    %233 = vset.pattern.permute.xlu0 0
    %234 = vperm.xlu0 %233, %v232
    %v235 = vpop.permute.xlu0 %234
    %vm236 = vcmp.eq.s32.totalorder %v235, 1
    %v237 = vsel %vm236, %v228, %v154
    %s238 = scalar_lea.vmem %s1, 4
    %v239 = vld [vmem:[%s238] sm:$0x3]
    %v240 = vpack.c.bf16 %v228, %v228
    %242 = vrot.lane.b32.xlu0 %v240, 32
    %v243 = vpop.permute.xlu0 %242
    %v245 = vsel %vm70, %v243, 0
    %247 = vmatprep.subr.bf16.mxu0 0
    %248 = vmatpush1.bf16.msra.mxu0 %v66
    %249 = vmatprep.subr.bf16.mxu0 0
    %250 = vmatpush1.bf16.msra.mxu0 %v67
    %251 = vmatprep.subr.bf16.mxu0 0
    %252 = vmatpush1.bf16.msra.mxu0 0
    %253 = vmatprep.subr.bf16.mxu0 0
    %254 = vmatpush1.bf16.msra.mxu0 0
    %255 = vmatprep.subr.bf16.mxu0 0
    %256 = vmatpush1.bf16.msra.mxu0 0
    %257 = vmatprep.subr.bf16.mxu0 0
    %258 = vmatpush1.bf16.msra.mxu0 0
    %259 = vmatprep.subr.bf16.mxu0 0
    %260 = vmatpush1.bf16.msra.mxu0 0
    %261 = vmatprep.subr.bf16.mxu0 0
    %262 = vmatpush1.bf16.msra.mxu0 0
    %263 = vmatprep.subr.bf16.mxu0 0
    %264 = vmatpush1.bf16.msra.mxu0 0
    %265 = vmatprep.subr.bf16.mxu0 0
    %266 = vmatpush1.bf16.msra.mxu0 0
    %267 = vmatprep.subr.bf16.mxu0 0
    %268 = vmatpush1.bf16.msra.mxu0 0
    %269 = vmatprep.subr.bf16.mxu0 0
    %270 = vmatpush1.bf16.msra.mxu0 0
    %271 = vmatprep.subr.bf16.mxu0 0
    %272 = vmatpush1.bf16.msra.mxu0 0
    %273 = vmatprep.subr.bf16.mxu0 0
    %274 = vmatpush1.bf16.msra.mxu0 0
    %275 = vmatprep.subr.bf16.mxu0 0
    %276 = vmatpush1.bf16.msra.mxu0 0
    %277 = vmatprep.subr.bf16.mxu0 0
    %278 = vmatpush1.bf16.msra.mxu0 0
    %279 = vmatprep.mubr.bf16.mxu0 0
    %280 = vmatmul.mubr.bf16.gmra.mrb[0].mxu0 %v245
    %v281 = vpop.f32.mrb[0].mxu0
    %v282 = vadd.f32 0.0, %v281
    %v283 = vpop.f32.mrb[0].mxu0
    %v284 = vpop.f32.mrb[0].mxu0
    %v285 = vpop.f32.mrb[0].mxu0
    %286 = vdwg.mxu0
    %v287 = vadd.f32 %v239, %v282
    %v288 = vxor.u32 %v287, 2147483648
    %v289 = vmul.f32 %v288, 1.442695
    %v290 = vpow.pop %v289
    %v291 = vadd.f32 %v290, 1.0
    %v292 = vrcp.pop %v291
    %v293 = vmul.f32 1.0, %v292
    %v294 = vtanh.pop %v287
    %v295 = vmul.f32 %v293, %v222
    %297 = vrot.lane.b32.xlu0 %v294, 64
    %v298 = vpop.permute.xlu0 %297
    %v300 = vmul.f32 %v293, %v298
    %302 = vrot.lane.b32.xlu0 %v300, 32
    %v303 = vpop.permute.xlu0 %302
    %v305 = vadd.f32 %v295, %v303
    %v306 = vtanh.pop %v305
    %308 = vrot.lane.b32.xlu0 %v306, 64
    %v309 = vpop.permute.xlu0 %308
    %v311 = vmul.f32 %v293, %v309
    %s312 = sadd.s32 %s38, 2
    %v313 = vstv %s312
    %vm314 = vcmp.eq.s32.totalorder %v43, %v313
    %v315 = vsel %vm314, 1, 0
    %316 = vset.pattern.permute.xlu0 0
    %317 = vperm.xlu0 %316, %v315
    %v318 = vpop.permute.xlu0 %317
    %vm319 = vcmp.eq.s32.totalorder %v318, 1
    %v320 = vsel %vm319, %v311, %v237
    %s321 = scalar_lea.vmem %s1, 6
    %v322 = vld [vmem:[%s321] sm:$0x3]
    %v323 = vpack.c.bf16 %v311, %v311
    %325 = vrot.lane.b32.xlu0 %v323, 32
    %v326 = vpop.permute.xlu0 %325
    %v328 = vsel %vm70, %v326, 0
    %330 = vmatprep.subr.bf16.mxu0 0
    %331 = vmatpush1.bf16.msra.mxu0 %v66
    %332 = vmatprep.subr.bf16.mxu0 0
    %333 = vmatpush1.bf16.msra.mxu0 %v67
    %334 = vmatprep.subr.bf16.mxu0 0
    %335 = vmatpush1.bf16.msra.mxu0 0
    %336 = vmatprep.subr.bf16.mxu0 0
    %337 = vmatpush1.bf16.msra.mxu0 0
    %338 = vmatprep.subr.bf16.mxu0 0
    %339 = vmatpush1.bf16.msra.mxu0 0
    %340 = vmatprep.subr.bf16.mxu0 0
    %341 = vmatpush1.bf16.msra.mxu0 0
    %342 = vmatprep.subr.bf16.mxu0 0
    %343 = vmatpush1.bf16.msra.mxu0 0
    %344 = vmatprep.subr.bf16.mxu0 0
    %345 = vmatpush1.bf16.msra.mxu0 0
    %346 = vmatprep.subr.bf16.mxu0 0
    %347 = vmatpush1.bf16.msra.mxu0 0
    %348 = vmatprep.subr.bf16.mxu0 0
    %349 = vmatpush1.bf16.msra.mxu0 0
    %350 = vmatprep.subr.bf16.mxu0 0
    %351 = vmatpush1.bf16.msra.mxu0 0
    %352 = vmatprep.subr.bf16.mxu0 0
    %353 = vmatpush1.bf16.msra.mxu0 0
    %354 = vmatprep.subr.bf16.mxu0 0
    %355 = vmatpush1.bf16.msra.mxu0 0
    %356 = vmatprep.subr.bf16.mxu0 0
    %357 = vmatpush1.bf16.msra.mxu0 0
    %358 = vmatprep.subr.bf16.mxu0 0
    %359 = vmatpush1.bf16.msra.mxu0 0
    %360 = vmatprep.subr.bf16.mxu0 0
    %361 = vmatpush1.bf16.msra.mxu0 0
    %362 = vmatprep.mubr.bf16.mxu0 0
    %363 = vmatmul.mubr.bf16.gmra.mrb[0].mxu0 %v328
    %v364 = vpop.f32.mrb[0].mxu0
    %v365 = vadd.f32 0.0, %v364
    %v366 = vpop.f32.mrb[0].mxu0
    %v367 = vpop.f32.mrb[0].mxu0
    %v368 = vpop.f32.mrb[0].mxu0
    %369 = vdwg.mxu0
    %v370 = vadd.f32 %v322, %v365
    %v371 = vxor.u32 %v370, 2147483648
    %v372 = vmul.f32 %v371, 1.442695
    %v373 = vpow.pop %v372
    %v374 = vadd.f32 %v373, 1.0
    %v375 = vrcp.pop %v374
    %v376 = vmul.f32 1.0, %v375
    %v377 = vtanh.pop %v370
    %v378 = vmul.f32 %v376, %v305
    %380 = vrot.lane.b32.xlu0 %v377, 64
    %v381 = vpop.permute.xlu0 %380
    %v383 = vmul.f32 %v376, %v381
    %385 = vrot.lane.b32.xlu0 %v383, 32
    %v386 = vpop.permute.xlu0 %385
    %v388 = vadd.f32 %v378, %v386
    %v389 = vtanh.pop %v388
    %391 = vrot.lane.b32.xlu0 %v389, 64
    %v392 = vpop.permute.xlu0 %391
    %v394 = vmul.f32 %v376, %v392
    %s395 = sadd.s32 %s38, 3
    %v396 = vstv %s395
    %vm397 = vcmp.eq.s32.totalorder %v43, %v396
    %v398 = vsel %vm397, 1, 0
    %399 = vset.pattern.permute.xlu0 0
    %400 = vperm.xlu0 %399, %v398
    %v401 = vpop.permute.xlu0 %400
    %vm402 = vcmp.eq.s32.totalorder %v401, 1
    %v403 = vsel %vm402, %v394, %v320
    %s404 = scalar_lea.vmem %s1, 8
    %v405 = vld [vmem:[%s404] sm:$0x3]
    %v406 = vpack.c.bf16 %v394, %v394
    %408 = vrot.lane.b32.xlu0 %v406, 32
    %v409 = vpop.permute.xlu0 %408
    %v411 = vsel %vm70, %v409, 0
    %413 = vmatprep.subr.bf16.mxu0 0
    %414 = vmatpush1.bf16.msra.mxu0 %v66
    %415 = vmatprep.subr.bf16.mxu0 0
    %416 = vmatpush1.bf16.msra.mxu0 %v67
    %417 = vmatprep.subr.bf16.mxu0 0
    %418 = vmatpush1.bf16.msra.mxu0 0
    %419 = vmatprep.subr.bf16.mxu0 0
    %420 = vmatpush1.bf16.msra.mxu0 0
    %421 = vmatprep.subr.bf16.mxu0 0
    %422 = vmatpush1.bf16.msra.mxu0 0
    %423 = vmatprep.subr.bf16.mxu0 0
    %424 = vmatpush1.bf16.msra.mxu0 0
    %425 = vmatprep.subr.bf16.mxu0 0
    %426 = vmatpush1.bf16.msra.mxu0 0
    %427 = vmatprep.subr.bf16.mxu0 0
    %428 = vmatpush1.bf16.msra.mxu0 0
    %429 = vmatprep.subr.bf16.mxu0 0
    %430 = vmatpush1.bf16.msra.mxu0 0
    %431 = vmatprep.subr.bf16.mxu0 0
    %432 = vmatpush1.bf16.msra.mxu0 0
    %433 = vmatprep.subr.bf16.mxu0 0
    %434 = vmatpush1.bf16.msra.mxu0 0
    %435 = vmatprep.subr.bf16.mxu0 0
    %436 = vmatpush1.bf16.msra.mxu0 0
    %437 = vmatprep.subr.bf16.mxu0 0
    %438 = vmatpush1.bf16.msra.mxu0 0
    %439 = vmatprep.subr.bf16.mxu0 0
    %440 = vmatpush1.bf16.msra.mxu0 0
    %441 = vmatprep.subr.bf16.mxu0 0
    %442 = vmatpush1.bf16.msra.mxu0 0
    %443 = vmatprep.subr.bf16.mxu0 0
    %444 = vmatpush1.bf16.msra.mxu0 0
    %445 = vmatprep.mubr.bf16.mxu0 0
    %446 = vmatmul.mubr.bf16.gmra.mrb[0].mxu0 %v411
    %v447 = vpop.f32.mrb[0].mxu0
    %v448 = vadd.f32 0.0, %v447
    %v449 = vpop.f32.mrb[0].mxu0
    %v450 = vpop.f32.mrb[0].mxu0
    %v451 = vpop.f32.mrb[0].mxu0
    %452 = vdwg.mxu0
    %v453 = vadd.f32 %v405, %v448
    %v454 = vxor.u32 %v453, 2147483648
    %v455 = vmul.f32 %v454, 1.442695
    %v456 = vpow.pop %v455
    %v457 = vadd.f32 %v456, 1.0
    %v458 = vrcp.pop %v457
    %v459 = vmul.f32 1.0, %v458
    %v460 = vtanh.pop %v453
    %v461 = vmul.f32 %v459, %v388
    %463 = vrot.lane.b32.xlu0 %v460, 64
    %v464 = vpop.permute.xlu0 %463
    %v466 = vmul.f32 %v459, %v464
    %468 = vrot.lane.b32.xlu0 %v466, 32
    %v469 = vpop.permute.xlu0 %468
    %v471 = vadd.f32 %v461, %v469
    %v472 = vtanh.pop %v471
    %474 = vrot.lane.b32.xlu0 %v472, 64
    %v475 = vpop.permute.xlu0 %474
    %v477 = vmul.f32 %v459, %v475
    %s478 = sadd.s32 %s38, 4
    %v479 = vstv %s478
    %vm480 = vcmp.eq.s32.totalorder %v43, %v479
    %v481 = vsel %vm480, 1, 0
    %482 = vset.pattern.permute.xlu0 0
    %483 = vperm.xlu0 %482, %v481
    %v484 = vpop.permute.xlu0 %483
    %vm485 = vcmp.eq.s32.totalorder %v484, 1
    %v486 = vsel %vm485, %v477, %v403
    %s487 = scalar_lea.vmem %s1, 10
    %v488 = vld [vmem:[%s487] sm:$0x3]
    %v489 = vpack.c.bf16 %v477, %v477
    %491 = vrot.lane.b32.xlu0 %v489, 32
    %v492 = vpop.permute.xlu0 %491
    %v494 = vsel %vm70, %v492, 0
    %496 = vmatprep.subr.bf16.mxu0 0
    %497 = vmatpush1.bf16.msra.mxu0 %v66
    %498 = vmatprep.subr.bf16.mxu0 0
    %499 = vmatpush1.bf16.msra.mxu0 %v67
    %500 = vmatprep.subr.bf16.mxu0 0
    %501 = vmatpush1.bf16.msra.mxu0 0
    %502 = vmatprep.subr.bf16.mxu0 0
    %503 = vmatpush1.bf16.msra.mxu0 0
    %504 = vmatprep.subr.bf16.mxu0 0
    %505 = vmatpush1.bf16.msra.mxu0 0
    %506 = vmatprep.subr.bf16.mxu0 0
    %507 = vmatpush1.bf16.msra.mxu0 0
    %508 = vmatprep.subr.bf16.mxu0 0
    %509 = vmatpush1.bf16.msra.mxu0 0
    %510 = vmatprep.subr.bf16.mxu0 0
    %511 = vmatpush1.bf16.msra.mxu0 0
    %512 = vmatprep.subr.bf16.mxu0 0
    %513 = vmatpush1.bf16.msra.mxu0 0
    %514 = vmatprep.subr.bf16.mxu0 0
    %515 = vmatpush1.bf16.msra.mxu0 0
    %516 = vmatprep.subr.bf16.mxu0 0
    %517 = vmatpush1.bf16.msra.mxu0 0
    %518 = vmatprep.subr.bf16.mxu0 0
    %519 = vmatpush1.bf16.msra.mxu0 0
    %520 = vmatprep.subr.bf16.mxu0 0
    %521 = vmatpush1.bf16.msra.mxu0 0
    %522 = vmatprep.subr.bf16.mxu0 0
    %523 = vmatpush1.bf16.msra.mxu0 0
    %524 = vmatprep.subr.bf16.mxu0 0
    %525 = vmatpush1.bf16.msra.mxu0 0
    %526 = vmatprep.subr.bf16.mxu0 0
    %527 = vmatpush1.bf16.msra.mxu0 0
    %528 = vmatprep.mubr.bf16.mxu0 0
    %529 = vmatmul.mubr.bf16.gmra.mrb[0].mxu0 %v494
    %v530 = vpop.f32.mrb[0].mxu0
    %v531 = vadd.f32 0.0, %v530
    %v532 = vpop.f32.mrb[0].mxu0
    %v533 = vpop.f32.mrb[0].mxu0
    %v534 = vpop.f32.mrb[0].mxu0
    %535 = vdwg.mxu0
    %v536 = vadd.f32 %v488, %v531
    %v537 = vxor.u32 %v536, 2147483648
    %v538 = vmul.f32 %v537, 1.442695
    %v539 = vpow.pop %v538
    %v540 = vadd.f32 %v539, 1.0
    %v541 = vrcp.pop %v540
    %v542 = vmul.f32 1.0, %v541
    %v543 = vtanh.pop %v536
    %v544 = vmul.f32 %v542, %v471
    %546 = vrot.lane.b32.xlu0 %v543, 64
    %v547 = vpop.permute.xlu0 %546
    %v549 = vmul.f32 %v542, %v547
    %551 = vrot.lane.b32.xlu0 %v549, 32
    %v552 = vpop.permute.xlu0 %551
    %v554 = vadd.f32 %v544, %v552
    %v555 = vtanh.pop %v554
    %557 = vrot.lane.b32.xlu0 %v555, 64
    %v558 = vpop.permute.xlu0 %557
    %v560 = vmul.f32 %v542, %v558
    %s561 = sadd.s32 %s38, 5
    %v562 = vstv %s561
    %vm563 = vcmp.eq.s32.totalorder %v43, %v562
    %v564 = vsel %vm563, 1, 0
    %565 = vset.pattern.permute.xlu0 0
    %566 = vperm.xlu0 %565, %v564
    %v567 = vpop.permute.xlu0 %566
    %vm568 = vcmp.eq.s32.totalorder %v567, 1
    %v569 = vsel %vm568, %v560, %v486
    %s570 = scalar_lea.vmem %s1, 12
    %v571 = vld [vmem:[%s570] sm:$0x3]
    %v572 = vpack.c.bf16 %v560, %v560
    %574 = vrot.lane.b32.xlu0 %v572, 32
    %v575 = vpop.permute.xlu0 %574
    %v577 = vsel %vm70, %v575, 0
    %579 = vmatprep.subr.bf16.mxu0 0
    %580 = vmatpush1.bf16.msra.mxu0 %v66
    %581 = vmatprep.subr.bf16.mxu0 0
    %582 = vmatpush1.bf16.msra.mxu0 %v67
    %583 = vmatprep.subr.bf16.mxu0 0
    %584 = vmatpush1.bf16.msra.mxu0 0
    %585 = vmatprep.subr.bf16.mxu0 0
    %586 = vmatpush1.bf16.msra.mxu0 0
    %587 = vmatprep.subr.bf16.mxu0 0
    %588 = vmatpush1.bf16.msra.mxu0 0
    %589 = vmatprep.subr.bf16.mxu0 0
    %590 = vmatpush1.bf16.msra.mxu0 0
    %591 = vmatprep.subr.bf16.mxu0 0
    %592 = vmatpush1.bf16.msra.mxu0 0
    %593 = vmatprep.subr.bf16.mxu0 0
    %594 = vmatpush1.bf16.msra.mxu0 0
    %595 = vmatprep.subr.bf16.mxu0 0
    %596 = vmatpush1.bf16.msra.mxu0 0
    %597 = vmatprep.subr.bf16.mxu0 0
    %598 = vmatpush1.bf16.msra.mxu0 0
    %599 = vmatprep.subr.bf16.mxu0 0
    %600 = vmatpush1.bf16.msra.mxu0 0
    %601 = vmatprep.subr.bf16.mxu0 0
    %602 = vmatpush1.bf16.msra.mxu0 0
    %603 = vmatprep.subr.bf16.mxu0 0
    %604 = vmatpush1.bf16.msra.mxu0 0
    %605 = vmatprep.subr.bf16.mxu0 0
    %606 = vmatpush1.bf16.msra.mxu0 0
    %607 = vmatprep.subr.bf16.mxu0 0
    %608 = vmatpush1.bf16.msra.mxu0 0
    %609 = vmatprep.subr.bf16.mxu0 0
    %610 = vmatpush1.bf16.msra.mxu0 0
    %611 = vmatprep.mubr.bf16.mxu0 0
    %612 = vmatmul.mubr.bf16.gmra.mrb[0].mxu0 %v577
    %v613 = vpop.f32.mrb[0].mxu0
    %v614 = vadd.f32 0.0, %v613
    %v615 = vpop.f32.mrb[0].mxu0
    %v616 = vpop.f32.mrb[0].mxu0
    %v617 = vpop.f32.mrb[0].mxu0
    %618 = vdwg.mxu0
    %v619 = vadd.f32 %v571, %v614
    %v620 = vxor.u32 %v619, 2147483648
    %v621 = vmul.f32 %v620, 1.442695
    %v622 = vpow.pop %v621
    %v623 = vadd.f32 %v622, 1.0
    %v624 = vrcp.pop %v623
    %v625 = vmul.f32 1.0, %v624
    %v626 = vtanh.pop %v619
    %v627 = vmul.f32 %v625, %v554
    %629 = vrot.lane.b32.xlu0 %v626, 64
    %v630 = vpop.permute.xlu0 %629
    %v632 = vmul.f32 %v625, %v630
    %634 = vrot.lane.b32.xlu0 %v632, 32
    %v635 = vpop.permute.xlu0 %634
    %v637 = vadd.f32 %v627, %v635
    %v638 = vtanh.pop %v637
    %640 = vrot.lane.b32.xlu0 %v638, 64
    %v641 = vpop.permute.xlu0 %640
    %v643 = vmul.f32 %v625, %v641
    %s644 = sadd.s32 %s38, 6
    %v645 = vstv %s644
    %vm646 = vcmp.eq.s32.totalorder %v43, %v645
    %v647 = vsel %vm646, 1, 0
    %648 = vset.pattern.permute.xlu0 0
    %649 = vperm.xlu0 %648, %v647
    %v650 = vpop.permute.xlu0 %649
    %vm651 = vcmp.eq.s32.totalorder %v650, 1
    %v652 = vsel %vm651, %v643, %v569
    %s653 = scalar_lea.vmem %s1, 14
    %v654 = vld [vmem:[%s653] sm:$0x3]
    %v655 = vpack.c.bf16 %v643, %v643
    %657 = vrot.lane.b32.xlu0 %v655, 32
    %v658 = vpop.permute.xlu0 %657
    %v660 = vsel %vm70, %v658, 0
    %662 = vmatprep.subr.bf16.mxu0 0
    %663 = vmatpush1.bf16.msra.mxu0 %v66
    %664 = vmatprep.subr.bf16.mxu0 0
    %665 = vmatpush1.bf16.msra.mxu0 %v67
    %666 = vmatprep.subr.bf16.mxu0 0
    %667 = vmatpush1.bf16.msra.mxu0 0
    %668 = vmatprep.subr.bf16.mxu0 0
    %669 = vmatpush1.bf16.msra.mxu0 0
    %670 = vmatprep.subr.bf16.mxu0 0
    %671 = vmatpush1.bf16.msra.mxu0 0
    %672 = vmatprep.subr.bf16.mxu0 0
    %673 = vmatpush1.bf16.msra.mxu0 0
    %674 = vmatprep.subr.bf16.mxu0 0
    %675 = vmatpush1.bf16.msra.mxu0 0
    %676 = vmatprep.subr.bf16.mxu0 0
    %677 = vmatpush1.bf16.msra.mxu0 0
    %678 = vmatprep.subr.bf16.mxu0 0
    %679 = vmatpush1.bf16.msra.mxu0 0
    %680 = vmatprep.subr.bf16.mxu0 0
    %681 = vmatpush1.bf16.msra.mxu0 0
    %682 = vmatprep.subr.bf16.mxu0 0
    %683 = vmatpush1.bf16.msra.mxu0 0
    %684 = vmatprep.subr.bf16.mxu0 0
    %685 = vmatpush1.bf16.msra.mxu0 0
    %686 = vmatprep.subr.bf16.mxu0 0
    %687 = vmatpush1.bf16.msra.mxu0 0
    %688 = vmatprep.subr.bf16.mxu0 0
    %689 = vmatpush1.bf16.msra.mxu0 0
    %690 = vmatprep.subr.bf16.mxu0 0
    %691 = vmatpush1.bf16.msra.mxu0 0
    %692 = vmatprep.subr.bf16.mxu0 0
    %693 = vmatpush1.bf16.msra.mxu0 0
    %694 = vmatprep.mubr.bf16.mxu0 0
    %695 = vmatmul.mubr.bf16.gmra.mrb[0].mxu0 %v660
    %v696 = vpop.f32.mrb[0].mxu0
    %v697 = vadd.f32 0.0, %v696
    %v698 = vpop.f32.mrb[0].mxu0
    %v699 = vpop.f32.mrb[0].mxu0
    %v700 = vpop.f32.mrb[0].mxu0
    %701 = vdwg.mxu0
    %v702 = vadd.f32 %v654, %v697
    %v703 = vxor.u32 %v702, 2147483648
    %v704 = vmul.f32 %v703, 1.442695
    %v705 = vpow.pop %v704
    %v706 = vadd.f32 %v705, 1.0
    %v707 = vrcp.pop %v706
    %v708 = vmul.f32 1.0, %v707
    %v709 = vtanh.pop %v702
    %v710 = vmul.f32 %v708, %v637
    %712 = vrot.lane.b32.xlu0 %v709, 64
    %v713 = vpop.permute.xlu0 %712
    %v715 = vmul.f32 %v708, %v713
    %717 = vrot.lane.b32.xlu0 %v715, 32
    %v718 = vpop.permute.xlu0 %717
    %v720 = vadd.f32 %v710, %v718
    %v721 = vtanh.pop %v720
    %723 = vrot.lane.b32.xlu0 %v721, 64
    %v724 = vpop.permute.xlu0 %723
    %v726 = vmul.f32 %v708, %v724
    %s727 = sadd.s32 %s38, 7
    %v728 = vstv %s727
    %vm729 = vcmp.eq.s32.totalorder %v43, %v728
    %v730 = vsel %vm729, 1, 0
    %731 = vset.pattern.permute.xlu0 0
    %732 = vperm.xlu0 %731, %v730
    %v733 = vpop.permute.xlu0 %732
    %vm734 = vcmp.eq.s32.totalorder %v733, 1
    %v735 = vsel %vm734, %v726, %v652
    %737 = vrot.lane.b32.xlu0 %v726, 32
    %v738 = vpop.permute.xlu0 %737
    %vm740 = vcmask 254976
    %741 = vst.msk [vmem:[#allocation2] sm:$0x3] %vm740, %v738
    %743 = vrot.lane.b32.xlu0 %v720, 96
    %v744 = vpop.permute.xlu0 %743
    %746 = vst.msk [vmem:[#allocation3] sm:$0x3] %vm740, %v744
    %748 = vrot.lane.b32.xlu0 %v735, 32
    %v749 = vpop.permute.xlu0 %748
    %751 = vst.msk [vmem:[%s6] sm:$0x3] %vm740, %v749
  $region29: #{rnn_forward.7} parent=0 // pred_fallthru
    _
  %p752 = pneg %p50
  // Predicated region
  $region30: #{rnn_forward.7} parent=0 // pred_check
    _
  $region31: #{rnn_forward.7} parent=0 // pred_check_branch
    %754 = sbr.rel (%p50) target = $region33
  $region32: #{rnn_forward.7} parent=0 // pred_region
    %v755 = vld [vmem:[#allocation2] sm:$0x3]
    %v756 = vld [vmem:[#allocation3] sm:$0x3]
    %v757 = vld [vmem:[%s1] sm:$0x3]
    %v758 = vpack.c.bf16 %v755, %v755
    %v763 = vunpack.c.l.b16 %v39
    %v764 = vunpack.c.l.b16 %v40
    %v765 = vunpack.c.l.b16 %v41
    %v766 = vunpack.c.l.b16 %v42
    %v767 = vpack.c.b16 %v764, %v763
    %v768 = vpack.c.b16 %v766, %v765
    %vm771 = vcmask 261120
    %v773 = vsel %vm771, %v758, 0
    %775 = vmatprep.subr.bf16.mxu0 0
    %776 = vmatpush1.bf16.msra.mxu0 %v767
    %777 = vmatprep.subr.bf16.mxu0 0
    %778 = vmatpush1.bf16.msra.mxu0 %v768
    %779 = vmatprep.subr.bf16.mxu0 0
    %780 = vmatpush1.bf16.msra.mxu0 0
    %781 = vmatprep.subr.bf16.mxu0 0
    %782 = vmatpush1.bf16.msra.mxu0 0
    %783 = vmatprep.subr.bf16.mxu0 0
    %784 = vmatpush1.bf16.msra.mxu0 0
    %785 = vmatprep.subr.bf16.mxu0 0
    %786 = vmatpush1.bf16.msra.mxu0 0
    %787 = vmatprep.subr.bf16.mxu0 0
    %788 = vmatpush1.bf16.msra.mxu0 0
    %789 = vmatprep.subr.bf16.mxu0 0
    %790 = vmatpush1.bf16.msra.mxu0 0
    %791 = vmatprep.subr.bf16.mxu0 0
    %792 = vmatpush1.bf16.msra.mxu0 0
    %793 = vmatprep.subr.bf16.mxu0 0
    %794 = vmatpush1.bf16.msra.mxu0 0
    %795 = vmatprep.subr.bf16.mxu0 0
    %796 = vmatpush1.bf16.msra.mxu0 0
    %797 = vmatprep.subr.bf16.mxu0 0
    %798 = vmatpush1.bf16.msra.mxu0 0
    %799 = vmatprep.subr.bf16.mxu0 0
    %800 = vmatpush1.bf16.msra.mxu0 0
    %801 = vmatprep.subr.bf16.mxu0 0
    %802 = vmatpush1.bf16.msra.mxu0 0
    %803 = vmatprep.subr.bf16.mxu0 0
    %804 = vmatpush1.bf16.msra.mxu0 0
    %805 = vmatprep.subr.bf16.mxu0 0
    %806 = vmatpush1.bf16.msra.mxu0 0
    %807 = vmatprep.mubr.bf16.mxu0 0
    %808 = vmatmul.mubr.bf16.gmra.mrb[0].mxu0 %v773
    %v809 = vpop.f32.mrb[0].mxu0
    %v810 = vadd.f32 0.0, %v809
    %v811 = vpop.f32.mrb[0].mxu0
    %v812 = vpop.f32.mrb[0].mxu0
    %v813 = vpop.f32.mrb[0].mxu0
    %814 = vdwg.mxu0
    %v815 = vadd.f32 %v757, %v810
    %v816 = vxor.u32 %v815, 2147483648
    %v817 = vmul.f32 %v816, 1.442695
    %v818 = vpow.pop %v817
    %v819 = vadd.f32 %v818, 1.0
    %v820 = vrcp.pop %v819
    %v821 = vmul.f32 1.0, %v820
    %v822 = vtanh.pop %v815
    %824 = vrot.lane.b32.xlu0 %v756, 32
    %v825 = vpop.permute.xlu0 %824
    %v827 = vmul.f32 %v821, %v825
    %829 = vrot.lane.b32.xlu0 %v822, 64
    %v830 = vpop.permute.xlu0 %829
    %v832 = vmul.f32 %v821, %v830
    %834 = vrot.lane.b32.xlu0 %v832, 32
    %v835 = vpop.permute.xlu0 %834
    %v837 = vadd.f32 %v827, %v835
    %v838 = vtanh.pop %v837
    %840 = vrot.lane.b32.xlu0 %v838, 64
    %v841 = vpop.permute.xlu0 %840
    %v843 = vmul.f32 %v821, %v841
    %s844 = scalar_lea.vmem %s1, 2
    %v845 = vld [vmem:[%s844] sm:$0x3]
    %v846 = vpack.c.bf16 %v843, %v843
    %848 = vrot.lane.b32.xlu0 %v846, 32
    %v849 = vpop.permute.xlu0 %848
    %v851 = vsel %vm771, %v849, 0
    %853 = vmatprep.subr.bf16.mxu0 0
    %854 = vmatpush1.bf16.msra.mxu0 %v767
    %855 = vmatprep.subr.bf16.mxu0 0
    %856 = vmatpush1.bf16.msra.mxu0 %v768
    %857 = vmatprep.subr.bf16.mxu0 0
    %858 = vmatpush1.bf16.msra.mxu0 0
    %859 = vmatprep.subr.bf16.mxu0 0
    %860 = vmatpush1.bf16.msra.mxu0 0
    %861 = vmatprep.subr.bf16.mxu0 0
    %862 = vmatpush1.bf16.msra.mxu0 0
    %863 = vmatprep.subr.bf16.mxu0 0
    %864 = vmatpush1.bf16.msra.mxu0 0
    %865 = vmatprep.subr.bf16.mxu0 0
    %866 = vmatpush1.bf16.msra.mxu0 0
    %867 = vmatprep.subr.bf16.mxu0 0
    %868 = vmatpush1.bf16.msra.mxu0 0
    %869 = vmatprep.subr.bf16.mxu0 0
    %870 = vmatpush1.bf16.msra.mxu0 0
    %871 = vmatprep.subr.bf16.mxu0 0
    %872 = vmatpush1.bf16.msra.mxu0 0
    %873 = vmatprep.subr.bf16.mxu0 0
    %874 = vmatpush1.bf16.msra.mxu0 0
    %875 = vmatprep.subr.bf16.mxu0 0
    %876 = vmatpush1.bf16.msra.mxu0 0
    %877 = vmatprep.subr.bf16.mxu0 0
    %878 = vmatpush1.bf16.msra.mxu0 0
    %879 = vmatprep.subr.bf16.mxu0 0
    %880 = vmatpush1.bf16.msra.mxu0 0
    %881 = vmatprep.subr.bf16.mxu0 0
    %882 = vmatpush1.bf16.msra.mxu0 0
    %883 = vmatprep.subr.bf16.mxu0 0
    %884 = vmatpush1.bf16.msra.mxu0 0
    %885 = vmatprep.mubr.bf16.mxu0 0
    %886 = vmatmul.mubr.bf16.gmra.mrb[0].mxu0 %v851
    %v887 = vpop.f32.mrb[0].mxu0
    %v888 = vadd.f32 0.0, %v887
    %v889 = vpop.f32.mrb[0].mxu0
    %v890 = vpop.f32.mrb[0].mxu0
    %v891 = vpop.f32.mrb[0].mxu0
    %892 = vdwg.mxu0
    %v893 = vadd.f32 %v845, %v888
    %v894 = vxor.u32 %v893, 2147483648
    %v895 = vmul.f32 %v894, 1.442695
    %v896 = vpow.pop %v895
    %v897 = vadd.f32 %v896, 1.0
    %v898 = vrcp.pop %v897
    %v899 = vmul.f32 1.0, %v898
    %v900 = vtanh.pop %v893
    %v901 = vmul.f32 %v899, %v837
    %903 = vrot.lane.b32.xlu0 %v900, 64
    %v904 = vpop.permute.xlu0 %903
    %v906 = vmul.f32 %v899, %v904
    %908 = vrot.lane.b32.xlu0 %v906, 32
    %v909 = vpop.permute.xlu0 %908
    %v911 = vadd.f32 %v901, %v909
    %v912 = vtanh.pop %v911
    %914 = vrot.lane.b32.xlu0 %v912, 64
    %v915 = vpop.permute.xlu0 %914
    %v917 = vmul.f32 %v899, %v915
    %s918 = scalar_lea.vmem %s1, 4
    %v919 = vld [vmem:[%s918] sm:$0x3]
    %v920 = vpack.c.bf16 %v917, %v917
    %922 = vrot.lane.b32.xlu0 %v920, 32
    %v923 = vpop.permute.xlu0 %922
    %v925 = vsel %vm771, %v923, 0
    %927 = vmatprep.subr.bf16.mxu0 0
    %928 = vmatpush1.bf16.msra.mxu0 %v767
    %929 = vmatprep.subr.bf16.mxu0 0
    %930 = vmatpush1.bf16.msra.mxu0 %v768
    %931 = vmatprep.subr.bf16.mxu0 0
    %932 = vmatpush1.bf16.msra.mxu0 0
    %933 = vmatprep.subr.bf16.mxu0 0
    %934 = vmatpush1.bf16.msra.mxu0 0
    %935 = vmatprep.subr.bf16.mxu0 0
    %936 = vmatpush1.bf16.msra.mxu0 0
    %937 = vmatprep.subr.bf16.mxu0 0
    %938 = vmatpush1.bf16.msra.mxu0 0
    %939 = vmatprep.subr.bf16.mxu0 0
    %940 = vmatpush1.bf16.msra.mxu0 0
    %941 = vmatprep.subr.bf16.mxu0 0
    %942 = vmatpush1.bf16.msra.mxu0 0
    %943 = vmatprep.subr.bf16.mxu0 0
    %944 = vmatpush1.bf16.msra.mxu0 0
    %945 = vmatprep.subr.bf16.mxu0 0
    %946 = vmatpush1.bf16.msra.mxu0 0
    %947 = vmatprep.subr.bf16.mxu0 0
    %948 = vmatpush1.bf16.msra.mxu0 0
    %949 = vmatprep.subr.bf16.mxu0 0
    %950 = vmatpush1.bf16.msra.mxu0 0
    %951 = vmatprep.subr.bf16.mxu0 0
    %952 = vmatpush1.bf16.msra.mxu0 0
    %953 = vmatprep.subr.bf16.mxu0 0
    %954 = vmatpush1.bf16.msra.mxu0 0
    %955 = vmatprep.subr.bf16.mxu0 0
    %956 = vmatpush1.bf16.msra.mxu0 0
    %957 = vmatprep.subr.bf16.mxu0 0
    %958 = vmatpush1.bf16.msra.mxu0 0
    %959 = vmatprep.mubr.bf16.mxu0 0
    %960 = vmatmul.mubr.bf16.gmra.mrb[0].mxu0 %v925
    %v961 = vpop.f32.mrb[0].mxu0
    %v962 = vadd.f32 0.0, %v961
    %v963 = vpop.f32.mrb[0].mxu0
    %v964 = vpop.f32.mrb[0].mxu0
    %v965 = vpop.f32.mrb[0].mxu0
    %966 = vdwg.mxu0
    %v967 = vadd.f32 %v919, %v962
    %v968 = vxor.u32 %v967, 2147483648
    %v969 = vmul.f32 %v968, 1.442695
    %v970 = vpow.pop %v969
    %v971 = vadd.f32 %v970, 1.0
    %v972 = vrcp.pop %v971
    %v973 = vmul.f32 1.0, %v972
    %v974 = vtanh.pop %v967
    %v975 = vmul.f32 %v973, %v911
    %977 = vrot.lane.b32.xlu0 %v974, 64
    %v978 = vpop.permute.xlu0 %977
    %v980 = vmul.f32 %v973, %v978
    %982 = vrot.lane.b32.xlu0 %v980, 32
    %v983 = vpop.permute.xlu0 %982
    %v985 = vadd.f32 %v975, %v983
    %v986 = vtanh.pop %v985
    %988 = vrot.lane.b32.xlu0 %v986, 64
    %v989 = vpop.permute.xlu0 %988
    %v991 = vmul.f32 %v973, %v989
    %s992 = scalar_lea.vmem %s1, 6
    %v993 = vld [vmem:[%s992] sm:$0x3]
    %v994 = vpack.c.bf16 %v991, %v991
    %996 = vrot.lane.b32.xlu0 %v994, 32
    %v997 = vpop.permute.xlu0 %996
    %v999 = vsel %vm771, %v997, 0
    %1001 = vmatprep.subr.bf16.mxu0 0
    %1002 = vmatpush1.bf16.msra.mxu0 %v767
    %1003 = vmatprep.subr.bf16.mxu0 0
    %1004 = vmatpush1.bf16.msra.mxu0 %v768
    %1005 = vmatprep.subr.bf16.mxu0 0
    %1006 = vmatpush1.bf16.msra.mxu0 0
    %1007 = vmatprep.subr.bf16.mxu0 0
    %1008 = vmatpush1.bf16.msra.mxu0 0
    %1009 = vmatprep.subr.bf16.mxu0 0
    %1010 = vmatpush1.bf16.msra.mxu0 0
    %1011 = vmatprep.subr.bf16.mxu0 0
    %1012 = vmatpush1.bf16.msra.mxu0 0
    %1013 = vmatprep.subr.bf16.mxu0 0
    %1014 = vmatpush1.bf16.msra.mxu0 0
    %1015 = vmatprep.subr.bf16.mxu0 0
    %1016 = vmatpush1.bf16.msra.mxu0 0
    %1017 = vmatprep.subr.bf16.mxu0 0
    %1018 = vmatpush1.bf16.msra.mxu0 0
    %1019 = vmatprep.subr.bf16.mxu0 0
    %1020 = vmatpush1.bf16.msra.mxu0 0
    %1021 = vmatprep.subr.bf16.mxu0 0
    %1022 = vmatpush1.bf16.msra.mxu0 0
    %1023 = vmatprep.subr.bf16.mxu0 0
    %1024 = vmatpush1.bf16.msra.mxu0 0
    %1025 = vmatprep.subr.bf16.mxu0 0
    %1026 = vmatpush1.bf16.msra.mxu0 0
    %1027 = vmatprep.subr.bf16.mxu0 0
    %1028 = vmatpush1.bf16.msra.mxu0 0
    %1029 = vmatprep.subr.bf16.mxu0 0
    %1030 = vmatpush1.bf16.msra.mxu0 0
    %1031 = vmatprep.subr.bf16.mxu0 0
    %1032 = vmatpush1.bf16.msra.mxu0 0
    %1033 = vmatprep.mubr.bf16.mxu0 0
    %1034 = vmatmul.mubr.bf16.gmra.mrb[0].mxu0 %v999
    %v1035 = vpop.f32.mrb[0].mxu0
    %v1036 = vadd.f32 0.0, %v1035
    %v1037 = vpop.f32.mrb[0].mxu0
    %v1038 = vpop.f32.mrb[0].mxu0
    %v1039 = vpop.f32.mrb[0].mxu0
    %1040 = vdwg.mxu0
    %v1041 = vadd.f32 %v993, %v1036
    %v1042 = vxor.u32 %v1041, 2147483648
    %v1043 = vmul.f32 %v1042, 1.442695
    %v1044 = vpow.pop %v1043
    %v1045 = vadd.f32 %v1044, 1.0
    %v1046 = vrcp.pop %v1045
    %v1047 = vmul.f32 1.0, %v1046
    %v1048 = vtanh.pop %v1041
    %v1049 = vmul.f32 %v1047, %v985
    %1051 = vrot.lane.b32.xlu0 %v1048, 64
    %v1052 = vpop.permute.xlu0 %1051
    %v1054 = vmul.f32 %v1047, %v1052
    %1056 = vrot.lane.b32.xlu0 %v1054, 32
    %v1057 = vpop.permute.xlu0 %1056
    %v1059 = vadd.f32 %v1049, %v1057
    %v1060 = vtanh.pop %v1059
    %1062 = vrot.lane.b32.xlu0 %v1060, 64
    %v1063 = vpop.permute.xlu0 %1062
    %v1065 = vmul.f32 %v1047, %v1063
    %s1066 = scalar_lea.vmem %s1, 8
    %v1067 = vld [vmem:[%s1066] sm:$0x3]
    %v1068 = vpack.c.bf16 %v1065, %v1065
    %1070 = vrot.lane.b32.xlu0 %v1068, 32
    %v1071 = vpop.permute.xlu0 %1070
    %v1073 = vsel %vm771, %v1071, 0
    %1075 = vmatprep.subr.bf16.mxu0 0
    %1076 = vmatpush1.bf16.msra.mxu0 %v767
    %1077 = vmatprep.subr.bf16.mxu0 0
    %1078 = vmatpush1.bf16.msra.mxu0 %v768
    %1079 = vmatprep.subr.bf16.mxu0 0
    %1080 = vmatpush1.bf16.msra.mxu0 0
    %1081 = vmatprep.subr.bf16.mxu0 0
    %1082 = vmatpush1.bf16.msra.mxu0 0
    %1083 = vmatprep.subr.bf16.mxu0 0
    %1084 = vmatpush1.bf16.msra.mxu0 0
    %1085 = vmatprep.subr.bf16.mxu0 0
    %1086 = vmatpush1.bf16.msra.mxu0 0
    %1087 = vmatprep.subr.bf16.mxu0 0
    %1088 = vmatpush1.bf16.msra.mxu0 0
    %1089 = vmatprep.subr.bf16.mxu0 0
    %1090 = vmatpush1.bf16.msra.mxu0 0
    %1091 = vmatprep.subr.bf16.mxu0 0
    %1092 = vmatpush1.bf16.msra.mxu0 0
    %1093 = vmatprep.subr.bf16.mxu0 0
    %1094 = vmatpush1.bf16.msra.mxu0 0
    %1095 = vmatprep.subr.bf16.mxu0 0
    %1096 = vmatpush1.bf16.msra.mxu0 0
    %1097 = vmatprep.subr.bf16.mxu0 0
    %1098 = vmatpush1.bf16.msra.mxu0 0
    %1099 = vmatprep.subr.bf16.mxu0 0
    %1100 = vmatpush1.bf16.msra.mxu0 0
    %1101 = vmatprep.subr.bf16.mxu0 0
    %1102 = vmatpush1.bf16.msra.mxu0 0
    %1103 = vmatprep.subr.bf16.mxu0 0
    %1104 = vmatpush1.bf16.msra.mxu0 0
    %1105 = vmatprep.subr.bf16.mxu0 0
    %1106 = vmatpush1.bf16.msra.mxu0 0
    %1107 = vmatprep.mubr.bf16.mxu0 0
    %1108 = vmatmul.mubr.bf16.gmra.mrb[0].mxu0 %v1073
    %v1109 = vpop.f32.mrb[0].mxu0
    %v1110 = vadd.f32 0.0, %v1109
    %v1111 = vpop.f32.mrb[0].mxu0
    %v1112 = vpop.f32.mrb[0].mxu0
    %v1113 = vpop.f32.mrb[0].mxu0
    %1114 = vdwg.mxu0
    %v1115 = vadd.f32 %v1067, %v1110
    %v1116 = vxor.u32 %v1115, 2147483648
    %v1117 = vmul.f32 %v1116, 1.442695
    %v1118 = vpow.pop %v1117
    %v1119 = vadd.f32 %v1118, 1.0
    %v1120 = vrcp.pop %v1119
    %v1121 = vmul.f32 1.0, %v1120
    %v1122 = vtanh.pop %v1115
    %v1123 = vmul.f32 %v1121, %v1059
    %1125 = vrot.lane.b32.xlu0 %v1122, 64
    %v1126 = vpop.permute.xlu0 %1125
    %v1128 = vmul.f32 %v1121, %v1126
    %1130 = vrot.lane.b32.xlu0 %v1128, 32
    %v1131 = vpop.permute.xlu0 %1130
    %v1133 = vadd.f32 %v1123, %v1131
    %v1134 = vtanh.pop %v1133
    %1136 = vrot.lane.b32.xlu0 %v1134, 64
    %v1137 = vpop.permute.xlu0 %1136
    %v1139 = vmul.f32 %v1121, %v1137
    %s1140 = scalar_lea.vmem %s1, 10
    %v1141 = vld [vmem:[%s1140] sm:$0x3]
    %v1142 = vpack.c.bf16 %v1139, %v1139
    %1144 = vrot.lane.b32.xlu0 %v1142, 32
    %v1145 = vpop.permute.xlu0 %1144
    %v1147 = vsel %vm771, %v1145, 0
    %1149 = vmatprep.subr.bf16.mxu0 0
    %1150 = vmatpush1.bf16.msra.mxu0 %v767
    %1151 = vmatprep.subr.bf16.mxu0 0
    %1152 = vmatpush1.bf16.msra.mxu0 %v768
    %1153 = vmatprep.subr.bf16.mxu0 0
    %1154 = vmatpush1.bf16.msra.mxu0 0
    %1155 = vmatprep.subr.bf16.mxu0 0
    %1156 = vmatpush1.bf16.msra.mxu0 0
    %1157 = vmatprep.subr.bf16.mxu0 0
    %1158 = vmatpush1.bf16.msra.mxu0 0
    %1159 = vmatprep.subr.bf16.mxu0 0
    %1160 = vmatpush1.bf16.msra.mxu0 0
    %1161 = vmatprep.subr.bf16.mxu0 0
    %1162 = vmatpush1.bf16.msra.mxu0 0
    %1163 = vmatprep.subr.bf16.mxu0 0
    %1164 = vmatpush1.bf16.msra.mxu0 0
    %1165 = vmatprep.subr.bf16.mxu0 0
    %1166 = vmatpush1.bf16.msra.mxu0 0
    %1167 = vmatprep.subr.bf16.mxu0 0
    %1168 = vmatpush1.bf16.msra.mxu0 0
    %1169 = vmatprep.subr.bf16.mxu0 0
    %1170 = vmatpush1.bf16.msra.mxu0 0
    %1171 = vmatprep.subr.bf16.mxu0 0
    %1172 = vmatpush1.bf16.msra.mxu0 0
    %1173 = vmatprep.subr.bf16.mxu0 0
    %1174 = vmatpush1.bf16.msra.mxu0 0
    %1175 = vmatprep.subr.bf16.mxu0 0
    %1176 = vmatpush1.bf16.msra.mxu0 0
    %1177 = vmatprep.subr.bf16.mxu0 0
    %1178 = vmatpush1.bf16.msra.mxu0 0
    %1179 = vmatprep.subr.bf16.mxu0 0
    %1180 = vmatpush1.bf16.msra.mxu0 0
    %1181 = vmatprep.mubr.bf16.mxu0 0
    %1182 = vmatmul.mubr.bf16.gmra.mrb[0].mxu0 %v1147
    %v1183 = vpop.f32.mrb[0].mxu0
    %v1184 = vadd.f32 0.0, %v1183
    %v1185 = vpop.f32.mrb[0].mxu0
    %v1186 = vpop.f32.mrb[0].mxu0
    %v1187 = vpop.f32.mrb[0].mxu0
    %1188 = vdwg.mxu0
    %v1189 = vadd.f32 %v1141, %v1184
    %v1190 = vxor.u32 %v1189, 2147483648
    %v1191 = vmul.f32 %v1190, 1.442695
    %v1192 = vpow.pop %v1191
    %v1193 = vadd.f32 %v1192, 1.0
    %v1194 = vrcp.pop %v1193
    %v1195 = vmul.f32 1.0, %v1194
    %v1196 = vtanh.pop %v1189
    %v1197 = vmul.f32 %v1195, %v1133
    %1199 = vrot.lane.b32.xlu0 %v1196, 64
    %v1200 = vpop.permute.xlu0 %1199
    %v1202 = vmul.f32 %v1195, %v1200
    %1204 = vrot.lane.b32.xlu0 %v1202, 32
    %v1205 = vpop.permute.xlu0 %1204
    %v1207 = vadd.f32 %v1197, %v1205
    %v1208 = vtanh.pop %v1207
    %1210 = vrot.lane.b32.xlu0 %v1208, 64
    %v1211 = vpop.permute.xlu0 %1210
    %v1213 = vmul.f32 %v1195, %v1211
    %s1214 = scalar_lea.vmem %s1, 12
    %v1215 = vld [vmem:[%s1214] sm:$0x3]
    %v1216 = vpack.c.bf16 %v1213, %v1213
    %1218 = vrot.lane.b32.xlu0 %v1216, 32
    %v1219 = vpop.permute.xlu0 %1218
    %v1221 = vsel %vm771, %v1219, 0
    %1223 = vmatprep.subr.bf16.mxu0 0
    %1224 = vmatpush1.bf16.msra.mxu0 %v767
    %1225 = vmatprep.subr.bf16.mxu0 0
    %1226 = vmatpush1.bf16.msra.mxu0 %v768
    %1227 = vmatprep.subr.bf16.mxu0 0
    %1228 = vmatpush1.bf16.msra.mxu0 0
    %1229 = vmatprep.subr.bf16.mxu0 0
    %1230 = vmatpush1.bf16.msra.mxu0 0
    %1231 = vmatprep.subr.bf16.mxu0 0
    %1232 = vmatpush1.bf16.msra.mxu0 0
    %1233 = vmatprep.subr.bf16.mxu0 0
    %1234 = vmatpush1.bf16.msra.mxu0 0
    %1235 = vmatprep.subr.bf16.mxu0 0
    %1236 = vmatpush1.bf16.msra.mxu0 0
    %1237 = vmatprep.subr.bf16.mxu0 0
    %1238 = vmatpush1.bf16.msra.mxu0 0
    %1239 = vmatprep.subr.bf16.mxu0 0
    %1240 = vmatpush1.bf16.msra.mxu0 0
    %1241 = vmatprep.subr.bf16.mxu0 0
    %1242 = vmatpush1.bf16.msra.mxu0 0
    %1243 = vmatprep.subr.bf16.mxu0 0
    %1244 = vmatpush1.bf16.msra.mxu0 0
    %1245 = vmatprep.subr.bf16.mxu0 0
    %1246 = vmatpush1.bf16.msra.mxu0 0
    %1247 = vmatprep.subr.bf16.mxu0 0
    %1248 = vmatpush1.bf16.msra.mxu0 0
    %1249 = vmatprep.subr.bf16.mxu0 0
    %1250 = vmatpush1.bf16.msra.mxu0 0
    %1251 = vmatprep.subr.bf16.mxu0 0
    %1252 = vmatpush1.bf16.msra.mxu0 0
    %1253 = vmatprep.subr.bf16.mxu0 0
    %1254 = vmatpush1.bf16.msra.mxu0 0
    %1255 = vmatprep.mubr.bf16.mxu0 0
    %1256 = vmatmul.mubr.bf16.gmra.mrb[0].mxu0 %v1221
    %v1257 = vpop.f32.mrb[0].mxu0
    %v1258 = vadd.f32 0.0, %v1257
    %v1259 = vpop.f32.mrb[0].mxu0
    %v1260 = vpop.f32.mrb[0].mxu0
    %v1261 = vpop.f32.mrb[0].mxu0
    %1262 = vdwg.mxu0
    %v1263 = vadd.f32 %v1215, %v1258
    %v1264 = vxor.u32 %v1263, 2147483648
    %v1265 = vmul.f32 %v1264, 1.442695
    %v1266 = vpow.pop %v1265
    %v1267 = vadd.f32 %v1266, 1.0
    %v1268 = vrcp.pop %v1267
    %v1269 = vmul.f32 1.0, %v1268
    %v1270 = vtanh.pop %v1263
    %v1271 = vmul.f32 %v1269, %v1207
    %1273 = vrot.lane.b32.xlu0 %v1270, 64
    %v1274 = vpop.permute.xlu0 %1273
    %v1276 = vmul.f32 %v1269, %v1274
    %1278 = vrot.lane.b32.xlu0 %v1276, 32
    %v1279 = vpop.permute.xlu0 %1278
    %v1281 = vadd.f32 %v1271, %v1279
    %v1282 = vtanh.pop %v1281
    %1284 = vrot.lane.b32.xlu0 %v1282, 64
    %v1285 = vpop.permute.xlu0 %1284
    %v1287 = vmul.f32 %v1269, %v1285
    %s1288 = scalar_lea.vmem %s1, 14
    %v1289 = vld [vmem:[%s1288] sm:$0x3]
    %v1290 = vpack.c.bf16 %v1287, %v1287
    %1292 = vrot.lane.b32.xlu0 %v1290, 32
    %v1293 = vpop.permute.xlu0 %1292
    %v1295 = vsel %vm771, %v1293, 0
    %1297 = vmatprep.subr.bf16.mxu0 0
    %1298 = vmatpush1.bf16.msra.mxu0 %v767
    %1299 = vmatprep.subr.bf16.mxu0 0
    %1300 = vmatpush1.bf16.msra.mxu0 %v768
    %1301 = vmatprep.subr.bf16.mxu0 0
    %1302 = vmatpush1.bf16.msra.mxu0 0
    %1303 = vmatprep.subr.bf16.mxu0 0
    %1304 = vmatpush1.bf16.msra.mxu0 0
    %1305 = vmatprep.subr.bf16.mxu0 0
    %1306 = vmatpush1.bf16.msra.mxu0 0
    %1307 = vmatprep.subr.bf16.mxu0 0
    %1308 = vmatpush1.bf16.msra.mxu0 0
    %1309 = vmatprep.subr.bf16.mxu0 0
    %1310 = vmatpush1.bf16.msra.mxu0 0
    %1311 = vmatprep.subr.bf16.mxu0 0
    %1312 = vmatpush1.bf16.msra.mxu0 0
    %1313 = vmatprep.subr.bf16.mxu0 0
    %1314 = vmatpush1.bf16.msra.mxu0 0
    %1315 = vmatprep.subr.bf16.mxu0 0
    %1316 = vmatpush1.bf16.msra.mxu0 0
    %1317 = vmatprep.subr.bf16.mxu0 0
    %1318 = vmatpush1.bf16.msra.mxu0 0
    %1319 = vmatprep.subr.bf16.mxu0 0
    %1320 = vmatpush1.bf16.msra.mxu0 0
    %1321 = vmatprep.subr.bf16.mxu0 0
    %1322 = vmatpush1.bf16.msra.mxu0 0
    %1323 = vmatprep.subr.bf16.mxu0 0
    %1324 = vmatpush1.bf16.msra.mxu0 0
    %1325 = vmatprep.subr.bf16.mxu0 0
    %1326 = vmatpush1.bf16.msra.mxu0 0
    %1327 = vmatprep.subr.bf16.mxu0 0
    %1328 = vmatpush1.bf16.msra.mxu0 0
    %1329 = vmatprep.mubr.bf16.mxu0 0
    %1330 = vmatmul.mubr.bf16.gmra.mrb[0].mxu0 %v1295
    %v1331 = vpop.f32.mrb[0].mxu0
    %v1332 = vadd.f32 0.0, %v1331
    %v1333 = vpop.f32.mrb[0].mxu0
    %v1334 = vpop.f32.mrb[0].mxu0
    %v1335 = vpop.f32.mrb[0].mxu0
    %1336 = vdwg.mxu0
    %v1337 = vadd.f32 %v1289, %v1332
    %v1338 = vxor.u32 %v1337, 2147483648
    %v1339 = vmul.f32 %v1338, 1.442695
    %v1340 = vpow.pop %v1339
    %v1341 = vadd.f32 %v1340, 1.0
    %v1342 = vrcp.pop %v1341
    %v1343 = vmul.f32 1.0, %v1342
    %v1344 = vtanh.pop %v1337
    %v1345 = vmul.f32 %v1343, %v1281
    %1347 = vrot.lane.b32.xlu0 %v1344, 64
    %v1348 = vpop.permute.xlu0 %1347
    %v1350 = vmul.f32 %v1343, %v1348
    %1352 = vrot.lane.b32.xlu0 %v1350, 32
    %v1353 = vpop.permute.xlu0 %1352
    %v1355 = vadd.f32 %v1345, %v1353
    %v1356 = vtanh.pop %v1355
    %1358 = vrot.lane.b32.xlu0 %v1356, 64
    %v1359 = vpop.permute.xlu0 %1358
    %v1361 = vmul.f32 %v1343, %v1359
    %1363 = vrot.lane.b32.xlu0 %v1361, 32
    %v1364 = vpop.permute.xlu0 %1363
    %vm1366 = vcmask 254976
    %1367 = vst.msk [vmem:[#allocation2] sm:$0x3] %vm1366, %v1364
    %1369 = vrot.lane.b32.xlu0 %v1355, 96
    %v1370 = vpop.permute.xlu0 %1369
    %1372 = vst.msk [vmem:[#allocation3] sm:$0x3] %vm1366, %v1370
  $region33: #{rnn_forward.7} parent=0 // pred_fallthru
    _
  // Predicated region
  $region34: #{rnn_forward.7} parent=0 // pred_check
    _
  $region35: #{rnn_forward.7} parent=0 // pred_check_branch
    %1374 = sbr.rel (0) target = $region37
  $region36: #{rnn_forward.7} parent=0 // pred_region
    _
  $region37: #{rnn_forward.7} parent=0 // pred_fallthru
    _
  // Predicated region
  $region38: #{rnn_forward.7} parent=0 // pred_check
    _
  $region39: #{rnn_forward.7} parent=0 // pred_check_branch
    %1376 = sbr.rel (0) target = $region41
  $region40: #{rnn_forward.7} parent=0 // pred_region
    _
  $region41: #{rnn_forward.7} parent=0 // pred_fallthru
    _

// kernel: rnn_forward.9
$region0: #{rnn_forward.9}
  #allocation0 [shape = 'u32[]', space=smem, size = 0x4, offset = 0x4, fixed_abs, tag = 'smem constant byte address 0x4 - core index']
  #allocation1 [shape = 'u32[144,128]{1,0:T(1,128)}', space=vmem, size = 0x12000, scoped, tag = 'internal scratch']
  #allocation2 [shape = 'f32[24,16]{1,0:T(8,128)}', space=vmem, size = 0x3000, scoped, tag = 'scratch operand']
  #allocation3 [shape = 'f32[24,1]{1,0:T(8,128)}', space=vmem, size = 0x3000, scoped, tag = 'scratch operand']
  #allocation4 [shape = 'f32[24,1]{1,0:T(8,128)}', space=vmem, size = 0x3000, scoped, tag = 'scratch operand']
  #allocation5 [shape = 'f32[24,1]{1,0:T(8,128)}', space=vmem, size = 0x3000, scoped, tag = 'scratch operand']
  #allocation6 [shape = 's32[24,1]{1,0:T(8,128)}', space=vmem, size = 0x3000, scoped, tag = 'scratch operand']
  #allocation7 [shape = 'f32[24,1]{1,0:T(8,128)}', space=vmem, size = 0x3000, scoped, tag = 'scratch operand']
  %s0 = inlined_call_operand.vmem [shape: f32[24,32], index: 0, kind: input, shape index: {}]
  %s1 = inlined_call_operand.vmem [shape: s32[24,1], index: 1, kind: input, shape index: {}]
  %s2 = inlined_call_operand.vmem [shape: bf16[32,16], index: 2, kind: input, shape index: {}]
  %s3 = inlined_call_operand.vmem [shape: f32[1,16], index: 3, kind: input, shape index: {}]
  %s4 = inlined_call_operand.vmem [shape: bf16[16,32], index: 4, kind: input, shape index: {}]
  %s5 = inlined_call_operand.vmem [shape: f32[1,32], index: 5, kind: input, shape index: {}]
  %s6 = inlined_call_operand.vmem [shape: s32[24,1], index: 6, kind: output, shape index: {0}]
  %s7 = inlined_call_operand.vmem [shape: f32[24,1], index: 7, kind: output, shape index: {1}]
  %8 = xla_tuple %s6, %s7
  %s9 = sld [smem:[#allocation0]]
  $region50: #{rnn_forward.9} parent=0
    _
  %s11 = ssub.s32 1, %s9
  %s12 = scalar_select 0, %s11, %s9
  // Predicated region
  $region2: #{rnn_forward.9} parent=0 // pred_check
    _
  $region3: #{rnn_forward.9} parent=0 // pred_check_branch
    %14 = sbr.rel (0) target = $region5
  $region4: #{rnn_forward.9} parent=0 // pred_region
    _
  $region5: #{rnn_forward.9} parent=0 // pred_fallthru
    _
  // Predicated region
  $region6: #{rnn_forward.9} parent=0 // pred_check
    _
  $region7: #{rnn_forward.9} parent=0 // pred_check_branch
    %16 = sbr.rel (0) target = $region9
  $region8: #{rnn_forward.9} parent=0 // pred_region
    _
  $region9: #{rnn_forward.9} parent=0 // pred_fallthru
    _
  // Predicated region
  $region10: #{rnn_forward.9} parent=0 // pred_check
    _
  $region11: #{rnn_forward.9} parent=0 // pred_check_branch
    %18 = sbr.rel (0) target = $region13
  $region12: #{rnn_forward.9} parent=0 // pred_region
    _
  $region13: #{rnn_forward.9} parent=0 // pred_fallthru
    _
  // Predicated region
  $region14: #{rnn_forward.9} parent=0 // pred_check
    _
  $region15: #{rnn_forward.9} parent=0 // pred_check_branch
    %20 = sbr.rel (0) target = $region17
  $region16: #{rnn_forward.9} parent=0 // pred_region
    _
  $region17: #{rnn_forward.9} parent=0 // pred_fallthru
    _
  // Predicated region
  $region18: #{rnn_forward.9} parent=0 // pred_check
    _
  $region19: #{rnn_forward.9} parent=0 // pred_check_branch
    %22 = sbr.rel (0) target = $region21
  $region20: #{rnn_forward.9} parent=0 // pred_region
    _
  $region21: #{rnn_forward.9} parent=0 // pred_fallthru
    _
  // Predicated region
  $region22: #{rnn_forward.9} parent=0 // pred_check
    _
  $region23: #{rnn_forward.9} parent=0 // pred_check_branch
    %24 = sbr.rel (0) target = $region25
  $region24: #{rnn_forward.9} parent=0 // pred_region
    _
  $region25: #{rnn_forward.9} parent=0 // pred_fallthru
    _
  %p26 = scmp.eq.s32.totalorder 0, 0
  // Predicated region
  $region26: #{rnn_forward.9} parent=0 // pred_check
    %p27 = pneg %p26
  $region27: #{rnn_forward.9} parent=0 // pred_check_branch
    %29 = sbr.rel (%p27) target = $region29
  $region28: #{rnn_forward.9} parent=0 // pred_region
    %v30 = vld [vmem:[%s0] sm:$0xff]
    %v31 = vld [vmem:[%s0 + $0x8] sm:$0xff]
    %v32 = vld [vmem:[%s0 + $0x10] sm:$0xff]
    %v33 = vld [vmem:[%s2] sm:$0xf]
    %v34 = vld [vmem:[%s2 + $0x4] sm:$0xf]
    %v35 = vld [vmem:[%s2 + $0x8] sm:$0xf]
    %v36 = vld [vmem:[%s2 + $0xc] sm:$0xf]
    %v37 = vpack.c.bf16 %v31, %v30
    %v38 = vpack.c.bf16 %v32, %v32
    %v39 = vld [vmem:[%s3] sm:$0x1]
    %v41 = vlaneseq
    %v42 = vshrl.u32 %v41, 7
    %v43 = vsub.s32 0, %v42
    %v44 = vrot.slane %v39, %v43
    %v50 = vunpack.c.l.b16 %v33
    %v51 = vunpack.c.l.b16 %v34
    %v52 = vunpack.c.l.b16 %v35
    %v53 = vunpack.c.l.b16 %v36
    %v54 = vpack.c.b16 %v51, %v50
    %v55 = vpack.c.b16 %v53, %v52
    %vm58 = vcmask 261120
    %v60 = vsel %vm58, %v37, 0
    %v63 = vsel %vm58, %v38, 0
    %65 = vmatprep.subr.bf16.mxu0 0
    %66 = vmatpush1.bf16.msra.mxu0 %v54
    %67 = vmatprep.subr.bf16.mxu0 0
    %68 = vmatpush1.bf16.msra.mxu0 %v55
    %69 = vmatprep.subr.bf16.mxu0 0
    %70 = vmatpush1.bf16.msra.mxu0 0
    %71 = vmatprep.subr.bf16.mxu0 0
    %72 = vmatpush1.bf16.msra.mxu0 0
    %73 = vmatprep.subr.bf16.mxu0 0
    %74 = vmatpush1.bf16.msra.mxu0 0
    %75 = vmatprep.subr.bf16.mxu0 0
    %76 = vmatpush1.bf16.msra.mxu0 0
    %77 = vmatprep.subr.bf16.mxu0 0
    %78 = vmatpush1.bf16.msra.mxu0 0
    %79 = vmatprep.subr.bf16.mxu0 0
    %80 = vmatpush1.bf16.msra.mxu0 0
    %81 = vmatprep.subr.bf16.mxu0 0
    %82 = vmatpush1.bf16.msra.mxu0 0
    %83 = vmatprep.subr.bf16.mxu0 0
    %84 = vmatpush1.bf16.msra.mxu0 0
    %85 = vmatprep.subr.bf16.mxu0 0
    %86 = vmatpush1.bf16.msra.mxu0 0
    %87 = vmatprep.subr.bf16.mxu0 0
    %88 = vmatpush1.bf16.msra.mxu0 0
    %89 = vmatprep.subr.bf16.mxu0 0
    %90 = vmatpush1.bf16.msra.mxu0 0
    %91 = vmatprep.subr.bf16.mxu0 0
    %92 = vmatpush1.bf16.msra.mxu0 0
    %93 = vmatprep.subr.bf16.mxu0 0
    %94 = vmatpush1.bf16.msra.mxu0 0
    %95 = vmatprep.subr.bf16.mxu0 0
    %96 = vmatpush1.bf16.msra.mxu0 0
    %97 = vmatprep.mubr.bf16.mxu0 0
    %98 = vmatmul.mubr.bf16.gmra.mrb[0].mxu0 %v60
    %v99 = vpop.f32.mrb[0].mxu0
    %v100 = vadd.f32 %v44, %v99
    %v101 = vpop.f32.mrb[0].mxu0
    %v102 = vpop.f32.mrb[0].mxu0
    %v103 = vadd.f32 %v44, %v102
    %v104 = vpop.f32.mrb[0].mxu0
    %105 = vmatprep.mubr.bf16.mxu0 0
    %106 = vmatmul.mubr.bf16.gmra.mrb[0].mxu0 %v63
    %v107 = vpop.f32.mrb[0].mxu0
    %v108 = vadd.f32 %v44, %v107
    %v109 = vpop.f32.mrb[0].mxu0
    %v110 = vpop.f32.mrb[0].mxu0
    %v111 = vpop.f32.mrb[0].mxu0
    %112 = vdwg.mxu0
    %vm113 = vcmask 130048
    %114 = vst.msk [vmem:[#allocation2] sm:$0xff] %vm113, %v100
    %115 = vst.msk [vmem:[#allocation2 + $0x8] sm:$0xff] %vm113, %v103
    %116 = vst.msk [vmem:[#allocation2 + $0x10] sm:$0xff] %vm113, %v108
    %vm117 = vcmask 7168
    %118 = vst.msk [vmem:[#allocation3] sm:$0xff] %vm117, -inf
    %119 = vst.msk [vmem:[#allocation3 + $0x8] sm:$0xff] %vm117, -inf
    %120 = vst.msk [vmem:[#allocation3 + $0x10] sm:$0xff] %vm117, -inf
    %121 = vst.msk [vmem:[#allocation4] sm:$0xff] %vm117, 0.0
    %122 = vst.msk [vmem:[#allocation4 + $0x8] sm:$0xff] %vm117, 0.0
    %123 = vst.msk [vmem:[#allocation4 + $0x10] sm:$0xff] %vm117, 0.0
    %124 = vst.msk [vmem:[#allocation5] sm:$0xff] %vm117, -inf
    %125 = vst.msk [vmem:[#allocation5 + $0x8] sm:$0xff] %vm117, -inf
    %126 = vst.msk [vmem:[#allocation5 + $0x10] sm:$0xff] %vm117, -inf
    %127 = vst.msk [vmem:[#allocation6] sm:$0xff] %vm117, 0
    %128 = vst.msk [vmem:[#allocation6 + $0x8] sm:$0xff] %vm117, 0
    %129 = vst.msk [vmem:[#allocation6 + $0x10] sm:$0xff] %vm117, 0
    %130 = vst.msk [vmem:[#allocation7] sm:$0xff] %vm117, 0.0
    %131 = vst.msk [vmem:[#allocation7 + $0x8] sm:$0xff] %vm117, 0.0
    %132 = vst.msk [vmem:[#allocation7 + $0x10] sm:$0xff] %vm117, 0.0
  $region29: #{rnn_forward.9} parent=0 // pred_fallthru
    _
  %v133 = vld [vmem:[#allocation2] sm:$0xff]
  %v134 = vld [vmem:[#allocation2 + $0x8] sm:$0xff]
  %v135 = vld [vmem:[#allocation2 + $0x10] sm:$0xff]
  %v136 = vld [vmem:[%s4] sm:$0xf]
  %v137 = vld [vmem:[%s4 + $0x4] sm:$0xf]
  %v138 = vpack.c.bf16 %v134, %v133
  %v139 = vpack.c.bf16 %v135, %v135
  %v140 = vld [vmem:[%s5] sm:$0x1]
  %v142 = vlaneseq
  %v143 = vshrl.u32 %v142, 7
  %v144 = vsub.s32 0, %v143
  %v145 = vrot.slane %v140, %v144
  %v149 = vunpack.c.l.b16 %v136
  %v150 = vunpack.c.l.b16 %v137
  %v151 = vpack.c.b16 %v150, %v149
  %vm153 = vcmask 130048
  %v155 = vsel %vm153, %v138, 0
  %v158 = vsel %vm153, %v139, 0
  %160 = vmatprep.subr.bf16.mxu0 0
  %161 = vmatpush1.bf16.msra.mxu0 %v151
  %162 = vmatprep.subr.bf16.mxu0 0
  %163 = vmatpush1.bf16.msra.mxu0 0
  %164 = vmatprep.subr.bf16.mxu0 0
  %165 = vmatpush1.bf16.msra.mxu0 0
  %166 = vmatprep.subr.bf16.mxu0 0
  %167 = vmatpush1.bf16.msra.mxu0 0
  %168 = vmatprep.subr.bf16.mxu0 0
  %169 = vmatpush1.bf16.msra.mxu0 0
  %170 = vmatprep.subr.bf16.mxu0 0
  %171 = vmatpush1.bf16.msra.mxu0 0
  %172 = vmatprep.subr.bf16.mxu0 0
  %173 = vmatpush1.bf16.msra.mxu0 0
  %174 = vmatprep.subr.bf16.mxu0 0
  %175 = vmatpush1.bf16.msra.mxu0 0
  %176 = vmatprep.subr.bf16.mxu0 0
  %177 = vmatpush1.bf16.msra.mxu0 0
  %178 = vmatprep.subr.bf16.mxu0 0
  %179 = vmatpush1.bf16.msra.mxu0 0
  %180 = vmatprep.subr.bf16.mxu0 0
  %181 = vmatpush1.bf16.msra.mxu0 0
  %182 = vmatprep.subr.bf16.mxu0 0
  %183 = vmatpush1.bf16.msra.mxu0 0
  %184 = vmatprep.subr.bf16.mxu0 0
  %185 = vmatpush1.bf16.msra.mxu0 0
  %186 = vmatprep.subr.bf16.mxu0 0
  %187 = vmatpush1.bf16.msra.mxu0 0
  %188 = vmatprep.subr.bf16.mxu0 0
  %189 = vmatpush1.bf16.msra.mxu0 0
  %190 = vmatprep.subr.bf16.mxu0 0
  %191 = vmatpush1.bf16.msra.mxu0 0
  %192 = vmatprep.mubr.bf16.mxu0 0
  %193 = vmatmul.mubr.bf16.gmra.mrb[0].mxu0 %v155
  %v194 = vpop.f32.mrb[0].mxu0
  %v195 = vadd.f32 %v145, %v194
  %v196 = vpop.f32.mrb[0].mxu0
  %v197 = vpop.f32.mrb[0].mxu0
  %v198 = vadd.f32 %v145, %v197
  %v199 = vpop.f32.mrb[0].mxu0
  %200 = vmatprep.mubr.bf16.mxu0 0
  %201 = vmatmul.mubr.bf16.gmra.mrb[0].mxu0 %v158
  %v202 = vpop.f32.mrb[0].mxu0
  %v203 = vadd.f32 %v145, %v202
  %v204 = vpop.f32.mrb[0].mxu0
  %v205 = vpop.f32.mrb[0].mxu0
  %v206 = vpop.f32.mrb[0].mxu0
  %207 = vdwg.mxu0
  %s208 = smul.u32 0, 32
  %v209 = vlaneseq
  %v210 = vand.u32 %v209, 127
  %v211 = vstv %s208
  %v212 = vadd.s32 %v211, %v210
  %vm213 = vcmask 261120
  %v214 = vsel %vm213, %v195, -inf
  %215 = vmax.xlane.f32.xlu0 %v214
  %v216 = vpop.xlane.xlu0 %215
  %v217 = vsel %vm213, %v198, -inf
  %218 = vmax.xlane.f32.xlu0 %v217
  %v219 = vpop.xlane.xlu0 %218
  %v220 = vsel %vm213, %v203, -inf
  %221 = vmax.xlane.f32.xlu0 %v220
  %v222 = vpop.xlane.xlu0 %221
  %vm223 = vcmp.eq.f32.partialorder %v195, %v216
  %vm224 = vcmp.eq.f32.partialorder %v198, %v219
  %vm225 = vcmp.eq.f32.partialorder %v203, %v222
  %v226 = vsel %vm223, %v212, 1073741824
  %v227 = vsel %vm224, %v212, 1073741824
  %v228 = vsel %vm225, %v212, 1073741824
  %v229 = vsel %vm213, %v226, 2147483647
  %v230 = vand.u32 %v229, 65535
  %v231 = vshra.s32 %v229, 16
  %v232 = vcvt.s32.f32 %v230
  %v233 = vcvt.s32.f32 %v231
  %234 = vmin.xlane.f32.xlu0 %v233
  %v235 = vpop.xlane.xlu0 %234
  %vm236 = vcmp.eq.f32.partialorder %v233, %v235
  %v237 = vsel %vm236, %v232, inf
  %238 = vmin.xlane.f32.xlu0 %v237
  %v239 = vpop.xlane.xlu0 %238
  %v240 = vcvt.f32.s32 %v239
  %v241 = vcvt.f32.s32 %v235
  %v242 = vshll.u32 %v241, 16
  %v243 = vadd.s32 %v242, %v240
  %v244 = vsel %vm213, %v227, 2147483647
  %v245 = vand.u32 %v244, 65535
  %v246 = vshra.s32 %v244, 16
  %v247 = vcvt.s32.f32 %v245
  %v248 = vcvt.s32.f32 %v246
  %249 = vmin.xlane.f32.xlu0 %v248
  %v250 = vpop.xlane.xlu0 %249
  %vm251 = vcmp.eq.f32.partialorder %v248, %v250
  %v252 = vsel %vm251, %v247, inf
  %253 = vmin.xlane.f32.xlu0 %v252
  %v254 = vpop.xlane.xlu0 %253
  %v255 = vcvt.f32.s32 %v254
  %v256 = vcvt.f32.s32 %v250
  %v257 = vshll.u32 %v256, 16
  %v258 = vadd.s32 %v257, %v255
  %v259 = vsel %vm213, %v228, 2147483647
  %v260 = vand.u32 %v259, 65535
  %v261 = vshra.s32 %v259, 16
  %v262 = vcvt.s32.f32 %v260
  %v263 = vcvt.s32.f32 %v261
  %264 = vmin.xlane.f32.xlu0 %v263
  %v265 = vpop.xlane.xlu0 %264
  %vm266 = vcmp.eq.f32.partialorder %v263, %v265
  %v267 = vsel %vm266, %v262, inf
  %268 = vmin.xlane.f32.xlu0 %v267
  %v269 = vpop.xlane.xlu0 %268
  %v270 = vcvt.f32.s32 %v269
  %v271 = vcvt.f32.s32 %v265
  %v272 = vshll.u32 %v271, 16
  %v273 = vadd.s32 %v272, %v270
  %v274 = vld [vmem:[#allocation5] sm:$0xff]
  %v275 = vld [vmem:[#allocation5 + $0x8] sm:$0xff]
  %v276 = vld [vmem:[#allocation5 + $0x10] sm:$0xff]
  %vm277 = vcmp.gt.f32.partialorder %v216, %v274
  %vm278 = vcmp.gt.f32.partialorder %v219, %v275
  %vm279 = vcmp.gt.f32.partialorder %v222, %v276
  %v280 = vld [vmem:[#allocation6] sm:$0xff]
  %v281 = vld [vmem:[#allocation6 + $0x8] sm:$0xff]
  %v282 = vld [vmem:[#allocation6 + $0x10] sm:$0xff]
  %v283 = vsel %vm277, %v243, %v280
  %v284 = vsel %vm278, %v258, %v281
  %v285 = vsel %vm279, %v273, %v282
  %vm286 = vcmask 7168
  %287 = vst.msk [vmem:[#allocation6] sm:$0xff] %vm286, %v283
  %288 = vst.msk [vmem:[#allocation6 + $0x8] sm:$0xff] %vm286, %v284
  %289 = vst.msk [vmem:[#allocation6 + $0x10] sm:$0xff] %vm286, %v285
  %v290 = vld [vmem:[#allocation5] sm:$0xff]
  %v291 = vld [vmem:[#allocation5 + $0x8] sm:$0xff]
  %v292 = vld [vmem:[#allocation5 + $0x10] sm:$0xff]
  %v293 = vsel %vm277, %v216, %v290
  %v294 = vsel %vm278, %v219, %v291
  %v295 = vsel %vm279, %v222, %v292
  %296 = vst.msk [vmem:[#allocation5] sm:$0xff] %vm286, %v293
  %297 = vst.msk [vmem:[#allocation5 + $0x8] sm:$0xff] %vm286, %v294
  %298 = vst.msk [vmem:[#allocation5 + $0x10] sm:$0xff] %vm286, %v295
  %v299 = vld [vmem:[#allocation3] sm:$0xff]
  %v300 = vld [vmem:[#allocation3 + $0x8] sm:$0xff]
  %v301 = vld [vmem:[#allocation3 + $0x10] sm:$0xff]
  %v302 = vmax.f32 %v299, %v216
  %v303 = vmax.f32 %v300, %v219
  %v304 = vmax.f32 %v301, %v222
  %v305 = vld [vmem:[#allocation4] sm:$0xff]
  %v306 = vld [vmem:[#allocation4 + $0x8] sm:$0xff]
  %v307 = vld [vmem:[#allocation4 + $0x10] sm:$0xff]
  %v308 = vsub.f32 %v299, %v302
  %v309 = vsub.f32 %v300, %v303
  %v310 = vsub.f32 %v301, %v304
  %v311 = vmul.f32 %v308, 1.442695
  %v312 = vpow.pop %v311
  %v313 = vmul.f32 %v309, 1.442695
  %v314 = vpow.pop %v313
  %v315 = vmul.f32 %v310, 1.442695
  %v316 = vpow.pop %v315
  %v317 = vmul.f32 %v305, %v312
  %v318 = vmul.f32 %v306, %v314
  %v319 = vmul.f32 %v307, %v316
  %321 = vset.pattern.permute.xlu0 0
  %322 = vperm.xlu0 %321, %v302
  %v323 = vpop.permute.xlu0 %322
  %326 = vset.pattern.permute.xlu0 0
  %327 = vperm.xlu0 %326, %v303
  %v328 = vpop.permute.xlu0 %327
  %331 = vset.pattern.permute.xlu0 0
  %332 = vperm.xlu0 %331, %v304
  %v333 = vpop.permute.xlu0 %332
  %v335 = vsub.f32 %v195, %v323
  %v336 = vsub.f32 %v198, %v328
  %v337 = vsub.f32 %v203, %v333
  %v338 = vmul.f32 %v335, 1.442695
  %v339 = vpow.pop %v338
  %v340 = vmul.f32 %v336, 1.442695
  %v341 = vpow.pop %v340
  %v342 = vmul.f32 %v337, 1.442695
  %v343 = vpow.pop %v342
  %v344 = vsel %vm213, %v339, 0.0
  %345 = vadd.xlane.f32.xlu0 %v344
  %v346 = vpop.xlane.xlu0 %345
  %v347 = vsel %vm213, %v341, 0.0
  %348 = vadd.xlane.f32.xlu0 %v347
  %v349 = vpop.xlane.xlu0 %348
  %v350 = vsel %vm213, %v343, 0.0
  %351 = vadd.xlane.f32.xlu0 %v350
  %v352 = vpop.xlane.xlu0 %351
  %v353 = vadd.f32 %v317, %v346
  %v354 = vadd.f32 %v318, %v349
  %v355 = vadd.f32 %v319, %v352
  %356 = vst.msk [vmem:[#allocation4] sm:$0xff] %vm286, %v353
  %357 = vst.msk [vmem:[#allocation4 + $0x8] sm:$0xff] %vm286, %v354
  %358 = vst.msk [vmem:[#allocation4 + $0x10] sm:$0xff] %vm286, %v355
  %359 = vst.msk [vmem:[#allocation3] sm:$0xff] %vm286, %v302
  %360 = vst.msk [vmem:[#allocation3 + $0x8] sm:$0xff] %vm286, %v303
  %361 = vst.msk [vmem:[#allocation3 + $0x10] sm:$0xff] %vm286, %v304
  %v362 = vld [vmem:[%s1] sm:$0xff]
  %v363 = vld [vmem:[%s1 + $0x8] sm:$0xff]
  %v364 = vld [vmem:[%s1 + $0x10] sm:$0xff]
  %365 = vset.pattern.permute.xlu0 0
  %366 = vperm.xlu0 %365, %v362
  %v367 = vpop.permute.xlu0 %366
  %368 = vset.pattern.permute.xlu0 0
  %369 = vperm.xlu0 %368, %v363
  %v370 = vpop.permute.xlu0 %369
  %371 = vset.pattern.permute.xlu0 0
  %372 = vperm.xlu0 %371, %v364
  %v373 = vpop.permute.xlu0 %372
  %vm374 = vcmp.eq.s32.totalorder %v212, %v367
  %vm375 = vcmp.eq.s32.totalorder %v212, %v370
  %vm376 = vcmp.eq.s32.totalorder %v212, %v373
  %v377 = vld [vmem:[#allocation7] sm:$0xff]
  %v378 = vld [vmem:[#allocation7 + $0x8] sm:$0xff]
  %v379 = vld [vmem:[#allocation7 + $0x10] sm:$0xff]
  %v380 = vsel %vm374, %v195, 0.0
  %v381 = vsel %vm375, %v198, 0.0
  %v382 = vsel %vm376, %v203, 0.0
  %v383 = vsel %vm213, %v380, 0.0
  %384 = vadd.xlane.f32.xlu0 %v383
  %v385 = vpop.xlane.xlu0 %384
  %v386 = vsel %vm213, %v381, 0.0
  %387 = vadd.xlane.f32.xlu0 %v386
  %v388 = vpop.xlane.xlu0 %387
  %v389 = vsel %vm213, %v382, 0.0
  %390 = vadd.xlane.f32.xlu0 %v389
  %v391 = vpop.xlane.xlu0 %390
  %v392 = vadd.f32 %v377, %v385
  %v393 = vadd.f32 %v378, %v388
  %v394 = vadd.f32 %v379, %v391
  %395 = vst.msk [vmem:[#allocation7] sm:$0xff] %vm286, %v392
  %396 = vst.msk [vmem:[#allocation7 + $0x8] sm:$0xff] %vm286, %v393
  %397 = vst.msk [vmem:[#allocation7 + $0x10] sm:$0xff] %vm286, %v394
  // Predicated region
  $region30: #{rnn_forward.9} parent=0 // pred_check
    %p398 = pneg %p26
  $region31: #{rnn_forward.9} parent=0 // pred_check_branch
    %400 = sbr.rel (%p398) target = $region33
  $region32: #{rnn_forward.9} parent=0 // pred_region
    %v401 = vld [vmem:[#allocation6] sm:$0xff]
    %v402 = vld [vmem:[#allocation6 + $0x8] sm:$0xff]
    %v403 = vld [vmem:[#allocation6 + $0x10] sm:$0xff]
    %404 = vst.msk [vmem:[%s6] sm:$0xff] %vm286, %v401
    %405 = vst.msk [vmem:[%s6 + $0x8] sm:$0xff] %vm286, %v402
    %406 = vst.msk [vmem:[%s6 + $0x10] sm:$0xff] %vm286, %v403
    %v407 = vld [vmem:[#allocation7] sm:$0xff]
    %v408 = vld [vmem:[#allocation7 + $0x8] sm:$0xff]
    %v409 = vld [vmem:[#allocation7 + $0x10] sm:$0xff]
    %v410 = vld [vmem:[#allocation3] sm:$0xff]
    %v411 = vld [vmem:[#allocation3 + $0x8] sm:$0xff]
    %v412 = vld [vmem:[#allocation3 + $0x10] sm:$0xff]
    %v413 = vsub.f32 %v407, %v410
    %v414 = vsub.f32 %v408, %v411
    %v415 = vsub.f32 %v409, %v412
    %v416 = vmul.f32 %v413, 1.442695
    %v417 = vpow.pop %v416
    %v418 = vmul.f32 %v414, 1.442695
    %v419 = vpow.pop %v418
    %v420 = vmul.f32 %v415, 1.442695
    %v421 = vpow.pop %v420
    %v422 = vld [vmem:[#allocation4] sm:$0xff]
    %v423 = vld [vmem:[#allocation4 + $0x8] sm:$0xff]
    %v424 = vld [vmem:[#allocation4 + $0x10] sm:$0xff]
    %v425 = vrcp.pop %v422
    %v426 = vmul.f32 %v417, %v425
    %v427 = vrcp.pop %v423
    %v428 = vmul.f32 %v419, %v427
    %v429 = vrcp.pop %v424
    %v430 = vmul.f32 %v421, %v429
    %431 = vst.msk [vmem:[%s7] sm:$0xff] %vm286, %v426
    %432 = vst.msk [vmem:[%s7 + $0x8] sm:$0xff] %vm286, %v428
    %433 = vst.msk [vmem:[%s7 + $0x10] sm:$0xff] %vm286, %v430
  $region33: #{rnn_forward.9} parent=0 // pred_fallthru
    _
  // Predicated region
  $region34: #{rnn_forward.9} parent=0 // pred_check
    _
  $region35: #{rnn_forward.9} parent=0 // pred_check_branch
    %435 = sbr.rel (0) target = $region37
  $region36: #{rnn_forward.9} parent=0 // pred_region
    _
  $region37: #{rnn_forward.9} parent=0 // pred_fallthru
    _
  // Predicated region
  $region38: #{rnn_forward.9} parent=0 // pred_check
    _
  $region39: #{rnn_forward.9} parent=0 // pred_check_branch
    %437 = sbr.rel (0) target = $region41
  $region40: #{rnn_forward.9} parent=0 // pred_region
    _
  $region41: #{rnn_forward.9} parent=0 // pred_fallthru
    _
  // Predicated region
  $region42: #{rnn_forward.9} parent=0 // pred_check
    _
  $region43: #{rnn_forward.9} parent=0 // pred_check_branch
    %439 = sbr.rel (0) target = $region45
  $region44: #{rnn_forward.9} parent=0 // pred_region
    _
  $region45: #{rnn_forward.9} parent=0 // pred_fallthru
    _
  // Predicated region
  $region46: #{rnn_forward.9} parent=0 // pred_check
    _
  $region47: #{rnn_forward.9} parent=0 // pred_check_branch
    %441 = sbr.rel (0) target = $region49
  $region48: #{rnn_forward.9} parent=0 // pred_region
    _
  $region49: #{rnn_forward.9} parent=0 // pred_fallthru
    _

</llo_original>
